<compile_context>
chip_gen: v7x
topology: tpu7x:2x2x1
jax: 0.10.0
libtpu: 0.0.40
codegen_flags: <defaults>
</compile_context>

<pallas_src>
import functools
import math

import jax
import jax.numpy as jnp
from jax import lax
from jax.experimental import pallas as pl
from jax.experimental.pallas import tpu as pltpu


# ---------------------------------------------------------------------------
# config / helpers
# ---------------------------------------------------------------------------
# Set to jnp.bfloat16 on v6e/v7x when Cp >= 128 for 2-4x MXU throughput
# (verify against tolerance); f32 keeps the self-test within 2e-4 of the
# f32 reference.
_MXU_DTYPE = jnp.float32

# Per-stream VMEM block budgets (bytes).  The 6-stream fused kernels use the
# smaller budget so 6 streams x 2 buffers stays well under the default
# scoped-VMEM limit on every generation (v5e 16 MiB, v7x 32 MiB).
_FUSED_STREAM_BUDGET = 512 * 1024
_PW_STREAM_BUDGET = 2 * 1024 * 1024
_DW_ROW_BUDGET = 1 << 20


def _round_up(x, m):
    return ((x + m - 1) // m) * m


def _pad2d(a, rows, cols):
    r, c = a.shape
    if r == rows and c == cols:
        return a
    return jnp.pad(a, ((0, rows - r), (0, cols - c)))


def _gelu_tanh(x):
    # tanh-approximate GELU (runs on the EUP slot).
    # TODO(synk): PyTorch nn.GELU default is exact erf; tanh approx kept for
    # Mosaic-friendly lowering (matches the in-script reference).
    c = math.sqrt(2.0 / math.pi)
    return 0.5 * x * (1.0 + jnp.tanh(c * (x + 0.044715 * x * x * x)))


# ---------------------------------------------------------------------------
# generic fused "channel-matmul" caller
#   All dense streams share the flat (N*Cp, H*W) layout; kernel blocks are
#   (Cp, bc) so the full channel dim is resident and 1x1 convs are MXU
#   matmuls fused into the elementwise epilogues.
# ---------------------------------------------------------------------------
def _fused_channel_call(kernel, *, N, Cp, HW, mats=(), vecs=(), per_n=(),
                        streams=(), num_outputs=1, out_dtype=jnp.float32,
                        stream_budget=_FUSED_STREAM_BUDGET):
    rows = N * Cp
    if Cp * HW * 4 <= stream_budget:
        bc, HWp = HW, HW                       # full-HW lane block: no pad/slice copies
    else:
        bc = max(128, min((stream_budget // (4 * Cp)) // 128 * 128,
                          _round_up(HW, 128)))
        HWp = _round_up(HW, bc)

    mats_p = [m.astype(jnp.float32) for m in mats]                    # (Cp, Cp) resident
    vecs_p = [v.reshape(Cp, 1).astype(jnp.float32) for v in vecs]     # per-channel, resident
    per_n_p = [v.reshape(rows, 1).astype(jnp.float32) for v in per_n]  # per-(n, channel)
    streams_p = [_pad2d(s.reshape(rows, HW), rows, HWp) for s in streams]

    in_specs = ([pl.BlockSpec((Cp, Cp), lambda n, j: (0, 0))] * len(mats_p)
                + [pl.BlockSpec((Cp, 1), lambda n, j: (0, 0))] * len(vecs_p)
                + [pl.BlockSpec((Cp, 1), lambda n, j: (n, 0))] * len(per_n_p)
                + [pl.BlockSpec((Cp, bc), lambda n, j: (n, j))] * len(streams_p))
    out_spec = pl.BlockSpec((Cp, bc), lambda n, j: (n, j))
    if num_outputs == 1:
        out_specs = out_spec
        out_shape = jax.ShapeDtypeStruct((rows, HWp), out_dtype)
    else:
        out_specs = [out_spec] * num_outputs
        out_shape = tuple(jax.ShapeDtypeStruct((rows, HWp), out_dtype)
                          for _ in range(num_outputs))

    res = pl.pallas_call(
        kernel,
        out_shape=out_shape,
        grid_spec=pltpu.PrefetchScalarGridSpec(
            num_scalar_prefetch=0,
            grid=(N, HWp // bc),
            in_specs=in_specs,
            out_specs=out_specs,
        ),
        compiler_params=pltpu.CompilerParams(
            dimension_semantics=("parallel", "parallel")),
    )(*mats_p, *vecs_p, *per_n_p, *streams_p)
    if num_outputs == 1:
        res = (res,)
    return [r[:, :HW] for r in res]


# ---------------------------------------------------------------------------
# kernel 1: in_conv (1x1 matmul over channels) + fused bias + GELU
# ---------------------------------------------------------------------------
def _in_conv_kernel(w_ref, b_ref, x_ref, o_ref):
    y = jnp.dot(w_ref[...].astype(_MXU_DTYPE), x_ref[...].astype(_MXU_DTYPE),
                preferred_element_type=jnp.float32) + b_ref[...]
    o_ref[...] = _gelu_tanh(y).astype(o_ref.dtype)


def in_conv_gelu(x_flat, w, b, *, N, Cp, HW):
    return _fused_channel_call(
        _in_conv_kernel, N=N, Cp=Cp, HW=HW,
        mats=(w,), vecs=(b,), streams=(x_flat,),
        num_outputs=1, out_dtype=x_flat.dtype,
        stream_budget=_PW_STREAM_BUDGET)[0]


# ---------------------------------------------------------------------------
# kernel 2: lane-dense depthwise conv (3x3 / 5x5), flat-shift taps
# ---------------------------------------------------------------------------
def _depthwise_kernel(w_ref, b_ref, x_ref, o_ref, *, K, Wp, Lout):
    xv = x_ref[...]                               # (R, Lin_p) padded flat input
    wv = w_ref[...]                               # (R, K*K)   per-row tap weights
    acc = jnp.zeros(o_ref.shape, jnp.float32)
    for dy in range(K):
        for dx in range(K):
            shift = dy * Wp + dx                  # constant flat shift, static slice
            acc = acc + wv[:, dy * K + dx:dy * K + dx + 1] * xv[:, shift:shift + Lout]
    o_ref[...] = (acc + b_ref[...]).astype(o_ref.dtype)


def depthwise_conv_flat(x_nchw, w, b, K, row_budget=_DW_ROW_BUDGET):
    """KxK depthwise conv, stride 1, same padding.  Returns flat (N*Cp, H*W)."""
    N, Cp, H, W = x_nchw.shape
    p = K // 2
    Hpd, Wpd = H + 2 * p, W + 2 * p
    NC = N * Cp
    Lout = H * Wpd                                 # padded-width flat output length
    Lin = Hpd * Wpd + (K - 1)                      # covers max tap shift
    Lin_p = _round_up(Lin, 128)

    NC8 = _round_up(NC, 8)
    R = max(8, (row_budget // (Lin_p * 4)) // 8 * 8)
    R = min(R, NC8)
    if NC8 >= 16:                                  # keep >=2 grid steps (v7x: 2 TCs)
        R = min(R, max(8, ((NC8 // 2) // 8) * 8))
    NCp = _round_up(NC, R)

    xp = jnp.pad(x_nchw, ((0, 0), (0, 0), (p, p), (p, p))).reshape(NC, Hpd * Wpd)
    xp = _pad2d(xp, NCp, Lin_p)
    wf = _pad2d(jnp.tile(w.reshape(Cp, K * K), (N, 1)).astype(jnp.float32), NCp, K * K)
    bf = _pad2d(jnp.tile(b.reshape(Cp, 1), (N, 1)).astype(jnp.float32), NCp, 1)

    out = pl.pallas_call(
        functools.partial(_depthwise_kernel, K=K, Wp=Wpd, Lout=Lout),
        out_shape=jax.ShapeDtypeStruct((NCp, Lout), x_nchw.dtype),
        grid_spec=pltpu.PrefetchScalarGridSpec(
            num_scalar_prefetch=0,
            grid=(NCp // R,),
            in_specs=[
                pl.BlockSpec((R, K * K), lambda i: (i, 0)),
                pl.BlockSpec((R, 1), lambda i: (i, 0)),
                pl.BlockSpec((R, Lin_p), lambda i: (i, 0)),
            ],
            out_specs=pl.BlockSpec((R, Lout), lambda i: (i, 0)),
        ),
        compiler_params=pltpu.CompilerParams(
            dimension_semantics=("parallel",)),
    )(wf, bf, xp)
    # drop padded-width columns, back to flat (N*Cp, H*W)
    y = out[:NC].reshape(N, Cp, H, Wpd)[:, :, :, :W]
    return y.reshape(NC, H * W)


# ---------------------------------------------------------------------------
# kernel 3: fused  x_sca = (conv1x1(x_fca) + s2 + s3) * cw ;  x1 = W1@x_sca+b1 ;
#           x2 = W2@x_sca+b2   (three outputs, x_sca never re-read from HBM)
# ---------------------------------------------------------------------------
def _sca_ffm_kernel(w1_ref, wf1_ref, wf2_ref, b1_ref, bf1_ref, bf2_ref,
                    cw_ref, xfca_ref, s2_ref, s3_ref,
                    sca_ref, x1_ref, x2_ref):
    s1 = jnp.dot(w1_ref[...].astype(_MXU_DTYPE), xfca_ref[...].astype(_MXU_DTYPE),
                 preferred_element_type=jnp.float32) + b1_ref[...]
    sca = (s1 + s2_ref[...] + s3_ref[...]) * cw_ref[...]
    sca_ref[...] = sca.astype(sca_ref.dtype)
    sca_m = sca.astype(_MXU_DTYPE)
    x1_ref[...] = (jnp.dot(wf1_ref[...].astype(_MXU_DTYPE), sca_m,
                           preferred_element_type=jnp.float32)
                   + bf1_ref[...]).astype(x1_ref.dtype)
    x2_ref[...] = (jnp.dot(wf2_ref[...].astype(_MXU_DTYPE), sca_m,
                           preferred_element_type=jnp.float32)
                   + bf2_ref[...]).astype(x2_ref.dtype)


def fused_sca_ffm_head(xfca_flat, s2_flat, s3_flat, cw_rows,
                       w1x1, b1x1, wf1, bf1, wf2, bf2, *, N, Cp, HW):
    return _fused_channel_call(
        _sca_ffm_kernel, N=N, Cp=Cp, HW=HW,
        mats=(w1x1, wf1, wf2), vecs=(b1x1, bf1, bf2), per_n=(cw_rows,),
        streams=(xfca_flat, s2_flat, s3_flat),
        num_outputs=3, out_dtype=xfca_flat.dtype,
        stream_budget=_FUSED_STREAM_BUDGET)


# ---------------------------------------------------------------------------
# kernel 4: fused residual + dw_11 + FFM alpha/beta + ReLU + out_conv matmul
# ---------------------------------------------------------------------------
def _residual_out_kernel(wout_ref, w11_ref, b11_ref, al_ref, be_ref, bout_ref,
                         x_ref, d33_ref, o0_ref, ffm_ref, xs_ref, y_ref):
    d11 = o0_ref[...] * w11_ref[...] + b11_ref[...]                # dw_11 (1x1, groups=dim)
    ffm = ffm_ref[...] * al_ref[...] + xs_ref[...] * be_ref[...]   # FFM alpha/beta combine
    s = jnp.maximum(x_ref[...] + d33_ref[...] + d11 + ffm, 0.0)    # residual + ReLU
    y = jnp.dot(wout_ref[...].astype(_MXU_DTYPE), s.astype(_MXU_DTYPE),
                preferred_element_type=jnp.float32) + bout_ref[...]  # out_conv fused
    y_ref[...] = y.astype(y_ref.dtype)


def fused_residual_out(x_flat, d33_flat, out0_flat, ffm_flat, xsca_flat,
                       w11, b11, alpha, beta, w_out, b_out, *, N, Cp, HW):
    return _fused_channel_call(
        _residual_out_kernel, N=N, Cp=Cp, HW=HW,
        mats=(w_out,), vecs=(w11, b11, alpha, beta, b_out),
        streams=(x_flat, d33_flat, out0_flat, ffm_flat, xsca_flat),
        num_outputs=1, out_dtype=x_flat.dtype,
        stream_budget=_FUSED_STREAM_BUDGET)[0]


# ---------------------------------------------------------------------------
# non-Pallas pieces
# ---------------------------------------------------------------------------
def _dw_conv_lax(x, w, b, K):
    # TODO(synk): 31x31 depthwise conv (961 taps) left to lax.conv_general_dilated;
    # an unrolled Pallas shift-add is impractical at this tap count.
    N, Cp, H, W = x.shape
    p = K // 2
    y = lax.conv_general_dilated(
        x, w.reshape(Cp, 1, K, K), (1, 1), ((p, p), (p, p)),
        dimension_numbers=("NCHW", "OIHW", "NCHW"),
        feature_group_count=Cp)
    return y + b.reshape(1, Cp, 1, 1)


# ---------------------------------------------------------------------------
# full ImprovedFFTKernel forward, composed from the kernels above
# ---------------------------------------------------------------------------
def improved_fft_kernel_forward(x, params):
    N, C, H, W = x.shape
    HW = H * W
    Cp = _round_up(C, 8)
    pc = Cp - C
    rows = N * Cp

    def pad_c(a, axis=0):
        pads = [(0, 0)] * a.ndim
        pads[axis] = (0, pc)
        return jnp.pad(a, pads)

    # zero-pad channels once; padded channels stay exactly zero end-to-end.
    xp = pad_c(x, axis=1)
    x_flat = xp.reshape(rows, HW)

    w_in, b_in = pad_c(pad_c(params["in_w"], 0), 1), pad_c(params["in_b"])
    w_out, b_out = pad_c(pad_c(params["out_w"], 0), 1), pad_c(params["out_b"])
    w_1x1, b_1x1 = pad_c(pad_c(params["c1_w"], 0), 1), pad_c(params["c1_b"])
    w_fac, b_fac = pad_c(pad_c(params["fac_w"], 0), 1), pad_c(params["fac_b"])
    w_d1, b_d1 = pad_c(pad_c(params["ffm1_w"], 0), 1), pad_c(params["ffm1_b"])
    w_d2, b_d2 = pad_c(pad_c(params["ffm2_w"], 0), 1), pad_c(params["ffm2_b"])
    w_33, b_33 = pad_c(params["dw33_w"]), pad_c(params["dw33_b"])
    w_3, b_3 = pad_c(params["c3_w"]), pad_c(params["c3_b"])
    w_5, b_5 = pad_c(params["c5_w"]), pad_c(params["c5_b"])
    w_11, b_11 = pad_c(params["dw11_w"]), pad_c(params["dw11_b"])
    alpha, beta = pad_c(params["alpha"]), pad_c(params["beta"])
    w_ca1, b_ca1 = pad_c(params["ca1_w"], 1), params["ca1_b"]
    w_ca2, b_ca2 = pad_c(params["ca2_w"], 0), pad_c(params["ca2_b"])

    # in_conv (1x1) + GELU, fused in the Pallas matmul epilogue
    out0_flat = in_conv_gelu(x_flat, w_in, b_in, N=N, Cp=Cp, HW=HW)
    out0 = out0_flat.reshape(N, Cp, H, W)

    # tiny (N, Cp, 1, 1) descriptor ops stay in XLA (per perf review)
    x_att = jnp.mean(out0, axis=(2, 3), keepdims=True)                 # fac_pool
    x_att = jnp.einsum("oc,ncij->noij", w_fac, x_att) + b_fac.reshape(1, Cp, 1, 1)

    # TODO(synk): fft2/ifft2 have no Pallas primitive; kept in XLA (jnp.fft).
    x_fft = jnp.fft.fft2(out0, norm="backward")
    x_fca = jnp.abs(jnp.fft.ifft2(x_att * x_fft, norm="backward")).astype(x.dtype)

    # lane-dense depthwise convs (flat-shift taps)
    s2_flat = depthwise_conv_flat(x_fca, w_3, b_3, K=3)                 # conv3x3
    s3_flat = depthwise_conv_flat(x_fca, w_5, b_5, K=5)                 # conv5x5

    # channel attention on the (N, Cp, 1, 1) descriptor (tiny, XLA)
    hidden = jax.nn.relu(jnp.einsum("oc,ncij->noij", w_ca1, x_att)
                         + b_ca1.reshape(1, -1, 1, 1))
    cw = jax.nn.sigmoid(jnp.einsum("oc,ncij->noij", w_ca2, hidden)
                        + b_ca2.reshape(1, Cp, 1, 1))

    # fused: conv1x1 + sum + channel-weight scale + the two FFM 1x1 convs
    x_sca_flat, x1_flat, x2_flat = fused_sca_ffm_head(
        x_fca.reshape(rows, HW), s2_flat, s3_flat, cw.reshape(rows, 1),
        w_1x1, b_1x1, w_d1, b_d1, w_d2, b_d2, N=N, Cp=Cp, HW=HW)

    # FFM spectral mixing (XLA); a single |.| stream feeds the residual kernel
    x1 = x1_flat.reshape(N, Cp, H, W)
    x2 = x2_flat.reshape(N, Cp, H, W)
    ffm_abs = jnp.abs(jnp.fft.ifft2(x1 * jnp.fft.fft2(x2, norm="backward"),
                                    norm="backward")).astype(x.dtype)

    # 31x31 depthwise conv (lax) — see TODO in _dw_conv_lax
    d33 = _dw_conv_lax(out0, w_33, b_33, K=31).astype(x.dtype)

    # fused residual + dw_11 + FFM alpha/beta + ReLU + out_conv (s never hits HBM)
    y_flat = fused_residual_out(
        x_flat, d33.reshape(rows, HW), out0_flat, ffm_abs.reshape(rows, HW),
        x_sca_flat, w_11, b_11, alpha, beta, w_out, b_out, N=N, Cp=Cp, HW=HW)

    return y_flat.reshape(N, Cp, H, W)[:, :C]


# ---------------------------------------------------------------------------
# pure-JAX reference (mirrors the PyTorch forward)
# ---------------------------------------------------------------------------
def improved_fft_kernel_reference(x, p):
    def pw(z, w, b, act=None):
        y = jnp.einsum("oc,nchw->nohw", w, z) + b.reshape(1, -1, 1, 1)
        return _gelu_tanh(y) if act == "gelu" else y

    def dw(z, w, b, K):
        pd = K // 2
        y = lax.conv_general_dilated(
            z, w.reshape(-1, 1, K, K), (1, 1), ((pd, pd), (pd, pd)),
            dimension_numbers=("NCHW", "OIHW", "NCHW"),
            feature_group_count=z.shape[1])
        return y + b.reshape(1, -1, 1, 1)

    C = x.shape[1]
    out0 = pw(x, p["in_w"], p["in_b"], act="gelu")
    x_att = jnp.mean(out0, axis=(2, 3), keepdims=True)
    x_att = pw(x_att, p["fac_w"], p["fac_b"])
    x_fft = jnp.fft.fft2(out0, norm="backward")
    x_fca = jnp.abs(jnp.fft.ifft2(x_att * x_fft, norm="backward"))
    x_sca = (pw(x_fca, p["c1_w"], p["c1_b"])
             + dw(x_fca, p["c3_w"], p["c3_b"], 3)
             + dw(x_fca, p["c5_w"], p["c5_b"], 5))
    hidden = jax.nn.relu(pw(x_att, p["ca1_w"], p["ca1_b"]))
    cw = jax.nn.sigmoid(pw(hidden, p["ca2_w"], p["ca2_b"]))
    x_sca = x_sca * cw
    x1 = pw(x_sca, p["ffm1_w"], p["ffm1_b"])
    x2 = pw(x_sca, p["ffm2_w"], p["ffm2_b"])
    ffm = jnp.abs(jnp.fft.ifft2(x1 * jnp.fft.fft2(x2, norm="backward"),
                                norm="backward"))
    ffm = ffm * p["alpha"].reshape(1, C, 1, 1) + x_sca * p["beta"].reshape(1, C, 1, 1)
    d33 = dw(out0, p["dw33_w"], p["dw33_b"], 31)
    d11 = out0 * p["dw11_w"].reshape(1, C, 1, 1) + p["dw11_b"].reshape(1, C, 1, 1)
    s = jax.nn.relu(x + d33 + d11 + ffm)
    return pw(s, p["out_w"], p["out_b"])


def make_params(key, C):
    C4 = max(C // 4, 1)
    ks = jax.random.split(key, 24)

    def rnd(k, shape, scale=0.1):
        return scale * jax.random.normal(k, shape, dtype=jnp.float32)

    return {
        "in_w": rnd(ks[0], (C, C)), "in_b": rnd(ks[1], (C,)),
        "out_w": rnd(ks[2], (C, C)), "out_b": rnd(ks[3], (C,)),
        "dw33_w": rnd(ks[4], (C, 31, 31), 0.02), "dw33_b": rnd(ks[5], (C,)),
        "dw11_w": rnd(ks[6], (C,)), "dw11_b": rnd(ks[7], (C,)),
        "c1_w": rnd(ks[8], (C, C)), "c1_b": rnd(ks[9], (C,)),
        "c3_w": rnd(ks[10], (C, 3, 3)), "c3_b": rnd(ks[11], (C,)),
        "c5_w": rnd(ks[12], (C, 5, 5)), "c5_b": rnd(ks[13], (C,)),
        "fac_w": rnd(ks[14], (C, C)), "fac_b": rnd(ks[15], (C,)),
        "ffm1_w": rnd(ks[16], (C, C)), "ffm1_b": rnd(ks[17], (C,)),
        "ffm2_w": rnd(ks[18], (C, C)), "ffm2_b": rnd(ks[19], (C,)),
        # FFM inits alpha=0, beta=1; perturb deterministically so the path is exercised.
        "alpha": 0.1 + 0.05 * jnp.arange(C, dtype=jnp.float32),
        "beta": 1.0 + 0.05 * jnp.arange(C, dtype=jnp.float32),
        "ca1_w": rnd(ks[20], (C4, C)), "ca1_b": rnd(ks[21], (C4,)),
        "ca2_w": rnd(ks[22], (C, C4)), "ca2_b": rnd(ks[23], (C,)),
    }


if __name__ == "__main__":
    key = jax.random.PRNGKey(0)
    k_x, k_p = jax.random.split(key)

    N, C, H, W = 2, 4, 16, 16
    x = jax.random.normal(k_x, (N, C, H, W), dtype=jnp.float32)
    params = make_params(k_p, C)

    fwd = jax.jit(improved_fft_kernel_forward)
    y = jax.block_until_ready(fwd(x, params))

    y_ref = jax.block_until_ready(jax.jit(improved_fft_kernel_reference)(x, params))

    assert y.shape == (N, C, H, W)
    assert bool(jnp.all(jnp.isfinite(y)))
    max_err = float(jnp.max(jnp.abs(y - y_ref)))
    assert jnp.allclose(y, y_ref, atol=2e-4, rtol=2e-4), max_err
    print("KERNEL_OK")
</pallas_src>

<mosaic_0001>
module attributes {stable_mosaic.version = 11 : i64} {
  func.func @_in_conv_kernel(%arg0: i32, %arg1: i32, %arg2: memref<8x8xf32, #tpu.memory_space<vmem>>, %arg3: memref<8x1xf32, #tpu.memory_space<vmem>>, %arg4: memref<8x256xf32, #tpu.memory_space<vmem>>, %arg5: memref<8x256xf32, #tpu.memory_space<vmem>>) attributes {dimension_semantics = [#tpu.dimension_semantics<parallel>, #tpu.dimension_semantics<parallel>], iteration_bounds = array<i64: 2, 1>, scalar_prefetch = 0 : i64, scratch_operands = 0 : i64, tpu.core_type = #tpu.core_type<tc>, window_params = [{pipeline_mode = #tpu.pipeline_mode<synchronous>, transform_indices = @transform_0, window_bounds = array<i64: 8, 8>}, {pipeline_mode = #tpu.pipeline_mode<synchronous>, transform_indices = @transform_1, window_bounds = array<i64: 8, 1>}, {transform_indices = @transform_2, window_bounds = array<i64: 8, 256>}, {transform_indices = @transform_3, window_bounds = array<i64: 8, 256>}]} {
    %c0 = arith.constant 0 : index
    %c0_0 = arith.constant 0 : index
    %0 = vector.load %arg2[%c0, %c0_0] : memref<8x8xf32, #tpu.memory_space<vmem>>, vector<8x8xf32>
    %c0_1 = arith.constant 0 : index
    %c0_2 = arith.constant 0 : index
    %1 = vector.load %arg4[%c0_1, %c0_2] : memref<8x256xf32, #tpu.memory_space<vmem>>, vector<8x256xf32>
    %cst = arith.constant dense<0.000000e+00> : vector<8x256xf32>
    %2 = tpu.matmul %0, %1, %cst {dimension_numbers = #tpu.dot_dimension_numbers<[1], [0], [0], [1], [0, 0, 1, 1], [], []>} : vector<8x8xf32>, vector<8x256xf32>, vector<8x256xf32> -> vector<8x256xf32>
    %c0_3 = arith.constant 0 : index
    %c0_4 = arith.constant 0 : index
    %3 = vector.load %arg3[%c0_3, %c0_4] : memref<8x1xf32, #tpu.memory_space<vmem>>, vector<8x1xf32>
    %4 = vector.broadcast %3 : vector<8x1xf32> to vector<8x256xf32>
    %5 = arith.addf %2, %4 : vector<8x256xf32>
    %cst_5 = arith.constant 5.000000e-01 : f32
    %6 = vector.broadcast %cst_5 : f32 to vector<8x256xf32>
    %7 = arith.mulf %6, %5 : vector<8x256xf32>
    %cst_6 = arith.constant 4.471500e-02 : f32
    %8 = vector.broadcast %cst_6 : f32 to vector<8x256xf32>
    %9 = arith.mulf %8, %5 : vector<8x256xf32>
    %10 = arith.mulf %9, %5 : vector<8x256xf32>
    %11 = arith.mulf %10, %5 : vector<8x256xf32>
    %12 = arith.addf %5, %11 : vector<8x256xf32>
    %cst_7 = arith.constant 0.797884583 : f32
    %13 = vector.broadcast %cst_7 : f32 to vector<8x256xf32>
    %14 = arith.mulf %13, %12 : vector<8x256xf32>
    %15 = math.tanh %14 : vector<8x256xf32>
    %cst_8 = arith.constant 1.000000e+00 : f32
    %16 = vector.broadcast %cst_8 : f32 to vector<8x256xf32>
    %17 = arith.addf %16, %15 : vector<8x256xf32>
    %18 = arith.mulf %7, %17 : vector<8x256xf32>
    %c0_9 = arith.constant 0 : index
    %c0_10 = arith.constant 0 : index
    %19 = vector.load %arg5[%c0_9, %c0_10] : memref<8x256xf32, #tpu.memory_space<vmem>>, vector<8x256xf32>
    tpu.vector_store %arg5[%c0_9, %c0_10], %18 {strides = array<i32>} : memref<8x256xf32, #tpu.memory_space<vmem>>, vector<8x256xf32>,
    return
  }
  func.func @transform_0(%arg0: i32, %arg1: i32) -> (i32, i32) {
    %c0_i32 = arith.constant 0 : i32
    %c0_i32_0 = arith.constant 0 : i32
    %c0_i32_1 = arith.constant 0 : i32
    return %c0_i32, %c0_i32_0 : i32, i32
  }
  func.func @transform_1(%arg0: i32, %arg1: i32) -> (i32, i32) {
    %c0_i32 = arith.constant 0 : i32
    %c0_i32_0 = arith.constant 0 : i32
    %c0_i32_1 = arith.constant 0 : i32
    return %c0_i32, %c0_i32_0 : i32, i32
  }
  func.func @transform_2(%arg0: i32, %arg1: i32) -> (i32, i32) {
    %c0_i32 = arith.constant 0 : i32
    return %arg0, %arg1 : i32, i32
  }
  func.func @transform_3(%arg0: i32, %arg1: i32) -> (i32, i32) {
    %c0_i32 = arith.constant 0 : i32
    return %arg0, %arg1 : i32, i32
  }
}

module attributes {stable_mosaic.version = 11 : i64} {
  func.func @_depthwise_kernel(%arg0: i32, %arg1: memref<8x25xf32, #tpu.memory_space<vmem>>, %arg2: memref<8x1xf32, #tpu.memory_space<vmem>>, %arg3: memref<8x512xf32, #tpu.memory_space<vmem>>, %arg4: memref<8x320xf32, #tpu.memory_space<vmem>>) attributes {dimension_semantics = [#tpu.dimension_semantics<parallel>], iteration_bounds = array<i64: 2>, scalar_prefetch = 0 : i64, scratch_operands = 0 : i64, tpu.core_type = #tpu.core_type<tc>, window_params = [{transform_indices = @transform_0, window_bounds = array<i64: 8, 25>}, {transform_indices = @transform_1, window_bounds = array<i64: 8, 1>}, {transform_indices = @transform_2, window_bounds = array<i64: 8, 512>}, {transform_indices = @transform_3, window_bounds = array<i64: 8, 320>}]} {
    %c0 = arith.constant 0 : index
    %c0_0 = arith.constant 0 : index
    %0 = vector.load %arg3[%c0, %c0_0] : memref<8x512xf32, #tpu.memory_space<vmem>>, vector<8x512xf32>
    %c0_1 = arith.constant 0 : index
    %c0_2 = arith.constant 0 : index
    %1 = vector.load %arg1[%c0_1, %c0_2] : memref<8x25xf32, #tpu.memory_space<vmem>>, vector<8x25xf32>
    %cst = arith.constant 0.000000e+00 : f32
    %2 = vector.broadcast %cst : f32 to vector<8x320xf32>
    %3 = vector.extract_strided_slice %1 {offsets = [0, 0], sizes = [8, 1], strides = [1, 1]} : vector<8x25xf32> to vector<8x1xf32>
    %4 = vector.extract_strided_slice %0 {offsets = [0, 0], sizes = [8, 320], strides = [1, 1]} : vector<8x512xf32> to vector<8x320xf32>
    %5 = vector.broadcast %3 : vector<8x1xf32> to vector<8x320xf32>
    %6 = arith.mulf %5, %4 : vector<8x320xf32>
    %7 = arith.addf %2, %6 : vector<8x320xf32>
    %8 = vector.extract_strided_slice %1 {offsets = [0, 1], sizes = [8, 1], strides = [1, 1]} : vector<8x25xf32> to vector<8x1xf32>
    %9 = vector.extract_strided_slice %0 {offsets = [0, 1], sizes = [8, 320], strides = [1, 1]} : vector<8x512xf32> to vector<8x320xf32>
    %10 = vector.broadcast %8 : vector<8x1xf32> to vector<8x320xf32>
    %11 = arith.mulf %10, %9 : vector<8x320xf32>
    %12 = arith.addf %7, %11 : vector<8x320xf32>
    %13 = vector.extract_strided_slice %1 {offsets = [0, 2], sizes = [8, 1], strides = [1, 1]} : vector<8x25xf32> to vector<8x1xf32>
    %14 = vector.extract_strided_slice %0 {offsets = [0, 2], sizes = [8, 320], strides = [1, 1]} : vector<8x512xf32> to vector<8x320xf32>
    %15 = vector.broadcast %13 : vector<8x1xf32> to vector<8x320xf32>
    %16 = arith.mulf %15, %14 : vector<8x320xf32>
    %17 = arith.addf %12, %16 : vector<8x320xf32>
    %18 = vector.extract_strided_slice %1 {offsets = [0, 3], sizes = [8, 1], strides = [1, 1]} : vector<8x25xf32> to vector<8x1xf32>
    %19 = vector.extract_strided_slice %0 {offsets = [0, 3], sizes = [8, 320], strides = [1, 1]} : vector<8x512xf32> to vector<8x320xf32>
    %20 = vector.broadcast %18 : vector<8x1xf32> to vector<8x320xf32>
    %21 = arith.mulf %20, %19 : vector<8x320xf32>
    %22 = arith.addf %17, %21 : vector<8x320xf32>
    %23 = vector.extract_strided_slice %1 {offsets = [0, 4], sizes = [8, 1], strides = [1, 1]} : vector<8x25xf32> to vector<8x1xf32>
    %24 = vector.extract_strided_slice %0 {offsets = [0, 4], sizes = [8, 320], strides = [1, 1]} : vector<8x512xf32> to vector<8x320xf32>
    %25 = vector.broadcast %23 : vector<8x1xf32> to vector<8x320xf32>
    %26 = arith.mulf %25, %24 : vector<8x320xf32>
    %27 = arith.addf %22, %26 : vector<8x320xf32>
    %28 = vector.extract_strided_slice %1 {offsets = [0, 5], sizes = [8, 1], strides = [1, 1]} : vector<8x25xf32> to vector<8x1xf32>
    %29 = vector.extract_strided_slice %0 {offsets = [0, 20], sizes = [8, 320], strides = [1, 1]} : vector<8x512xf32> to vector<8x320xf32>
    %30 = vector.broadcast %28 : vector<8x1xf32> to vector<8x320xf32>
    %31 = arith.mulf %30, %29 : vector<8x320xf32>
    %32 = arith.addf %27, %31 : vector<8x320xf32>
    %33 = vector.extract_strided_slice %1 {offsets = [0, 6], sizes = [8, 1], strides = [1, 1]} : vector<8x25xf32> to vector<8x1xf32>
    %34 = vector.extract_strided_slice %0 {offsets = [0, 21], sizes = [8, 320], strides = [1, 1]} : vector<8x512xf32> to vector<8x320xf32>
    %35 = vector.broadcast %33 : vector<8x1xf32> to vector<8x320xf32>
    %36 = arith.mulf %35, %34 : vector<8x320xf32>
    %37 = arith.addf %32, %36 : vector<8x320xf32>
    %38 = vector.extract_strided_slice %1 {offsets = [0, 7], sizes = [8, 1], strides = [1, 1]} : vector<8x25xf32> to vector<8x1xf32>
    %39 = vector.extract_strided_slice %0 {offsets = [0, 22], sizes = [8, 320], strides = [1, 1]} : vector<8x512xf32> to vector<8x320xf32>
    %40 = vector.broadcast %38 : vector<8x1xf32> to vector<8x320xf32>
    %41 = arith.mulf %40, %39 : vector<8x320xf32>
    %42 = arith.addf %37, %41 : vector<8x320xf32>
    %43 = vector.extract_strided_slice %1 {offsets = [0, 8], sizes = [8, 1], strides = [1, 1]} : vector<8x25xf32> to vector<8x1xf32>
    %44 = vector.extract_strided_slice %0 {offsets = [0, 23], sizes = [8, 320], strides = [1, 1]} : vector<8x512xf32> to vector<8x320xf32>
    %45 = vector.broadcast %43 : vector<8x1xf32> to vector<8x320xf32>
    %46 = arith.mulf %45, %44 : vector<8x320xf32>
    %47 = arith.addf %42, %46 : vector<8x320xf32>
    %48 = vector.extract_strided_slice %1 {offsets = [0, 9], sizes = [8, 1], strides = [1, 1]} : vector<8x25xf32> to vector<8x1xf32>
    %49 = vector.extract_strided_slice %0 {offsets = [0, 24], sizes = [8, 320], strides = [1, 1]} : vector<8x512xf32> to vector<8x320xf32>
    %50 = vector.broadcast %48 : vector<8x1xf32> to vector<8x320xf32>
    %51 = arith.mulf %50, %49 : vector<8x320xf32>
    %52 = arith.addf %47, %51 : vector<8x320xf32>
    %53 = vector.extract_strided_slice %1 {offsets = [0, 10], sizes = [8, 1], strides = [1, 1]} : vector<8x25xf32> to vector<8x1xf32>
    %54 = vector.extract_strided_slice %0 {offsets = [0, 40], sizes = [8, 320], strides = [1, 1]} : vector<8x512xf32> to vector<8x320xf32>
    %55 = vector.broadcast %53 : vector<8x1xf32> to vector<8x320xf32>
    %56 = arith.mulf %55, %54 : vector<8x320xf32>
    %57 = arith.addf %52, %56 : vector<8x320xf32>
    %58 = vector.extract_strided_slice %1 {offsets = [0, 11], sizes = [8, 1], strides = [1, 1]} : vector<8x25xf32> to vector<8x1xf32>
    %59 = vector.extract_strided_slice %0 {offsets = [0, 41], sizes = [8, 320], strides = [1, 1]} : vector<8x512xf32> to vector<8x320xf32>
    %60 = vector.broadcast %58 : vector<8x1xf32> to vector<8x320xf32>
    %61 = arith.mulf %60, %59 : vector<8x320xf32>
    %62 = arith.addf %57, %61 : vector<8x320xf32>
    %63 = vector.extract_strided_slice %1 {offsets = [0, 12], sizes = [8, 1], strides = [1, 1]} : vector<8x25xf32> to vector<8x1xf32>
    %64 = vector.extract_strided_slice %0 {offsets = [0, 42], sizes = [8, 320], strides = [1, 1]} : vector<8x512xf32> to vector<8x320xf32>
    %65 = vector.broadcast %63 : vector<8x1xf32> to vector<8x320xf32>
    %66 = arith.mulf %65, %64 : vector<8x320xf32>
    %67 = arith.addf %62, %66 : vector<8x320xf32>
    %68 = vector.extract_strided_slice %1 {offsets = [0, 13], sizes = [8, 1], strides = [1, 1]} : vector<8x25xf32> to vector<8x1xf32>
    %69 = vector.extract_strided_slice %0 {offsets = [0, 43], sizes = [8, 320], strides = [1, 1]} : vector<8x512xf32> to vector<8x320xf32>
    %70 = vector.broadcast %68 : vector<8x1xf32> to vector<8x320xf32>
    %71 = arith.mulf %70, %69 : vector<8x320xf32>
    %72 = arith.addf %67, %71 : vector<8x320xf32>
    %73 = vector.extract_strided_slice %1 {offsets = [0, 14], sizes = [8, 1], strides = [1, 1]} : vector<8x25xf32> to vector<8x1xf32>
    %74 = vector.extract_strided_slice %0 {offsets = [0, 44], sizes = [8, 320], strides = [1, 1]} : vector<8x512xf32> to vector<8x320xf32>
    %75 = vector.broadcast %73 : vector<8x1xf32> to vector<8x320xf32>
    %76 = arith.mulf %75, %74 : vector<8x320xf32>
    %77 = arith.addf %72, %76 : vector<8x320xf32>
    %78 = vector.extract_strided_slice %1 {offsets = [0, 15], sizes = [8, 1], strides = [1, 1]} : vector<8x25xf32> to vector<8x1xf32>
    %79 = vector.extract_strided_slice %0 {offsets = [0, 60], sizes = [8, 320], strides = [1, 1]} : vector<8x512xf32> to vector<8x320xf32>
    %80 = vector.broadcast %78 : vector<8x1xf32> to vector<8x320xf32>
    %81 = arith.mulf %80, %79 : vector<8x320xf32>
    %82 = arith.addf %77, %81 : vector<8x320xf32>
    %83 = vector.extract_strided_slice %1 {offsets = [0, 16], sizes = [8, 1], strides = [1, 1]} : vector<8x25xf32> to vector<8x1xf32>
    %84 = vector.extract_strided_slice %0 {offsets = [0, 61], sizes = [8, 320], strides = [1, 1]} : vector<8x512xf32> to vector<8x320xf32>
    %85 = vector.broadcast %83 : vector<8x1xf32> to vector<8x320xf32>
    %86 = arith.mulf %85, %84 : vector<8x320xf32>
    %87 = arith.addf %82, %86 : vector<8x320xf32>
    %88 = vector.extract_strided_slice %1 {offsets = [0, 17], sizes = [8, 1], strides = [1, 1]} : vector<8x25xf32> to vector<8x1xf32>
    %89 = vector.extract_strided_slice %0 {offsets = [0, 62], sizes = [8, 320], strides = [1, 1]} : vector<8x512xf32> to vector<8x320xf32>
    %90 = vector.broadcast %88 : vector<8x1xf32> to vector<8x320xf32>
    %91 = arith.mulf %90, %89 : vector<8x320xf32>
    %92 = arith.addf %87, %91 : vector<8x320xf32>
    %93 = vector.extract_strided_slice %1 {offsets = [0, 18], sizes = [8, 1], strides = [1, 1]} : vector<8x25xf32> to vector<8x1xf32>
    %94 = vector.extract_strided_slice %0 {offsets = [0, 63], sizes = [8, 320], strides = [1, 1]} : vector<8x512xf32> to vector<8x320xf32>
    %95 = vector.broadcast %93 : vector<8x1xf32> to vector<8x320xf32>
    %96 = arith.mulf %95, %94 : vector<8x320xf32>
    %97 = arith.addf %92, %96 : vector<8x320xf32>
    %98 = vector.extract_strided_slice %1 {offsets = [0, 19], sizes = [8, 1], strides = [1, 1]} : vector<8x25xf32> to vector<8x1xf32>
    %99 = vector.extract_strided_slice %0 {offsets = [0, 64], sizes = [8, 320], strides = [1, 1]} : vector<8x512xf32> to vector<8x320xf32>
    %100 = vector.broadcast %98 : vector<8x1xf32> to vector<8x320xf32>
    %101 = arith.mulf %100, %99 : vector<8x320xf32>
    %102 = arith.addf %97, %101 : vector<8x320xf32>
    %103 = vector.extract_strided_slice %1 {offsets = [0, 20], sizes = [8, 1], strides = [1, 1]} : vector<8x25xf32> to vector<8x1xf32>
    %104 = vector.extract_strided_slice %0 {offsets = [0, 80], sizes = [8, 320], strides = [1, 1]} : vector<8x512xf32> to vector<8x320xf32>
    %105 = vector.broadcast %103 : vector<8x1xf32> to vector<8x320xf32>
    %106 = arith.mulf %105, %104 : vector<8x320xf32>
    %107 = arith.addf %102, %106 : vector<8x320xf32>
    %108 = vector.extract_strided_slice %1 {offsets = [0, 21], sizes = [8, 1], strides = [1, 1]} : vector<8x25xf32> to vector<8x1xf32>
    %109 = vector.extract_strided_slice %0 {offsets = [0, 81], sizes = [8, 320], strides = [1, 1]} : vector<8x512xf32> to vector<8x320xf32>
    %110 = vector.broadcast %108 : vector<8x1xf32> to vector<8x320xf32>
    %111 = arith.mulf %110, %109 : vector<8x320xf32>
    %112 = arith.addf %107, %111 : vector<8x320xf32>
    %113 = vector.extract_strided_slice %1 {offsets = [0, 22], sizes = [8, 1], strides = [1, 1]} : vector<8x25xf32> to vector<8x1xf32>
    %114 = vector.extract_strided_slice %0 {offsets = [0, 82], sizes = [8, 320], strides = [1, 1]} : vector<8x512xf32> to vector<8x320xf32>
    %115 = vector.broadcast %113 : vector<8x1xf32> to vector<8x320xf32>
    %116 = arith.mulf %115, %114 : vector<8x320xf32>
    %117 = arith.addf %112, %116 : vector<8x320xf32>
    %118 = vector.extract_strided_slice %1 {offsets = [0, 23], sizes = [8, 1], strides = [1, 1]} : vector<8x25xf32> to vector<8x1xf32>
    %119 = vector.extract_strided_slice %0 {offsets = [0, 83], sizes = [8, 320], strides = [1, 1]} : vector<8x512xf32> to vector<8x320xf32>
    %120 = vector.broadcast %118 : vector<8x1xf32> to vector<8x320xf32>
    %121 = arith.mulf %120, %119 : vector<8x320xf32>
    %122 = arith.addf %117, %121 : vector<8x320xf32>
    %123 = vector.extract_strided_slice %1 {offsets = [0, 24], sizes = [8, 1], strides = [1, 1]} : vector<8x25xf32> to vector<8x1xf32>
    %124 = vector.extract_strided_slice %0 {offsets = [0, 84], sizes = [8, 320], strides = [1, 1]} : vector<8x512xf32> to vector<8x320xf32>
    %125 = vector.broadcast %123 : vector<8x1xf32> to vector<8x320xf32>
    %126 = arith.mulf %125, %124 : vector<8x320xf32>
    %127 = arith.addf %122, %126 : vector<8x320xf32>
    %c0_3 = arith.constant 0 : index
    %c0_4 = arith.constant 0 : index
    %128 = vector.load %arg2[%c0_3, %c0_4] : memref<8x1xf32, #tpu.memory_space<vmem>>, vector<8x1xf32>
    %129 = vector.broadcast %128 : vector<8x1xf32> to vector<8x320xf32>
    %130 = arith.addf %127, %129 : vector<8x320xf32>
    %c0_5 = arith.constant 0 : index
    %c0_6 = arith.constant 0 : index
    %131 = vector.load %arg4[%c0_5, %c0_6] : memref<8x320xf32, #tpu.memory_space<vmem>>, vector<8x320xf32>
    tpu.vector_store %arg4[%c0_5, %c0_6], %130 {strides = array<i32>} : memref<8x320xf32, #tpu.memory_space<vmem>>, vector<8x320xf32>,
    return
  }
  func.func @transform_0(%arg0: i32) -> (i32, i32) {
    %c0_i32 = arith.constant 0 : i32
    %c0_i32_0 = arith.constant 0 : i32
    return %arg0, %c0_i32 : i32, i32
  }
  func.func @transform_1(%arg0: i32) -> (i32, i32) {
    %c0_i32 = arith.constant 0 : i32
    %c0_i32_0 = arith.constant 0 : i32
    return %arg0, %c0_i32 : i32, i32
  }
  func.func @transform_2(%arg0: i32) -> (i32, i32) {
    %c0_i32 = arith.constant 0 : i32
    %c0_i32_0 = arith.constant 0 : i32
    return %arg0, %c0_i32 : i32, i32
  }
  func.func @transform_3(%arg0: i32) -> (i32, i32) {
    %c0_i32 = arith.constant 0 : i32
    %c0_i32_0 = arith.constant 0 : i32
    return %arg0, %c0_i32 : i32, i32
  }
}

module attributes {stable_mosaic.version = 11 : i64} {
  func.func @_depthwise_kernel(%arg0: i32, %arg1: memref<8x9xf32, #tpu.memory_space<vmem>>, %arg2: memref<8x1xf32, #tpu.memory_space<vmem>>, %arg3: memref<8x384xf32, #tpu.memory_space<vmem>>, %arg4: memref<8x288xf32, #tpu.memory_space<vmem>>) attributes {dimension_semantics = [#tpu.dimension_semantics<parallel>], iteration_bounds = array<i64: 2>, scalar_prefetch = 0 : i64, scratch_operands = 0 : i64, tpu.core_type = #tpu.core_type<tc>, window_params = [{transform_indices = @transform_0, window_bounds = array<i64: 8, 9>}, {transform_indices = @transform_1, window_bounds = array<i64: 8, 1>}, {transform_indices = @transform_2, window_bounds = array<i64: 8, 384>}, {transform_indices = @transform_3, window_bounds = array<i64: 8, 288>}]} {
    %c0 = arith.constant 0 : index
    %c0_0 = arith.constant 0 : index
    %0 = vector.load %arg3[%c0, %c0_0] : memref<8x384xf32, #tpu.memory_space<vmem>>, vector<8x384xf32>
    %c0_1 = arith.constant 0 : index
    %c0_2 = arith.constant 0 : index
    %1 = vector.load %arg1[%c0_1, %c0_2] : memref<8x9xf32, #tpu.memory_space<vmem>>, vector<8x9xf32>
    %cst = arith.constant 0.000000e+00 : f32
    %2 = vector.broadcast %cst : f32 to vector<8x288xf32>
    %3 = vector.extract_strided_slice %1 {offsets = [0, 0], sizes = [8, 1], strides = [1, 1]} : vector<8x9xf32> to vector<8x1xf32>
    %4 = vector.extract_strided_slice %0 {offsets = [0, 0], sizes = [8, 288], strides = [1, 1]} : vector<8x384xf32> to vector<8x288xf32>
    %5 = vector.broadcast %3 : vector<8x1xf32> to vector<8x288xf32>
    %6 = arith.mulf %5, %4 : vector<8x288xf32>
    %7 = arith.addf %2, %6 : vector<8x288xf32>
    %8 = vector.extract_strided_slice %1 {offsets = [0, 1], sizes = [8, 1], strides = [1, 1]} : vector<8x9xf32> to vector<8x1xf32>
    %9 = vector.extract_strided_slice %0 {offsets = [0, 1], sizes = [8, 288], strides = [1, 1]} : vector<8x384xf32> to vector<8x288xf32>
    %10 = vector.broadcast %8 : vector<8x1xf32> to vector<8x288xf32>
    %11 = arith.mulf %10, %9 : vector<8x288xf32>
    %12 = arith.addf %7, %11 : vector<8x288xf32>
    %13 = vector.extract_strided_slice %1 {offsets = [0, 2], sizes = [8, 1], strides = [1, 1]} : vector<8x9xf32> to vector<8x1xf32>
    %14 = vector.extract_strided_slice %0 {offsets = [0, 2], sizes = [8, 288], strides = [1, 1]} : vector<8x384xf32> to vector<8x288xf32>
    %15 = vector.broadcast %13 : vector<8x1xf32> to vector<8x288xf32>
    %16 = arith.mulf %15, %14 : vector<8x288xf32>
    %17 = arith.addf %12, %16 : vector<8x288xf32>
    %18 = vector.extract_strided_slice %1 {offsets = [0, 3], sizes = [8, 1], strides = [1, 1]} : vector<8x9xf32> to vector<8x1xf32>
    %19 = vector.extract_strided_slice %0 {offsets = [0, 18], sizes = [8, 288], strides = [1, 1]} : vector<8x384xf32> to vector<8x288xf32>
    %20 = vector.broadcast %18 : vector<8x1xf32> to vector<8x288xf32>
    %21 = arith.mulf %20, %19 : vector<8x288xf32>
    %22 = arith.addf %17, %21 : vector<8x288xf32>
    %23 = vector.extract_strided_slice %1 {offsets = [0, 4], sizes = [8, 1], strides = [1, 1]} : vector<8x9xf32> to vector<8x1xf32>
    %24 = vector.extract_strided_slice %0 {offsets = [0, 19], sizes = [8, 288], strides = [1, 1]} : vector<8x384xf32> to vector<8x288xf32>
    %25 = vector.broadcast %23 : vector<8x1xf32> to vector<8x288xf32>
    %26 = arith.mulf %25, %24 : vector<8x288xf32>
    %27 = arith.addf %22, %26 : vector<8x288xf32>
    %28 = vector.extract_strided_slice %1 {offsets = [0, 5], sizes = [8, 1], strides = [1, 1]} : vector<8x9xf32> to vector<8x1xf32>
    %29 = vector.extract_strided_slice %0 {offsets = [0, 20], sizes = [8, 288], strides = [1, 1]} : vector<8x384xf32> to vector<8x288xf32>
    %30 = vector.broadcast %28 : vector<8x1xf32> to vector<8x288xf32>
    %31 = arith.mulf %30, %29 : vector<8x288xf32>
    %32 = arith.addf %27, %31 : vector<8x288xf32>
    %33 = vector.extract_strided_slice %1 {offsets = [0, 6], sizes = [8, 1], strides = [1, 1]} : vector<8x9xf32> to vector<8x1xf32>
    %34 = vector.extract_strided_slice %0 {offsets = [0, 36], sizes = [8, 288], strides = [1, 1]} : vector<8x384xf32> to vector<8x288xf32>
    %35 = vector.broadcast %33 : vector<8x1xf32> to vector<8x288xf32>
    %36 = arith.mulf %35, %34 : vector<8x288xf32>
    %37 = arith.addf %32, %36 : vector<8x288xf32>
    %38 = vector.extract_strided_slice %1 {offsets = [0, 7], sizes = [8, 1], strides = [1, 1]} : vector<8x9xf32> to vector<8x1xf32>
    %39 = vector.extract_strided_slice %0 {offsets = [0, 37], sizes = [8, 288], strides = [1, 1]} : vector<8x384xf32> to vector<8x288xf32>
    %40 = vector.broadcast %38 : vector<8x1xf32> to vector<8x288xf32>
    %41 = arith.mulf %40, %39 : vector<8x288xf32>
    %42 = arith.addf %37, %41 : vector<8x288xf32>
    %43 = vector.extract_strided_slice %1 {offsets = [0, 8], sizes = [8, 1], strides = [1, 1]} : vector<8x9xf32> to vector<8x1xf32>
    %44 = vector.extract_strided_slice %0 {offsets = [0, 38], sizes = [8, 288], strides = [1, 1]} : vector<8x384xf32> to vector<8x288xf32>
    %45 = vector.broadcast %43 : vector<8x1xf32> to vector<8x288xf32>
    %46 = arith.mulf %45, %44 : vector<8x288xf32>
    %47 = arith.addf %42, %46 : vector<8x288xf32>
    %c0_3 = arith.constant 0 : index
    %c0_4 = arith.constant 0 : index
    %48 = vector.load %arg2[%c0_3, %c0_4] : memref<8x1xf32, #tpu.memory_space<vmem>>, vector<8x1xf32>
    %49 = vector.broadcast %48 : vector<8x1xf32> to vector<8x288xf32>
    %50 = arith.addf %47, %49 : vector<8x288xf32>
    %c0_5 = arith.constant 0 : index
    %c0_6 = arith.constant 0 : index
    %51 = vector.load %arg4[%c0_5, %c0_6] : memref<8x288xf32, #tpu.memory_space<vmem>>, vector<8x288xf32>
    tpu.vector_store %arg4[%c0_5, %c0_6], %50 {strides = array<i32>} : memref<8x288xf32, #tpu.memory_space<vmem>>, vector<8x288xf32>,
    return
  }
  func.func @transform_0(%arg0: i32) -> (i32, i32) {
    %c0_i32 = arith.constant 0 : i32
    %c0_i32_0 = arith.constant 0 : i32
    return %arg0, %c0_i32 : i32, i32
  }
  func.func @transform_1(%arg0: i32) -> (i32, i32) {
    %c0_i32 = arith.constant 0 : i32
    %c0_i32_0 = arith.constant 0 : i32
    return %arg0, %c0_i32 : i32, i32
  }
  func.func @transform_2(%arg0: i32) -> (i32, i32) {
    %c0_i32 = arith.constant 0 : i32
    %c0_i32_0 = arith.constant 0 : i32
    return %arg0, %c0_i32 : i32, i32
  }
  func.func @transform_3(%arg0: i32) -> (i32, i32) {
    %c0_i32 = arith.constant 0 : i32
    %c0_i32_0 = arith.constant 0 : i32
    return %arg0, %c0_i32 : i32, i32
  }
}

module attributes {stable_mosaic.version = 11 : i64} {
  func.func @_sca_ffm_kernel(%arg0: i32, %arg1: i32, %arg2: memref<8x8xf32, #tpu.memory_space<vmem>>, %arg3: memref<8x8xf32, #tpu.memory_space<vmem>>, %arg4: memref<8x8xf32, #tpu.memory_space<vmem>>, %arg5: memref<8x1xf32, #tpu.memory_space<vmem>>, %arg6: memref<8x1xf32, #tpu.memory_space<vmem>>, %arg7: memref<8x1xf32, #tpu.memory_space<vmem>>, %arg8: memref<8x1xf32, #tpu.memory_space<vmem>>, %arg9: memref<8x256xf32, #tpu.memory_space<vmem>>, %arg10: memref<8x256xf32, #tpu.memory_space<vmem>>, %arg11: memref<8x256xf32, #tpu.memory_space<vmem>>, %arg12: memref<8x256xf32, #tpu.memory_space<vmem>>, %arg13: memref<8x256xf32, #tpu.memory_space<vmem>>, %arg14: memref<8x256xf32, #tpu.memory_space<vmem>>) attributes {dimension_semantics = [#tpu.dimension_semantics<parallel>, #tpu.dimension_semantics<parallel>], iteration_bounds = array<i64: 2, 1>, scalar_prefetch = 0 : i64, scratch_operands = 0 : i64, tpu.core_type = #tpu.core_type<tc>, window_params = [{pipeline_mode = #tpu.pipeline_mode<synchronous>, transform_indices = @transform_0, window_bounds = array<i64: 8, 8>}, {pipeline_mode = #tpu.pipeline_mode<synchronous>, transform_indices = @transform_1, window_bounds = array<i64: 8, 8>}, {pipeline_mode = #tpu.pipeline_mode<synchronous>, transform_indices = @transform_2, window_bounds = array<i64: 8, 8>}, {pipeline_mode = #tpu.pipeline_mode<synchronous>, transform_indices = @transform_3, window_bounds = array<i64: 8, 1>}, {pipeline_mode = #tpu.pipeline_mode<synchronous>, transform_indices = @transform_4, window_bounds = array<i64: 8, 1>}, {pipeline_mode = #tpu.pipeline_mode<synchronous>, transform_indices = @transform_5, window_bounds = array<i64: 8, 1>}, {transform_indices = @transform_6, window_bounds = array<i64: 8, 1>}, {transform_indices = @transform_7, window_bounds = array<i64: 8, 256>}, {transform_indices = @transform_8, window_bounds = array<i64: 8, 256>}, {transform_indices = @transform_9, window_bounds = array<i64: 8, 256>}, {transform_indices = @transform_10, window_bounds = array<i64: 8, 256>}, {transform_indices = @transform_11, window_bounds = array<i64: 8, 256>}, {transform_indices = @transform_12, window_bounds = array<i64: 8, 256>}]} {
    %c0 = arith.constant 0 : index
    %c0_0 = arith.constant 0 : index
    %0 = vector.load %arg2[%c0, %c0_0] : memref<8x8xf32, #tpu.memory_space<vmem>>, vector<8x8xf32>
    %c0_1 = arith.constant 0 : index
    %c0_2 = arith.constant 0 : index
    %1 = vector.load %arg9[%c0_1, %c0_2] : memref<8x256xf32, #tpu.memory_space<vmem>>, vector<8x256xf32>
    %cst = arith.constant dense<0.000000e+00> : vector<8x256xf32>
    %2 = tpu.matmul %0, %1, %cst {dimension_numbers = #tpu.dot_dimension_numbers<[1], [0], [0], [1], [0, 0, 1, 1], [], []>} : vector<8x8xf32>, vector<8x256xf32>, vector<8x256xf32> -> vector<8x256xf32>
    %c0_3 = arith.constant 0 : index
    %c0_4 = arith.constant 0 : index
    %3 = vector.load %arg5[%c0_3, %c0_4] : memref<8x1xf32, #tpu.memory_space<vmem>>, vector<8x1xf32>
    %4 = vector.broadcast %3 : vector<8x1xf32> to vector<8x256xf32>
    %5 = arith.addf %2, %4 : vector<8x256xf32>
    %c0_5 = arith.constant 0 : index
    %c0_6 = arith.constant 0 : index
    %6 = vector.load %arg10[%c0_5, %c0_6] : memref<8x256xf32, #tpu.memory_space<vmem>>, vector<8x256xf32>
    %7 = arith.addf %5, %6 : vector<8x256xf32>
    %c0_7 = arith.constant 0 : index
    %c0_8 = arith.constant 0 : index
    %8 = vector.load %arg11[%c0_7, %c0_8] : memref<8x256xf32, #tpu.memory_space<vmem>>, vector<8x256xf32>
    %9 = arith.addf %7, %8 : vector<8x256xf32>
    %c0_9 = arith.constant 0 : index
    %c0_10 = arith.constant 0 : index
    %10 = vector.load %arg8[%c0_9, %c0_10] : memref<8x1xf32, #tpu.memory_space<vmem>>, vector<8x1xf32>
    %11 = vector.broadcast %10 : vector<8x1xf32> to vector<8x256xf32>
    %12 = arith.mulf %9, %11 : vector<8x256xf32>
    %c0_11 = arith.constant 0 : index
    %c0_12 = arith.constant 0 : index
    %13 = vector.load %arg12[%c0_11, %c0_12] : memref<8x256xf32, #tpu.memory_space<vmem>>, vector<8x256xf32>
    tpu.vector_store %arg12[%c0_11, %c0_12], %12 {strides = array<i32>} : memref<8x256xf32, #tpu.memory_space<vmem>>, vector<8x256xf32>,
    %c0_13 = arith.constant 0 : index
    %c0_14 = arith.constant 0 : index
    %14 = vector.load %arg3[%c0_13, %c0_14] : memref<8x8xf32, #tpu.memory_space<vmem>>, vector<8x8xf32>
    %cst_15 = arith.constant dense<0.000000e+00> : vector<8x256xf32>
    %15 = tpu.matmul %14, %12, %cst_15 {dimension_numbers = #tpu.dot_dimension_numbers<[1], [0], [0], [1], [0, 0, 1, 1], [], []>} : vector<8x8xf32>, vector<8x256xf32>, vector<8x256xf32> -> vector<8x256xf32>
    %c0_16 = arith.constant 0 : index
    %c0_17 = arith.constant 0 : index
    %16 = vector.load %arg6[%c0_16, %c0_17] : memref<8x1xf32, #tpu.memory_space<vmem>>, vector<8x1xf32>
    %17 = vector.broadcast %16 : vector<8x1xf32> to vector<8x256xf32>
    %18 = arith.addf %15, %17 : vector<8x256xf32>
    %c0_18 = arith.constant 0 : index
    %c0_19 = arith.constant 0 : index
    %19 = vector.load %arg13[%c0_18, %c0_19] : memref<8x256xf32, #tpu.memory_space<vmem>>, vector<8x256xf32>
    tpu.vector_store %arg13[%c0_18, %c0_19], %18 {strides = array<i32>} : memref<8x256xf32, #tpu.memory_space<vmem>>, vector<8x256xf32>,
    %c0_20 = arith.constant 0 : index
    %c0_21 = arith.constant 0 : index
    %20 = vector.load %arg4[%c0_20, %c0_21] : memref<8x8xf32, #tpu.memory_space<vmem>>, vector<8x8xf32>
    %cst_22 = arith.constant dense<0.000000e+00> : vector<8x256xf32>
    %21 = tpu.matmul %20, %12, %cst_22 {dimension_numbers = #tpu.dot_dimension_numbers<[1], [0], [0], [1], [0, 0, 1, 1], [], []>} : vector<8x8xf32>, vector<8x256xf32>, vector<8x256xf32> -> vector<8x256xf32>
    %c0_23 = arith.constant 0 : index
    %c0_24 = arith.constant 0 : index
    %22 = vector.load %arg7[%c0_23, %c0_24] : memref<8x1xf32, #tpu.memory_space<vmem>>, vector<8x1xf32>
    %23 = vector.broadcast %22 : vector<8x1xf32> to vector<8x256xf32>
    %24 = arith.addf %21, %23 : vector<8x256xf32>
    %c0_25 = arith.constant 0 : index
    %c0_26 = arith.constant 0 : index
    %25 = vector.load %arg14[%c0_25, %c0_26] : memref<8x256xf32, #tpu.memory_space<vmem>>, vector<8x256xf32>
    tpu.vector_store %arg14[%c0_25, %c0_26], %24 {strides = array<i32>} : memref<8x256xf32, #tpu.memory_space<vmem>>, vector<8x256xf32>,
    return
  }
  func.func @transform_0(%arg0: i32, %arg1: i32) -> (i32, i32) {
    %c0_i32 = arith.constant 0 : i32
    %c0_i32_0 = arith.constant 0 : i32
    %c0_i32_1 = arith.constant 0 : i32
    return %c0_i32, %c0_i32_0 : i32, i32
  }
  func.func @transform_1(%arg0: i32, %arg1: i32) -> (i32, i32) {
    %c0_i32 = arith.constant 0 : i32
    %c0_i32_0 = arith.constant 0 : i32
    %c0_i32_1 = arith.constant 0 : i32
    return %c0_i32, %c0_i32_0 : i32, i32
  }
  func.func @transform_2(%arg0: i32, %arg1: i32) -> (i32, i32) {
    %c0_i32 = arith.constant 0 : i32
    %c0_i32_0 = arith.constant 0 : i32
    %c0_i32_1 = arith.constant 0 : i32
    return %c0_i32, %c0_i32_0 : i32, i32
  }
  func.func @transform_3(%arg0: i32, %arg1: i32) -> (i32, i32) {
    %c0_i32 = arith.constant 0 : i32
    %c0_i32_0 = arith.constant 0 : i32
    %c0_i32_1 = arith.constant 0 : i32
    return %c0_i32, %c0_i32_0 : i32, i32
  }
  func.func @transform_4(%arg0: i32, %arg1: i32) -> (i32, i32) {
    %c0_i32 = arith.constant 0 : i32
    %c0_i32_0 = arith.constant 0 : i32
    %c0_i32_1 = arith.constant 0 : i32
    return %c0_i32, %c0_i32_0 : i32, i32
  }
  func.func @transform_5(%arg0: i32, %arg1: i32) -> (i32, i32) {
    %c0_i32 = arith.constant 0 : i32
    %c0_i32_0 = arith.constant 0 : i32
    %c0_i32_1 = arith.constant 0 : i32
    return %c0_i32, %c0_i32_0 : i32, i32
  }
  func.func @transform_6(%arg0: i32, %arg1: i32) -> (i32, i32) {
    %c0_i32 = arith.constant 0 : i32
    %c0_i32_0 = arith.constant 0 : i32
    return %arg0, %c0_i32 : i32, i32
  }
  func.func @transform_7(%arg0: i32, %arg1: i32) -> (i32, i32) {
    %c0_i32 = arith.constant 0 : i32
    return %arg0, %arg1 : i32, i32
  }
  func.func @transform_8(%arg0: i32, %arg1: i32) -> (i32, i32) {
    %c0_i32 = arith.constant 0 : i32
    return %arg0, %arg1 : i32, i32
  }
  func.func @transform_9(%arg0: i32, %arg1: i32) -> (i32, i32) {
    %c0_i32 = arith.constant 0 : i32
    return %arg0, %arg1 : i32, i32
  }
  func.func @transform_10(%arg0: i32, %arg1: i32) -> (i32, i32) {
    %c0_i32 = arith.constant 0 : i32
    return %arg0, %arg1 : i32, i32
  }
  func.func @transform_11(%arg0: i32, %arg1: i32) -> (i32, i32) {
    %c0_i32 = arith.constant 0 : i32
    return %arg0, %arg1 : i32, i32
  }
  func.func @transform_12(%arg0: i32, %arg1: i32) -> (i32, i32) {
    %c0_i32 = arith.constant 0 : i32
    return %arg0, %arg1 : i32, i32
  }
}

module attributes {stable_mosaic.version = 11 : i64} {
  func.func @_residual_out_kernel(%arg0: i32, %arg1: i32, %arg2: memref<8x8xf32, #tpu.memory_space<vmem>>, %arg3: memref<8x1xf32, #tpu.memory_space<vmem>>, %arg4: memref<8x1xf32, #tpu.memory_space<vmem>>, %arg5: memref<8x1xf32, #tpu.memory_space<vmem>>, %arg6: memref<8x1xf32, #tpu.memory_space<vmem>>, %arg7: memref<8x1xf32, #tpu.memory_space<vmem>>, %arg8: memref<8x256xf32, #tpu.memory_space<vmem>>, %arg9: memref<8x256xf32, #tpu.memory_space<vmem>>, %arg10: memref<8x256xf32, #tpu.memory_space<vmem>>, %arg11: memref<8x256xf32, #tpu.memory_space<vmem>>, %arg12: memref<8x256xf32, #tpu.memory_space<vmem>>, %arg13: memref<8x256xf32, #tpu.memory_space<vmem>>) attributes {dimension_semantics = [#tpu.dimension_semantics<parallel>, #tpu.dimension_semantics<parallel>], iteration_bounds = array<i64: 2, 1>, scalar_prefetch = 0 : i64, scratch_operands = 0 : i64, tpu.core_type = #tpu.core_type<tc>, window_params = [{pipeline_mode = #tpu.pipeline_mode<synchronous>, transform_indices = @transform_0, window_bounds = array<i64: 8, 8>}, {pipeline_mode = #tpu.pipeline_mode<synchronous>, transform_indices = @transform_1, window_bounds = array<i64: 8, 1>}, {pipeline_mode = #tpu.pipeline_mode<synchronous>, transform_indices = @transform_2, window_bounds = array<i64: 8, 1>}, {pipeline_mode = #tpu.pipeline_mode<synchronous>, transform_indices = @transform_3, window_bounds = array<i64: 8, 1>}, {pipeline_mode = #tpu.pipeline_mode<synchronous>, transform_indices = @transform_4, window_bounds = array<i64: 8, 1>}, {pipeline_mode = #tpu.pipeline_mode<synchronous>, transform_indices = @transform_5, window_bounds = array<i64: 8, 1>}, {transform_indices = @transform_6, window_bounds = array<i64: 8, 256>}, {transform_indices = @transform_7, window_bounds = array<i64: 8, 256>}, {transform_indices = @transform_8, window_bounds = array<i64: 8, 256>}, {transform_indices = @transform_9, window_bounds = array<i64: 8, 256>}, {transform_indices = @transform_10, window_bounds = array<i64: 8, 256>}, {transform_indices = @transform_11, window_bounds = array<i64: 8, 256>}]} {
    %c0 = arith.constant 0 : index
    %c0_0 = arith.constant 0 : index
    %0 = vector.load %arg10[%c0, %c0_0] : memref<8x256xf32, #tpu.memory_space<vmem>>, vector<8x256xf32>
    %c0_1 = arith.constant 0 : index
    %c0_2 = arith.constant 0 : index
    %1 = vector.load %arg3[%c0_1, %c0_2] : memref<8x1xf32, #tpu.memory_space<vmem>>, vector<8x1xf32>
    %2 = vector.broadcast %1 : vector<8x1xf32> to vector<8x256xf32>
    %3 = arith.mulf %0, %2 : vector<8x256xf32>
    %c0_3 = arith.constant 0 : index
    %c0_4 = arith.constant 0 : index
    %4 = vector.load %arg4[%c0_3, %c0_4] : memref<8x1xf32, #tpu.memory_space<vmem>>, vector<8x1xf32>
    %5 = vector.broadcast %4 : vector<8x1xf32> to vector<8x256xf32>
    %6 = arith.addf %3, %5 : vector<8x256xf32>
    %c0_5 = arith.constant 0 : index
    %c0_6 = arith.constant 0 : index
    %7 = vector.load %arg11[%c0_5, %c0_6] : memref<8x256xf32, #tpu.memory_space<vmem>>, vector<8x256xf32>
    %c0_7 = arith.constant 0 : index
    %c0_8 = arith.constant 0 : index
    %8 = vector.load %arg5[%c0_7, %c0_8] : memref<8x1xf32, #tpu.memory_space<vmem>>, vector<8x1xf32>
    %9 = vector.broadcast %8 : vector<8x1xf32> to vector<8x256xf32>
    %10 = arith.mulf %7, %9 : vector<8x256xf32>
    %c0_9 = arith.constant 0 : index
    %c0_10 = arith.constant 0 : index
    %11 = vector.load %arg12[%c0_9, %c0_10] : memref<8x256xf32, #tpu.memory_space<vmem>>, vector<8x256xf32>
    %c0_11 = arith.constant 0 : index
    %c0_12 = arith.constant 0 : index
    %12 = vector.load %arg6[%c0_11, %c0_12] : memref<8x1xf32, #tpu.memory_space<vmem>>, vector<8x1xf32>
    %13 = vector.broadcast %12 : vector<8x1xf32> to vector<8x256xf32>
    %14 = arith.mulf %11, %13 : vector<8x256xf32>
    %15 = arith.addf %10, %14 : vector<8x256xf32>
    %c0_13 = arith.constant 0 : index
    %c0_14 = arith.constant 0 : index
    %16 = vector.load %arg8[%c0_13, %c0_14] : memref<8x256xf32, #tpu.memory_space<vmem>>, vector<8x256xf32>
    %c0_15 = arith.constant 0 : index
    %c0_16 = arith.constant 0 : index
    %17 = vector.load %arg9[%c0_15, %c0_16] : memref<8x256xf32, #tpu.memory_space<vmem>>, vector<8x256xf32>
    %18 = arith.addf %16, %17 : vector<8x256xf32>
    %19 = arith.addf %18, %6 : vector<8x256xf32>
    %20 = arith.addf %19, %15 : vector<8x256xf32>
    %cst = arith.constant 0.000000e+00 : f32
    %21 = vector.broadcast %cst : f32 to vector<8x256xf32>
    %22 = arith.maximumf %20, %21 : vector<8x256xf32>
    %c0_17 = arith.constant 0 : index
    %c0_18 = arith.constant 0 : index
    %23 = vector.load %arg2[%c0_17, %c0_18] : memref<8x8xf32, #tpu.memory_space<vmem>>, vector<8x8xf32>
    %cst_19 = arith.constant dense<0.000000e+00> : vector<8x256xf32>
    %24 = tpu.matmul %23, %22, %cst_19 {dimension_numbers = #tpu.dot_dimension_numbers<[1], [0], [0], [1], [0, 0, 1, 1], [], []>} : vector<8x8xf32>, vector<8x256xf32>, vector<8x256xf32> -> vector<8x256xf32>
    %c0_20 = arith.constant 0 : index
    %c0_21 = arith.constant 0 : index
    %25 = vector.load %arg7[%c0_20, %c0_21] : memref<8x1xf32, #tpu.memory_space<vmem>>, vector<8x1xf32>
    %26 = vector.broadcast %25 : vector<8x1xf32> to vector<8x256xf32>
    %27 = arith.addf %24, %26 : vector<8x256xf32>
    %c0_22 = arith.constant 0 : index
    %c0_23 = arith.constant 0 : index
    %28 = vector.load %arg13[%c0_22, %c0_23] : memref<8x256xf32, #tpu.memory_space<vmem>>, vector<8x256xf32>
    tpu.vector_store %arg13[%c0_22, %c0_23], %27 {strides = array<i32>} : memref<8x256xf32, #tpu.memory_space<vmem>>, vector<8x256xf32>,
    return
  }
  func.func @transform_0(%arg0: i32, %arg1: i32) -> (i32, i32) {
    %c0_i32 = arith.constant 0 : i32
    %c0_i32_0 = arith.constant 0 : i32
    %c0_i32_1 = arith.constant 0 : i32
    return %c0_i32, %c0_i32_0 : i32, i32
  }
  func.func @transform_1(%arg0: i32, %arg1: i32) -> (i32, i32) {
    %c0_i32 = arith.constant 0 : i32
    %c0_i32_0 = arith.constant 0 : i32
    %c0_i32_1 = arith.constant 0 : i32
    return %c0_i32, %c0_i32_0 : i32, i32
  }
  func.func @transform_2(%arg0: i32, %arg1: i32) -> (i32, i32) {
    %c0_i32 = arith.constant 0 : i32
    %c0_i32_0 = arith.constant 0 : i32
    %c0_i32_1 = arith.constant 0 : i32
    return %c0_i32, %c0_i32_0 : i32, i32
  }
  func.func @transform_3(%arg0: i32, %arg1: i32) -> (i32, i32) {
    %c0_i32 = arith.constant 0 : i32
    %c0_i32_0 = arith.constant 0 : i32
    %c0_i32_1 = arith.constant 0 : i32
    return %c0_i32, %c0_i32_0 : i32, i32
  }
  func.func @transform_4(%arg0: i32, %arg1: i32) -> (i32, i32) {
    %c0_i32 = arith.constant 0 : i32
    %c0_i32_0 = arith.constant 0 : i32
    %c0_i32_1 = arith.constant 0 : i32
    return %c0_i32, %c0_i32_0 : i32, i32
  }
  func.func @transform_5(%arg0: i32, %arg1: i32) -> (i32, i32) {
    %c0_i32 = arith.constant 0 : i32
    %c0_i32_0 = arith.constant 0 : i32
    %c0_i32_1 = arith.constant 0 : i32
    return %c0_i32, %c0_i32_0 : i32, i32
  }
  func.func @transform_6(%arg0: i32, %arg1: i32) -> (i32, i32) {
    %c0_i32 = arith.constant 0 : i32
    return %arg0, %arg1 : i32, i32
  }
  func.func @transform_7(%arg0: i32, %arg1: i32) -> (i32, i32) {
    %c0_i32 = arith.constant 0 : i32
    return %arg0, %arg1 : i32, i32
  }
  func.func @transform_8(%arg0: i32, %arg1: i32) -> (i32, i32) {
    %c0_i32 = arith.constant 0 : i32
    return %arg0, %arg1 : i32, i32
  }
  func.func @transform_9(%arg0: i32, %arg1: i32) -> (i32, i32) {
    %c0_i32 = arith.constant 0 : i32
    return %arg0, %arg1 : i32, i32
  }
  func.func @transform_10(%arg0: i32, %arg1: i32) -> (i32, i32) {
    %c0_i32 = arith.constant 0 : i32
    return %arg0, %arg1 : i32, i32
  }
  func.func @transform_11(%arg0: i32, %arg1: i32) -> (i32, i32) {
    %c0_i32 = arith.constant 0 : i32
    return %arg0, %arg1 : i32, i32
  }
}

</mosaic_0001>

<llo_original>
// kernel: improved_fft_kernel_forward.5
$region0: #{improved_fft_kernel_forward.5}
  #allocation0 [shape = 'u32[]', space=smem, size = 0x4, offset = 0x4, fixed_abs, tag = 'smem constant byte address 0x4 - core index']
  #allocation1 [shape = 'u32[144,128]{1,0:T(1,128)}', space=vmem, size = 0x12000, scoped, tag = 'internal scratch']
  %s0 = inlined_call_operand.vmem [shape: f32[8,8], index: 0, kind: input, shape index: {}]
  %s1 = inlined_call_operand.vmem [shape: f32[8,1], index: 1, kind: input, shape index: {}]
  %s2 = inlined_call_operand.vmem [shape: f32[16,256], index: 2, kind: input, shape index: {}]
  %s3 = inlined_call_operand.vmem [shape: f32[16,256], index: 3, kind: output, shape index: {}]
  %s4 = sld [smem:[#allocation0]]
  $region45: #{improved_fft_kernel_forward.5} parent=0
    _
  %s6 = ssub.s32 1, %s4
  %s7 = scalar_select 0, %s6, %s4
  loop: start=0, step=1, limit=4
  $region2: #{improved_fft_kernel_forward.5} parent=0 // loop_pre_header
    _
  $region3: #{improved_fft_kernel_forward.5} parent=0 // loop_header
    %s9 = sphi 0, %s13
    %p10 = scmp.ge.s32.totalorder %s9, 4
    %s16 = sphi 0, %s28
    %s17 = sphi 0, %s24
    %s18 = sphi 0, %s16
    %s19 = sphi 0, %s17
    %s20 = sphi 0, %s18
    %s21 = sphi 0, %s19
    %s29 = sphi 0, %s29
    %s31 = sphi 0, %s29
    %s32 = sphi 0, %s31
    %s46 = sphi 0, %s32
    %s50 = sphi 0, %s50
    %s52 = sphi 0, %s50
    %s53 = sphi 0, %s52
    %s67 = sphi 0, %s53
    %s75 = sphi 0, %s77
    %s78 = sphi 0, %s75
    %s79 = sphi 0, %s78
    %s95 = sphi 0, %s79
    %s103 = sphi 0, %s105
    %s106 = sphi 0, %s103
    %s107 = sphi 0, %s106
    %s123 = sphi 0, %s107
  $region4: #{improved_fft_kernel_forward.5} parent=0 // loop_header_branch
    %12 = sbr.rel (%p10) target = $region8
  $region5: #{improved_fft_kernel_forward.5} parent=0 // loop_body
    %s14 = ssub.s32 %s9, 1
    %s15 = ssub.s32 %s9, 2
    %s22 = sadd.s32 1, %s17
    %p23 = scmp.ge.s32.totalorder %s22, 1
    %s24 = scalar_select %p23, 0, %s22
    %s25 = sadd.s32 1, %s16
    %s26 = scalar_select %p23, %s25, %s16
    %p27 = scmp.ge.s32.totalorder %s26, 2
    %s28 = scalar_select %p27, 0, %s26
    %s30 = sadd.s32 %s29, 1
    %p33 = scmp.eq.s32.totalorder %s9, 1
    %p34 = scmp.ne.s32.totalorder %s29, %s31
    %p35 = scmp.eq.s32.totalorder %s9, 0
    %p36 = por %p34, %p35
    %p37 = scmp.ne.s32.totalorder %s29, %s31
    %p38 = scmp.eq.s32.totalorder %s14, 1
    %p39 = por %p37, %p38
    %p40 = scmp.ne.s32.totalorder %s31, %s32
    %p41 = scmp.eq.s32.totalorder %s14, 0
    %p42 = por %p40, %p41
    %p43 = scmp.ne.s32.totalorder %s31, %s32
    %p44 = scmp.eq.s32.totalorder %s15, 1
    %p45 = por %p43, %p44
    %p47 = scmp.ne.s32.totalorder %s32, %s46
    %p48 = scmp.eq.s32.totalorder %s15, 0
    %p49 = por %p47, %p48
    %s51 = sadd.s32 %s50, 1
    %p54 = scmp.eq.s32.totalorder %s9, 1
    %p55 = scmp.ne.s32.totalorder %s50, %s52
    %p56 = scmp.eq.s32.totalorder %s9, 0
    %p57 = por %p55, %p56
    %p58 = scmp.ne.s32.totalorder %s50, %s52
    %p59 = scmp.eq.s32.totalorder %s14, 1
    %p60 = por %p58, %p59
    %p61 = scmp.ne.s32.totalorder %s52, %s53
    %p62 = scmp.eq.s32.totalorder %s14, 0
    %p63 = por %p61, %p62
    %p64 = scmp.ne.s32.totalorder %s52, %s53
    %p65 = scmp.eq.s32.totalorder %s15, 1
    %p66 = por %p64, %p65
    %p68 = scmp.ne.s32.totalorder %s53, %s67
    %p69 = scmp.eq.s32.totalorder %s15, 0
    %p70 = por %p68, %p69
    %s71 = ssub.s32 %s16, %s28
    %s72 = ssub.s32 %s17, %s24
    %s73 = sor.u32 %s71, %s72
    %p74 = scmp.eq.s32.totalorder %s73, 0
    %s76 = sadd.s32 %s75, 1
    %s77 = scalar_select %p74, %s75, %s76
    %p80 = pneg %p74
    %p81 = scmp.eq.s32.totalorder %s9, 1
    %p82 = por %p80, %p81
    %p83 = scmp.ne.s32.totalorder %s75, %s78
    %p84 = scmp.eq.s32.totalorder %s9, 0
    %p85 = por %p83, %p84
    %p86 = scmp.ne.s32.totalorder %s75, %s78
    %p87 = scmp.eq.s32.totalorder %s14, 1
    %p88 = por %p86, %p87
    %p89 = scmp.ne.s32.totalorder %s78, %s79
    %p90 = scmp.eq.s32.totalorder %s14, 0
    %p91 = por %p89, %p90
    %p92 = scmp.ne.s32.totalorder %s78, %s79
    %p93 = scmp.eq.s32.totalorder %s15, 1
    %p94 = por %p92, %p93
    %p96 = scmp.ne.s32.totalorder %s79, %s95
    %p97 = scmp.eq.s32.totalorder %s15, 0
    %p98 = por %p96, %p97
    %s99 = ssub.s32 %s16, %s28
    %s100 = ssub.s32 %s17, %s24
    %s101 = sor.u32 %s99, %s100
    %p102 = scmp.eq.s32.totalorder %s101, 0
    %s104 = sadd.s32 %s103, 1
    %s105 = scalar_select %p102, %s103, %s104
    %p108 = pneg %p102
    %p109 = scmp.eq.s32.totalorder %s9, 1
    %p110 = por %p108, %p109
    %p111 = scmp.ne.s32.totalorder %s103, %s106
    %p112 = scmp.eq.s32.totalorder %s9, 0
    %p113 = por %p111, %p112
    %p114 = scmp.ne.s32.totalorder %s103, %s106
    %p115 = scmp.eq.s32.totalorder %s14, 1
    %p116 = por %p114, %p115
    %p117 = scmp.ne.s32.totalorder %s106, %s107
    %p118 = scmp.eq.s32.totalorder %s14, 0
    %p119 = por %p117, %p118
    %p120 = scmp.ne.s32.totalorder %s106, %s107
    %p121 = scmp.eq.s32.totalorder %s15, 1
    %p122 = por %p120, %p121
    %p124 = scmp.ne.s32.totalorder %s107, %s123
    %p125 = scmp.eq.s32.totalorder %s15, 0
    %p126 = por %p124, %p125
    %p127 = scmp.le.s32.totalorder 1, %s9
    %p128 = scmp.lt.s32.totalorder %s9, 3
    %p129 = pnand %p127, %p128
    %p130 = pneg %p129
    // Predicated region
    $region9: #{improved_fft_kernel_forward.5} parent=5 // pred_check
      _
    $region10: #{improved_fft_kernel_forward.5} parent=5 // pred_check_branch
      %132 = sbr.rel (%p129) target = $region12
    $region11: #{improved_fft_kernel_forward.5} parent=5 // pred_region
      %s133 = ssub.s32 %s9, 1
      // Predicated region
      $region13: #{improved_fft_kernel_forward.5} parent=11 // pred_check
        %p134 = pneg %p42
      $region14: #{improved_fft_kernel_forward.5} parent=11 // pred_check_branch
        %136 = sbr.rel (%p134) target = $region16
      $region15: #{improved_fft_kernel_forward.5} parent=11 // pred_region
        _
      $region16: #{improved_fft_kernel_forward.5} parent=11 // pred_fallthru
        _
      // Predicated region
      $region17: #{improved_fft_kernel_forward.5} parent=11 // pred_check
        %p137 = pneg %p63
      $region18: #{improved_fft_kernel_forward.5} parent=11 // pred_check_branch
        %139 = sbr.rel (%p137) target = $region20
      $region19: #{improved_fft_kernel_forward.5} parent=11 // pred_region
        _
      $region20: #{improved_fft_kernel_forward.5} parent=11 // pred_fallthru
        _
    $region12: #{improved_fft_kernel_forward.5} parent=5 // pred_fallthru
      _
    %p140 = scmp.lt.s32.totalorder %s9, 2
    // Predicated region
    $region21: #{improved_fft_kernel_forward.5} parent=5 // pred_check
      %p141 = pneg %p140
    $region22: #{improved_fft_kernel_forward.5} parent=5 // pred_check_branch
      %143 = sbr.rel (%p141) target = $region24
    $region23: #{improved_fft_kernel_forward.5} parent=5 // pred_region
      // Predicated region
      $region25: #{improved_fft_kernel_forward.5} parent=23 // pred_check
        %p144 = pneg %p85
      $region26: #{improved_fft_kernel_forward.5} parent=23 // pred_check_branch
        %146 = sbr.rel (%p144) target = $region28
      $region27: #{improved_fft_kernel_forward.5} parent=23 // pred_region
        %s147 = smul.u32 2, %s17
        %p148 = scmp.lt.s32.totalorder %s16, 1
        %s149 = scalar_select %p148, %s16, 1
        %p150 = scmp.lt.s32.totalorder %s147, 1
        %s151 = scalar_select %p150, %s147, 1
        %s152 = smul.addr %s149, 2
        %s153 = sadd.s32 %s151, %s152
        %s154 = smul.addr %s153, 8
        %s155 = scalar_lea.vmem %s2, %s154
        %s156 = smul.u32 2, %s17
      $region28: #{improved_fft_kernel_forward.5} parent=23 // pred_fallthru
        _
    $region24: #{improved_fft_kernel_forward.5} parent=5 // pred_fallthru
      _
    %p157 = scmp.le.s32.totalorder 1, %s9
    %p158 = scmp.lt.s32.totalorder %s9, 3
    %p159 = pnand %p157, %p158
    %p160 = pneg %p159
    // Predicated region
    $region29: #{improved_fft_kernel_forward.5} parent=5 // pred_check
      _
    $region30: #{improved_fft_kernel_forward.5} parent=5 // pred_check_branch
      %162 = sbr.rel (%p159) target = $region32
    $region31: #{improved_fft_kernel_forward.5} parent=5 // pred_region
      %s163 = ssub.s32 %s9, 1
      %p164 = pneg %p42
      %p165 = pneg %p39
      %p166 = pneg %p63
      %p167 = pneg %p60
      %s168 = smul.u32 2, %s19
      %p169 = scmp.lt.s32.totalorder %s18, 1
      %s170 = scalar_select %p169, %s18, 1
      %p171 = scmp.lt.s32.totalorder %s168, 1
      %s172 = scalar_select %p171, %s168, 1
      %s173 = smul.addr %s170, 2
      %s174 = sadd.s32 %s172, %s173
      %s175 = smul.addr %s174, 8
      %s176 = scalar_lea.vmem %s2, %s175
      %p177 = pneg %p91
      %p178 = pneg %p88
      %p179 = pneg %p119
      %p180 = pneg %p116
      %s181 = smul.u32 2, %s19
      %p182 = scmp.lt.s32.totalorder %s18, 1
      %s183 = scalar_select %p182, %s18, 1
      %p184 = scmp.lt.s32.totalorder %s181, 1
      %s185 = scalar_select %p184, %s181, 1
      %s186 = smul.addr %s183, 2
      %s187 = sadd.s32 %s185, %s186
      %s188 = smul.addr %s187, 8
      %s189 = scalar_lea.vmem %s3, %s188
      %s190 = smul.u32 2, %s19
      %p191 = scmp.lt.s32.totalorder %s18, 1
      %s192 = scalar_select %p191, %s18, 1
      %p193 = scmp.lt.s32.totalorder %s190, 1
      %s194 = scalar_select %p193, %s190, 1
      %s195 = smul.addr %s192, 2
      %s196 = sadd.s32 %s194, %s195
      %s197 = smul.addr %s196, 8
      %s198 = scalar_lea.vmem %s2, %s197
      %s199 = smul.u32 2, %s19
      %s200 = smul.u32 2, %s19
      %p201 = scmp.lt.s32.totalorder %s18, 1
      %s202 = scalar_select %p201, %s18, 1
      %p203 = scmp.lt.s32.totalorder %s200, 1
      %s204 = scalar_select %p203, %s200, 1
      %s205 = smul.addr %s202, 2
      %s206 = sadd.s32 %s204, %s205
      %s207 = smul.addr %s206, 8
      %s208 = scalar_lea.vmem %s3, %s207
      %s209 = smul.u32 2, %s19
      %v210 = vld [vmem:[%s0] sm:$0xff]
      %v211 = vld [vmem:[%s198] sm:$0xff]
      %v212 = vld [vmem:[%s198 + $0x8] sm:$0xff]
      %v213 = vld [vmem:[%s1] sm:$0xff]
      %215 = vset.pattern.permute.xlu0 0
      %216 = vperm.xlu0 %215, %v213
      %v217 = vpop.permute.xlu0 %216
      %vm219 = vcmask 64512
      %v221 = vsel %vm219, %v210, 0
      %223 = vmatprep.subr.mxu0 %v212
      %224 = vmatpush1.msra.mxu0 %v211
      %225 = vmatprep.subr.mxu0 0.0
      %226 = vmatpush1.msra.mxu0 0.0
      %227 = vmatprep.subr.mxu0 0.0
      %228 = vmatpush1.msra.mxu0 0.0
      %229 = vmatprep.subr.mxu0 0.0
      %230 = vmatpush1.msra.mxu0 0.0
      %231 = vmatprep.subr.mxu0 0.0
      %232 = vmatpush1.msra.mxu0 0.0
      %233 = vmatprep.subr.mxu0 0.0
      %234 = vmatpush1.msra.mxu0 0.0
      %235 = vmatprep.subr.mxu0 0.0
      %236 = vmatpush1.msra.mxu0 0.0
      %237 = vmatprep.subr.mxu0 0.0
      %238 = vmatpush1.msra.mxu0 0.0
      %239 = vmatprep.subr.mxu0 0.0
      %240 = vmatpush1.msra.mxu0 0.0
      %241 = vmatprep.subr.mxu0 0.0
      %242 = vmatpush1.msra.mxu0 0.0
      %243 = vmatprep.subr.mxu0 0.0
      %244 = vmatpush1.msra.mxu0 0.0
      %245 = vmatprep.subr.mxu0 0.0
      %246 = vmatpush1.msra.mxu0 0.0
      %247 = vmatprep.subr.mxu0 0.0
      %248 = vmatpush1.msra.mxu0 0.0
      %249 = vmatprep.subr.mxu0 0.0
      %250 = vmatpush1.msra.mxu0 0.0
      %251 = vmatprep.subr.mxu0 0.0
      %252 = vmatpush1.msra.mxu0 0.0
      %253 = vmatprep.subr.mxu0 0.0
      %254 = vmatpush1.msra.mxu0 0.0
      %255 = vmatprep.subr.mxu0 0.0
      %256 = vmatpush1.msra.mxu0 0.0
      %257 = vmatprep.subr.mxu0 0.0
      %258 = vmatpush1.msra.mxu0 0.0
      %259 = vmatprep.subr.mxu0 0.0
      %260 = vmatpush1.msra.mxu0 0.0
      %261 = vmatprep.subr.mxu0 0.0
      %262 = vmatpush1.msra.mxu0 0.0
      %263 = vmatprep.subr.mxu0 0.0
      %264 = vmatpush1.msra.mxu0 0.0
      %265 = vmatprep.subr.mxu0 0.0
      %266 = vmatpush1.msra.mxu0 0.0
      %267 = vmatprep.subr.mxu0 0.0
      %268 = vmatpush1.msra.mxu0 0.0
      %269 = vmatprep.subr.mxu0 0.0
      %270 = vmatpush1.msra.mxu0 0.0
      %271 = vmatprep.subr.mxu0 0.0
      %272 = vmatpush1.msra.mxu0 0.0
      %273 = vmatprep.subr.mxu0 0.0
      %274 = vmatpush1.msra.mxu0 0.0
      %275 = vmatprep.subr.mxu0 0.0
      %276 = vmatpush1.msra.mxu0 0.0
      %277 = vmatprep.subr.mxu0 0.0
      %278 = vmatpush1.msra.mxu0 0.0
      %279 = vmatprep.subr.mxu0 0.0
      %280 = vmatpush1.msra.mxu0 0.0
      %281 = vmatprep.subr.mxu0 0.0
      %282 = vmatpush1.msra.mxu0 0.0
      %283 = vmatprep.subr.mxu0 0.0
      %284 = vmatpush1.msra.mxu0 0.0
      %285 = vmatprep.subr.mxu0 0.0
      %286 = vmatpush1.msra.mxu0 0.0
      %287 = vmatprep.mubr.f32.mxu0 0.0
      %288 = vmatmul.mubr.f32.gmra.mrb[0].mxu0 %v221
      %v289 = vpop.f32.mrb[0].mxu0
      %v290 = vadd.f32 %v217, %v289
      %v291 = vpop.f32.mrb[0].mxu0
      %v292 = vadd.f32 %v217, %v291
      %293 = vdwg.mxu0
      %v294 = vmul.f32 %v290, 0.5
      %v295 = vmul.f32 %v292, 0.5
      %v296 = vmul.f32 %v290, 0.044715
      %v297 = vmul.f32 %v292, 0.044715
      %v298 = vmul.f32 %v296, %v290
      %v299 = vmul.f32 %v297, %v292
      %v300 = vmul.f32 %v298, %v290
      %v301 = vmul.f32 %v299, %v292
      %v302 = vadd.f32 %v290, %v300
      %v303 = vadd.f32 %v292, %v301
      %v304 = vmul.f32 %v302, 0.7978846
      %v305 = vmul.f32 %v303, 0.7978846
      %v306 = vtanh.pop %v304
      %v307 = vtanh.pop %v305
      %v308 = vadd.f32 %v306, 1.0
      %v309 = vadd.f32 %v307, 1.0
      %v310 = vmul.f32 %v294, %v308
      %v311 = vmul.f32 %v295, %v309
      %312 = vst [vmem:[%s208] sm:$0xff] %v310
      %313 = vst [vmem:[%s208 + $0x8] sm:$0xff] %v311
      %s314 = smul.u32 2, %s19
      %p315 = scmp.lt.s32.totalorder %s18, 1
      %s316 = scalar_select %p315, %s18, 1
      %p317 = scmp.lt.s32.totalorder %s314, 1
      %s318 = scalar_select %p317, %s314, 1
      %s319 = smul.addr %s316, 2
      %s320 = sadd.s32 %s318, %s319
      %s321 = smul.addr %s320, 8
      %s322 = scalar_lea.vmem %s3, %s321
      // Predicated region
      $region33: #{improved_fft_kernel_forward.5} parent=31 // pred_check
        %p323 = pneg %p116
      $region34: #{improved_fft_kernel_forward.5} parent=31 // pred_check_branch
        %325 = sbr.rel (%p323) target = $region36
      $region35: #{improved_fft_kernel_forward.5} parent=31 // pred_region
        %s326 = smul.u32 2, %s19
      $region36: #{improved_fft_kernel_forward.5} parent=31 // pred_fallthru
        _
    $region32: #{improved_fft_kernel_forward.5} parent=5 // pred_fallthru
      _
    %p327 = scmp.le.s32.totalorder 2, %s9
    // Predicated region
    $region37: #{improved_fft_kernel_forward.5} parent=5 // pred_check
      %p328 = pneg %p327
    $region38: #{improved_fft_kernel_forward.5} parent=5 // pred_check_branch
      %330 = sbr.rel (%p328) target = $region40
    $region39: #{improved_fft_kernel_forward.5} parent=5 // pred_region
      %s331 = ssub.s32 %s9, 2
      // Predicated region
      $region41: #{improved_fft_kernel_forward.5} parent=39 // pred_check
        %p332 = pneg %p122
      $region42: #{improved_fft_kernel_forward.5} parent=39 // pred_check_branch
        %334 = sbr.rel (%p332) target = $region44
      $region43: #{improved_fft_kernel_forward.5} parent=39 // pred_region
        %s335 = smul.u32 2, %s21
        %p336 = scmp.lt.s32.totalorder %s20, 1
        %s337 = scalar_select %p336, %s20, 1
        %p338 = scmp.lt.s32.totalorder %s335, 1
        %s339 = scalar_select %p338, %s335, 1
        %s340 = smul.addr %s337, 2
        %s341 = sadd.s32 %s339, %s340
        %s342 = smul.addr %s341, 8
        %s343 = scalar_lea.vmem %s3, %s342
      $region44: #{improved_fft_kernel_forward.5} parent=39 // pred_fallthru
        _
    $region40: #{improved_fft_kernel_forward.5} parent=5 // pred_fallthru
      _
  $region6: #{improved_fft_kernel_forward.5} parent=0 // loop_footer
    %s13 = sadd.s32 1, %s9
  $region7: #{improved_fft_kernel_forward.5} parent=0 // loop_footer_branch
    %8 = sbr.rel target = $region3
  $region8: #{improved_fft_kernel_forward.5} parent=0 // loop_exit
    _

// kernel: improved_fft_kernel_forward.7
$region0: #{improved_fft_kernel_forward.7}
  #allocation0 [shape = 'u32[]', space=smem, size = 0x4, offset = 0x4, fixed_abs, tag = 'smem constant byte address 0x4 - core index']
  #allocation1 [shape = 'u32[144,128]{1,0:T(1,128)}', space=vmem, size = 0x12000, scoped, tag = 'internal scratch']
  %s0 = inlined_call_operand.vmem [shape: f32[16,25], index: 0, kind: input, shape index: {}]
  %s1 = inlined_call_operand.vmem [shape: f32[16,1], index: 1, kind: input, shape index: {}]
  %s2 = inlined_call_operand.vmem [shape: f32[16,512], index: 2, kind: input, shape index: {}]
  %s3 = inlined_call_operand.vmem [shape: f32[16,320], index: 3, kind: output, shape index: {}]
  %s4 = sld [smem:[#allocation0]]
  $region45: #{improved_fft_kernel_forward.7} parent=0
    _
  %s6 = ssub.s32 1, %s4
  %s7 = scalar_select 0, %s6, %s4
  loop: start=0, step=1, limit=4
  $region2: #{improved_fft_kernel_forward.7} parent=0 // loop_pre_header
    _
  $region3: #{improved_fft_kernel_forward.7} parent=0 // loop_header
    %s9 = sphi 0, %s13
    %p10 = scmp.ge.s32.totalorder %s9, 4
    %s19 = sphi 0, %s21
    %s22 = sphi 0, %s19
    %s23 = sphi 0, %s22
    %s39 = sphi 0, %s23
    %s45 = sphi 0, %s47
    %s48 = sphi 0, %s45
    %s49 = sphi 0, %s48
    %s65 = sphi 0, %s49
    %s71 = sphi 0, %s73
    %s74 = sphi 0, %s71
    %s75 = sphi 0, %s74
    %s91 = sphi 0, %s75
    %s97 = sphi 0, %s99
    %s100 = sphi 0, %s97
    %s101 = sphi 0, %s100
    %s117 = sphi 0, %s101
  $region4: #{improved_fft_kernel_forward.7} parent=0 // loop_header_branch
    %12 = sbr.rel (%p10) target = $region8
  $region5: #{improved_fft_kernel_forward.7} parent=0 // loop_body
    %s14 = ssub.s32 %s9, 1
    %s15 = ssub.s32 %s9, 2
    %s16 = sadd.s32 %s9, 1
    %s17 = ssub.s32 %s9, %s16
    %p18 = scmp.eq.s32.totalorder %s17, 0
    %s20 = sadd.s32 %s19, 1
    %s21 = scalar_select %p18, %s19, %s20
    %p24 = pneg %p18
    %p25 = scmp.eq.s32.totalorder %s9, 1
    %p26 = por %p24, %p25
    %p27 = scmp.ne.s32.totalorder %s19, %s22
    %p28 = scmp.eq.s32.totalorder %s9, 0
    %p29 = por %p27, %p28
    %p30 = scmp.ne.s32.totalorder %s19, %s22
    %p31 = scmp.eq.s32.totalorder %s14, 1
    %p32 = por %p30, %p31
    %p33 = scmp.ne.s32.totalorder %s22, %s23
    %p34 = scmp.eq.s32.totalorder %s14, 0
    %p35 = por %p33, %p34
    %p36 = scmp.ne.s32.totalorder %s22, %s23
    %p37 = scmp.eq.s32.totalorder %s15, 1
    %p38 = por %p36, %p37
    %p40 = scmp.ne.s32.totalorder %s23, %s39
    %p41 = scmp.eq.s32.totalorder %s15, 0
    %p42 = por %p40, %p41
    %s43 = ssub.s32 %s9, %s16
    %p44 = scmp.eq.s32.totalorder %s43, 0
    %s46 = sadd.s32 %s45, 1
    %s47 = scalar_select %p44, %s45, %s46
    %p50 = pneg %p44
    %p51 = scmp.eq.s32.totalorder %s9, 1
    %p52 = por %p50, %p51
    %p53 = scmp.ne.s32.totalorder %s45, %s48
    %p54 = scmp.eq.s32.totalorder %s9, 0
    %p55 = por %p53, %p54
    %p56 = scmp.ne.s32.totalorder %s45, %s48
    %p57 = scmp.eq.s32.totalorder %s14, 1
    %p58 = por %p56, %p57
    %p59 = scmp.ne.s32.totalorder %s48, %s49
    %p60 = scmp.eq.s32.totalorder %s14, 0
    %p61 = por %p59, %p60
    %p62 = scmp.ne.s32.totalorder %s48, %s49
    %p63 = scmp.eq.s32.totalorder %s15, 1
    %p64 = por %p62, %p63
    %p66 = scmp.ne.s32.totalorder %s49, %s65
    %p67 = scmp.eq.s32.totalorder %s15, 0
    %p68 = por %p66, %p67
    %s69 = ssub.s32 %s9, %s16
    %p70 = scmp.eq.s32.totalorder %s69, 0
    %s72 = sadd.s32 %s71, 1
    %s73 = scalar_select %p70, %s71, %s72
    %p76 = pneg %p70
    %p77 = scmp.eq.s32.totalorder %s9, 1
    %p78 = por %p76, %p77
    %p79 = scmp.ne.s32.totalorder %s71, %s74
    %p80 = scmp.eq.s32.totalorder %s9, 0
    %p81 = por %p79, %p80
    %p82 = scmp.ne.s32.totalorder %s71, %s74
    %p83 = scmp.eq.s32.totalorder %s14, 1
    %p84 = por %p82, %p83
    %p85 = scmp.ne.s32.totalorder %s74, %s75
    %p86 = scmp.eq.s32.totalorder %s14, 0
    %p87 = por %p85, %p86
    %p88 = scmp.ne.s32.totalorder %s74, %s75
    %p89 = scmp.eq.s32.totalorder %s15, 1
    %p90 = por %p88, %p89
    %p92 = scmp.ne.s32.totalorder %s75, %s91
    %p93 = scmp.eq.s32.totalorder %s15, 0
    %p94 = por %p92, %p93
    %s95 = ssub.s32 %s9, %s16
    %p96 = scmp.eq.s32.totalorder %s95, 0
    %s98 = sadd.s32 %s97, 1
    %s99 = scalar_select %p96, %s97, %s98
    %p102 = pneg %p96
    %p103 = scmp.eq.s32.totalorder %s9, 1
    %p104 = por %p102, %p103
    %p105 = scmp.ne.s32.totalorder %s97, %s100
    %p106 = scmp.eq.s32.totalorder %s9, 0
    %p107 = por %p105, %p106
    %p108 = scmp.ne.s32.totalorder %s97, %s100
    %p109 = scmp.eq.s32.totalorder %s14, 1
    %p110 = por %p108, %p109
    %p111 = scmp.ne.s32.totalorder %s100, %s101
    %p112 = scmp.eq.s32.totalorder %s14, 0
    %p113 = por %p111, %p112
    %p114 = scmp.ne.s32.totalorder %s100, %s101
    %p115 = scmp.eq.s32.totalorder %s15, 1
    %p116 = por %p114, %p115
    %p118 = scmp.ne.s32.totalorder %s101, %s117
    %p119 = scmp.eq.s32.totalorder %s15, 0
    %p120 = por %p118, %p119
    %p121 = scmp.le.s32.totalorder 1, %s9
    %p122 = scmp.lt.s32.totalorder %s9, 3
    %p123 = pnand %p121, %p122
    %p124 = pneg %p123
    // Predicated region
    $region9: #{improved_fft_kernel_forward.7} parent=5 // pred_check
      _
    $region10: #{improved_fft_kernel_forward.7} parent=5 // pred_check_branch
      %126 = sbr.rel (%p123) target = $region12
    $region11: #{improved_fft_kernel_forward.7} parent=5 // pred_region
      %s127 = ssub.s32 %s9, 1
    $region12: #{improved_fft_kernel_forward.7} parent=5 // pred_fallthru
      _
    %p128 = scmp.lt.s32.totalorder %s9, 2
    // Predicated region
    $region13: #{improved_fft_kernel_forward.7} parent=5 // pred_check
      %p129 = pneg %p128
    $region14: #{improved_fft_kernel_forward.7} parent=5 // pred_check_branch
      %131 = sbr.rel (%p129) target = $region16
    $region15: #{improved_fft_kernel_forward.7} parent=5 // pred_region
      // Predicated region
      $region17: #{improved_fft_kernel_forward.7} parent=15 // pred_check
        %p132 = pneg %p29
      $region18: #{improved_fft_kernel_forward.7} parent=15 // pred_check_branch
        %134 = sbr.rel (%p132) target = $region20
      $region19: #{improved_fft_kernel_forward.7} parent=15 // pred_region
        %p135 = scmp.lt.s32.totalorder %s9, 1
        %s136 = scalar_select %p135, %s9, 1
        %s137 = smul.addr %s136, 8
        %s138 = scalar_lea.vmem %s0, %s137
      $region20: #{improved_fft_kernel_forward.7} parent=15 // pred_fallthru
        _
      // Predicated region
      $region21: #{improved_fft_kernel_forward.7} parent=15 // pred_check
        %p139 = pneg %p55
      $region22: #{improved_fft_kernel_forward.7} parent=15 // pred_check_branch
        %141 = sbr.rel (%p139) target = $region24
      $region23: #{improved_fft_kernel_forward.7} parent=15 // pred_region
        %p142 = scmp.lt.s32.totalorder %s9, 1
        %s143 = scalar_select %p142, %s9, 1
        %s144 = smul.addr %s143, 8
        %s145 = scalar_lea.vmem %s1, %s144
      $region24: #{improved_fft_kernel_forward.7} parent=15 // pred_fallthru
        _
      // Predicated region
      $region25: #{improved_fft_kernel_forward.7} parent=15 // pred_check
        %p146 = pneg %p81
      $region26: #{improved_fft_kernel_forward.7} parent=15 // pred_check_branch
        %148 = sbr.rel (%p146) target = $region28
      $region27: #{improved_fft_kernel_forward.7} parent=15 // pred_region
        %p149 = scmp.lt.s32.totalorder %s9, 1
        %s150 = scalar_select %p149, %s9, 1
        %s151 = smul.addr %s150, 4
        %s152 = smul.addr %s151, 8
        %s153 = scalar_lea.vmem %s2, %s152
      $region28: #{improved_fft_kernel_forward.7} parent=15 // pred_fallthru
        _
    $region16: #{improved_fft_kernel_forward.7} parent=5 // pred_fallthru
      _
    %p154 = scmp.le.s32.totalorder 1, %s9
    %p155 = scmp.lt.s32.totalorder %s9, 3
    %p156 = pnand %p154, %p155
    %p157 = pneg %p156
    // Predicated region
    $region29: #{improved_fft_kernel_forward.7} parent=5 // pred_check
      _
    $region30: #{improved_fft_kernel_forward.7} parent=5 // pred_check_branch
      %159 = sbr.rel (%p156) target = $region32
    $region31: #{improved_fft_kernel_forward.7} parent=5 // pred_region
      %s160 = ssub.s32 %s9, 1
      %p161 = scmp.lt.s32.totalorder %s14, 1
      %s162 = scalar_select %p161, %s14, 1
      %s163 = smul.addr %s162, 8
      %s164 = scalar_lea.vmem %s0, %s163
      %p165 = pneg %p35
      %p166 = pneg %p32
      %p167 = scmp.lt.s32.totalorder %s14, 1
      %s168 = scalar_select %p167, %s14, 1
      %s169 = smul.addr %s168, 8
      %s170 = scalar_lea.vmem %s1, %s169
      %p171 = pneg %p61
      %p172 = pneg %p58
      %p173 = scmp.lt.s32.totalorder %s14, 1
      %s174 = scalar_select %p173, %s14, 1
      %s175 = smul.addr %s174, 4
      %s176 = smul.addr %s175, 8
      %s177 = scalar_lea.vmem %s2, %s176
      %p178 = pneg %p87
      %p179 = pneg %p84
      %p180 = pneg %p113
      %p181 = pneg %p110
      %p182 = scmp.lt.s32.totalorder %s14, 1
      %s183 = scalar_select %p182, %s14, 1
      %s184 = smul.addr %s183, 3
      %s185 = smul.addr %s184, 8
      %s186 = scalar_lea.vmem %s3, %s185
      %p187 = scmp.lt.s32.totalorder %s14, 1
      %s188 = scalar_select %p187, %s14, 1
      %s189 = smul.addr %s188, 8
      %s190 = scalar_lea.vmem %s0, %s189
      %p191 = scmp.lt.s32.totalorder %s14, 1
      %s192 = scalar_select %p191, %s14, 1
      %s193 = smul.addr %s192, 8
      %s194 = scalar_lea.vmem %s1, %s193
      %p195 = scmp.lt.s32.totalorder %s14, 1
      %s196 = scalar_select %p195, %s14, 1
      %s197 = smul.addr %s196, 4
      %s198 = smul.addr %s197, 8
      %s199 = scalar_lea.vmem %s2, %s198
      %p200 = scmp.lt.s32.totalorder %s14, 1
      %s201 = scalar_select %p200, %s14, 1
      %s202 = smul.addr %s201, 3
      %s203 = smul.addr %s202, 8
      %s204 = scalar_lea.vmem %s3, %s203
      %v205 = vld [vmem:[%s199] sm:$0xff]
      %v206 = vld [vmem:[%s199 + $0x8] sm:$0xff]
      %v207 = vld [vmem:[%s199 + $0x10] sm:$0xff]
      %v208 = vld [vmem:[%s199 + $0x18] sm:$0xff]
      %v209 = vld [vmem:[%s190] sm:$0xff]
      %211 = vset.pattern.permute.xlu0 0
      %212 = vperm.xlu0 %211, %v209
      %v213 = vpop.permute.xlu0 %212
      %v215 = vmul.f32 %v213, %v205
      %v216 = vmul.f32 %v213, %v206
      %v217 = vmul.f32 %v213, %v207
      %v218 = vadd.f32 %v215, 0.0
      %v219 = vadd.f32 %v216, 0.0
      %v220 = vadd.f32 %v217, 0.0
      %221 = vset.pattern.permute.xlu0 1
      %222 = vperm.xlu0 %221, %v209
      %v223 = vpop.permute.xlu0 %222
      %v225 = vmul.f32 %v223, %v205
      %v226 = vmul.f32 %v223, %v206
      %v227 = vmul.f32 %v223, %v207
      %231 = vrot.lane.b32.xlu0 %v225, 127
      %v232 = vpop.permute.xlu0 %231
      %233 = vrot.lane.b32.xlu0 %v226, 127
      %v234 = vpop.permute.xlu0 %233
      %235 = vrot.lane.b32.xlu0 %v227, 127
      %v236 = vpop.permute.xlu0 %235
      %vm237 = vcmask 1039360
      %v238 = vsel %vm237, %v232, %v234
      %v239 = vsel %vm237, %v234, %v236
      %v243 = vadd.f32 %v218, %v238
      %v244 = vadd.f32 %v219, %v239
      %v245 = vadd.f32 %v220, %v236
      %246 = vset.pattern.permute.xlu0 2
      %247 = vperm.xlu0 %246, %v209
      %v248 = vpop.permute.xlu0 %247
      %v250 = vmul.f32 %v248, %v205
      %v251 = vmul.f32 %v248, %v206
      %v252 = vmul.f32 %v248, %v207
      %256 = vrot.lane.b32.xlu0 %v250, 126
      %v257 = vpop.permute.xlu0 %256
      %258 = vrot.lane.b32.xlu0 %v251, 126
      %v259 = vpop.permute.xlu0 %258
      %260 = vrot.lane.b32.xlu0 %v252, 126
      %v261 = vpop.permute.xlu0 %260
      %vm262 = vcmask 1031168
      %v263 = vsel %vm262, %v257, %v259
      %v264 = vsel %vm262, %v259, %v261
      %v268 = vadd.f32 %v243, %v263
      %v269 = vadd.f32 %v244, %v264
      %v270 = vadd.f32 %v245, %v261
      %271 = vset.pattern.permute.xlu0 3
      %272 = vperm.xlu0 %271, %v209
      %v273 = vpop.permute.xlu0 %272
      %v275 = vmul.f32 %v273, %v205
      %v276 = vmul.f32 %v273, %v206
      %v277 = vmul.f32 %v273, %v207
      %281 = vrot.lane.b32.xlu0 %v275, 125
      %v282 = vpop.permute.xlu0 %281
      %283 = vrot.lane.b32.xlu0 %v276, 125
      %v284 = vpop.permute.xlu0 %283
      %285 = vrot.lane.b32.xlu0 %v277, 125
      %v286 = vpop.permute.xlu0 %285
      %vm287 = vcmask 1022976
      %v288 = vsel %vm287, %v282, %v284
      %v289 = vsel %vm287, %v284, %v286
      %v293 = vadd.f32 %v268, %v288
      %v294 = vadd.f32 %v269, %v289
      %v295 = vadd.f32 %v270, %v286
      %296 = vset.pattern.permute.xlu0 4
      %297 = vperm.xlu0 %296, %v209
      %v298 = vpop.permute.xlu0 %297
      %v300 = vmul.f32 %v298, %v205
      %v301 = vmul.f32 %v298, %v206
      %v302 = vmul.f32 %v298, %v207
      %306 = vrot.lane.b32.xlu0 %v300, 124
      %v307 = vpop.permute.xlu0 %306
      %308 = vrot.lane.b32.xlu0 %v301, 124
      %v309 = vpop.permute.xlu0 %308
      %310 = vrot.lane.b32.xlu0 %v302, 124
      %v311 = vpop.permute.xlu0 %310
      %vm312 = vcmask 1014784
      %v313 = vsel %vm312, %v307, %v309
      %v314 = vsel %vm312, %v309, %v311
      %v318 = vadd.f32 %v293, %v313
      %v319 = vadd.f32 %v294, %v314
      %v320 = vadd.f32 %v295, %v311
      %321 = vset.pattern.permute.xlu0 5
      %322 = vperm.xlu0 %321, %v209
      %v323 = vpop.permute.xlu0 %322
      %v325 = vmul.f32 %v323, %v205
      %v326 = vmul.f32 %v323, %v206
      %v327 = vmul.f32 %v323, %v207
      %331 = vrot.lane.b32.xlu0 %v325, 108
      %v332 = vpop.permute.xlu0 %331
      %333 = vrot.lane.b32.xlu0 %v326, 108
      %v334 = vpop.permute.xlu0 %333
      %335 = vrot.lane.b32.xlu0 %v327, 108
      %v336 = vpop.permute.xlu0 %335
      %vm337 = vcmask 883712
      %v338 = vsel %vm337, %v332, %v334
      %v339 = vsel %vm337, %v334, %v336
      %v343 = vadd.f32 %v318, %v338
      %v344 = vadd.f32 %v319, %v339
      %v345 = vadd.f32 %v320, %v336
      %346 = vset.pattern.permute.xlu0 6
      %347 = vperm.xlu0 %346, %v209
      %v348 = vpop.permute.xlu0 %347
      %v350 = vmul.f32 %v348, %v205
      %v351 = vmul.f32 %v348, %v206
      %v352 = vmul.f32 %v348, %v207
      %356 = vrot.lane.b32.xlu0 %v350, 107
      %v357 = vpop.permute.xlu0 %356
      %358 = vrot.lane.b32.xlu0 %v351, 107
      %v359 = vpop.permute.xlu0 %358
      %360 = vrot.lane.b32.xlu0 %v352, 107
      %v361 = vpop.permute.xlu0 %360
      %vm362 = vcmask 875520
      %v363 = vsel %vm362, %v357, %v359
      %v364 = vsel %vm362, %v359, %v361
      %v368 = vadd.f32 %v343, %v363
      %v369 = vadd.f32 %v344, %v364
      %v370 = vadd.f32 %v345, %v361
      %371 = vset.pattern.permute.xlu0 7
      %372 = vperm.xlu0 %371, %v209
      %v373 = vpop.permute.xlu0 %372
      %v375 = vmul.f32 %v373, %v205
      %v376 = vmul.f32 %v373, %v206
      %v377 = vmul.f32 %v373, %v207
      %381 = vrot.lane.b32.xlu0 %v375, 106
      %v382 = vpop.permute.xlu0 %381
      %383 = vrot.lane.b32.xlu0 %v376, 106
      %v384 = vpop.permute.xlu0 %383
      %385 = vrot.lane.b32.xlu0 %v377, 106
      %v386 = vpop.permute.xlu0 %385
      %vm387 = vcmask 867328
      %v388 = vsel %vm387, %v382, %v384
      %v389 = vsel %vm387, %v384, %v386
      %v393 = vadd.f32 %v368, %v388
      %v394 = vadd.f32 %v369, %v389
      %v395 = vadd.f32 %v370, %v386
      %396 = vset.pattern.permute.xlu0 8
      %397 = vperm.xlu0 %396, %v209
      %v398 = vpop.permute.xlu0 %397
      %v400 = vmul.f32 %v398, %v205
      %v401 = vmul.f32 %v398, %v206
      %v402 = vmul.f32 %v398, %v207
      %406 = vrot.lane.b32.xlu0 %v400, 105
      %v407 = vpop.permute.xlu0 %406
      %408 = vrot.lane.b32.xlu0 %v401, 105
      %v409 = vpop.permute.xlu0 %408
      %410 = vrot.lane.b32.xlu0 %v402, 105
      %v411 = vpop.permute.xlu0 %410
      %vm412 = vcmask 859136
      %v413 = vsel %vm412, %v407, %v409
      %v414 = vsel %vm412, %v409, %v411
      %v418 = vadd.f32 %v393, %v413
      %v419 = vadd.f32 %v394, %v414
      %v420 = vadd.f32 %v395, %v411
      %421 = vset.pattern.permute.xlu0 9
      %422 = vperm.xlu0 %421, %v209
      %v423 = vpop.permute.xlu0 %422
      %v425 = vmul.f32 %v423, %v205
      %v426 = vmul.f32 %v423, %v206
      %v427 = vmul.f32 %v423, %v207
      %431 = vrot.lane.b32.xlu0 %v425, 104
      %v432 = vpop.permute.xlu0 %431
      %433 = vrot.lane.b32.xlu0 %v426, 104
      %v434 = vpop.permute.xlu0 %433
      %435 = vrot.lane.b32.xlu0 %v427, 104
      %v436 = vpop.permute.xlu0 %435
      %vm437 = vcmask 850944
      %v438 = vsel %vm437, %v432, %v434
      %v439 = vsel %vm437, %v434, %v436
      %v443 = vadd.f32 %v418, %v438
      %v444 = vadd.f32 %v419, %v439
      %v445 = vadd.f32 %v420, %v436
      %446 = vset.pattern.permute.xlu0 10
      %447 = vperm.xlu0 %446, %v209
      %v448 = vpop.permute.xlu0 %447
      %v450 = vmul.f32 %v448, %v205
      %v451 = vmul.f32 %v448, %v206
      %v452 = vmul.f32 %v448, %v207
      %456 = vrot.lane.b32.xlu0 %v450, 88
      %v457 = vpop.permute.xlu0 %456
      %458 = vrot.lane.b32.xlu0 %v451, 88
      %v459 = vpop.permute.xlu0 %458
      %460 = vrot.lane.b32.xlu0 %v452, 88
      %v461 = vpop.permute.xlu0 %460
      %vm462 = vcmask 719872
      %v463 = vsel %vm462, %v457, %v459
      %v464 = vsel %vm462, %v459, %v461
      %v468 = vadd.f32 %v443, %v463
      %v469 = vadd.f32 %v444, %v464
      %v470 = vadd.f32 %v445, %v461
      %471 = vset.pattern.permute.xlu0 11
      %472 = vperm.xlu0 %471, %v209
      %v473 = vpop.permute.xlu0 %472
      %v475 = vmul.f32 %v473, %v205
      %v476 = vmul.f32 %v473, %v206
      %v477 = vmul.f32 %v473, %v207
      %481 = vrot.lane.b32.xlu0 %v475, 87
      %v482 = vpop.permute.xlu0 %481
      %483 = vrot.lane.b32.xlu0 %v476, 87
      %v484 = vpop.permute.xlu0 %483
      %485 = vrot.lane.b32.xlu0 %v477, 87
      %v486 = vpop.permute.xlu0 %485
      %vm487 = vcmask 711680
      %v488 = vsel %vm487, %v482, %v484
      %v489 = vsel %vm487, %v484, %v486
      %v493 = vadd.f32 %v468, %v488
      %v494 = vadd.f32 %v469, %v489
      %v495 = vadd.f32 %v470, %v486
      %496 = vset.pattern.permute.xlu0 12
      %497 = vperm.xlu0 %496, %v209
      %v498 = vpop.permute.xlu0 %497
      %v500 = vmul.f32 %v498, %v205
      %v501 = vmul.f32 %v498, %v206
      %v502 = vmul.f32 %v498, %v207
      %506 = vrot.lane.b32.xlu0 %v500, 86
      %v507 = vpop.permute.xlu0 %506
      %508 = vrot.lane.b32.xlu0 %v501, 86
      %v509 = vpop.permute.xlu0 %508
      %510 = vrot.lane.b32.xlu0 %v502, 86
      %v511 = vpop.permute.xlu0 %510
      %vm512 = vcmask 703488
      %v513 = vsel %vm512, %v507, %v509
      %v514 = vsel %vm512, %v509, %v511
      %v518 = vadd.f32 %v493, %v513
      %v519 = vadd.f32 %v494, %v514
      %v520 = vadd.f32 %v495, %v511
      %521 = vset.pattern.permute.xlu0 13
      %522 = vperm.xlu0 %521, %v209
      %v523 = vpop.permute.xlu0 %522
      %v525 = vmul.f32 %v523, %v205
      %v526 = vmul.f32 %v523, %v206
      %v527 = vmul.f32 %v523, %v207
      %531 = vrot.lane.b32.xlu0 %v525, 85
      %v532 = vpop.permute.xlu0 %531
      %533 = vrot.lane.b32.xlu0 %v526, 85
      %v534 = vpop.permute.xlu0 %533
      %535 = vrot.lane.b32.xlu0 %v527, 85
      %v536 = vpop.permute.xlu0 %535
      %vm537 = vcmask 695296
      %v538 = vsel %vm537, %v532, %v534
      %v539 = vsel %vm537, %v534, %v536
      %v543 = vadd.f32 %v518, %v538
      %v544 = vadd.f32 %v519, %v539
      %v545 = vadd.f32 %v520, %v536
      %546 = vset.pattern.permute.xlu0 14
      %547 = vperm.xlu0 %546, %v209
      %v548 = vpop.permute.xlu0 %547
      %v550 = vmul.f32 %v548, %v205
      %v551 = vmul.f32 %v548, %v206
      %v552 = vmul.f32 %v548, %v207
      %556 = vrot.lane.b32.xlu0 %v550, 84
      %v557 = vpop.permute.xlu0 %556
      %558 = vrot.lane.b32.xlu0 %v551, 84
      %v559 = vpop.permute.xlu0 %558
      %560 = vrot.lane.b32.xlu0 %v552, 84
      %v561 = vpop.permute.xlu0 %560
      %vm562 = vcmask 687104
      %v563 = vsel %vm562, %v557, %v559
      %v564 = vsel %vm562, %v559, %v561
      %v568 = vadd.f32 %v543, %v563
      %v569 = vadd.f32 %v544, %v564
      %v570 = vadd.f32 %v545, %v561
      %571 = vset.pattern.permute.xlu0 15
      %572 = vperm.xlu0 %571, %v209
      %v573 = vpop.permute.xlu0 %572
      %v575 = vmul.f32 %v573, %v205
      %v576 = vmul.f32 %v573, %v206
      %v577 = vmul.f32 %v573, %v207
      %581 = vrot.lane.b32.xlu0 %v575, 68
      %v582 = vpop.permute.xlu0 %581
      %583 = vrot.lane.b32.xlu0 %v576, 68
      %v584 = vpop.permute.xlu0 %583
      %585 = vrot.lane.b32.xlu0 %v577, 68
      %v586 = vpop.permute.xlu0 %585
      %vm587 = vcmask 556032
      %v588 = vsel %vm587, %v582, %v584
      %v589 = vsel %vm587, %v584, %v586
      %v593 = vadd.f32 %v568, %v588
      %v594 = vadd.f32 %v569, %v589
      %v595 = vadd.f32 %v570, %v586
      %596 = vset.pattern.permute.xlu0 16
      %597 = vperm.xlu0 %596, %v209
      %v598 = vpop.permute.xlu0 %597
      %v600 = vmul.f32 %v598, %v205
      %v601 = vmul.f32 %v598, %v206
      %v602 = vmul.f32 %v598, %v207
      %606 = vrot.lane.b32.xlu0 %v600, 67
      %v607 = vpop.permute.xlu0 %606
      %608 = vrot.lane.b32.xlu0 %v601, 67
      %v609 = vpop.permute.xlu0 %608
      %610 = vrot.lane.b32.xlu0 %v602, 67
      %v611 = vpop.permute.xlu0 %610
      %vm612 = vcmask 547840
      %v613 = vsel %vm612, %v607, %v609
      %v614 = vsel %vm612, %v609, %v611
      %v618 = vadd.f32 %v593, %v613
      %v619 = vadd.f32 %v594, %v614
      %v620 = vadd.f32 %v595, %v611
      %621 = vset.pattern.permute.xlu0 17
      %622 = vperm.xlu0 %621, %v209
      %v623 = vpop.permute.xlu0 %622
      %v625 = vmul.f32 %v623, %v205
      %v626 = vmul.f32 %v623, %v206
      %v627 = vmul.f32 %v623, %v207
      %631 = vrot.lane.b32.xlu0 %v625, 66
      %v632 = vpop.permute.xlu0 %631
      %633 = vrot.lane.b32.xlu0 %v626, 66
      %v634 = vpop.permute.xlu0 %633
      %635 = vrot.lane.b32.xlu0 %v627, 66
      %v636 = vpop.permute.xlu0 %635
      %vm637 = vcmask 539648
      %v638 = vsel %vm637, %v632, %v634
      %v639 = vsel %vm637, %v634, %v636
      %v643 = vadd.f32 %v618, %v638
      %v644 = vadd.f32 %v619, %v639
      %v645 = vadd.f32 %v620, %v636
      %646 = vset.pattern.permute.xlu0 18
      %647 = vperm.xlu0 %646, %v209
      %v648 = vpop.permute.xlu0 %647
      %v650 = vmul.f32 %v648, %v205
      %v651 = vmul.f32 %v648, %v206
      %v652 = vmul.f32 %v648, %v207
      %656 = vrot.lane.b32.xlu0 %v650, 65
      %v657 = vpop.permute.xlu0 %656
      %658 = vrot.lane.b32.xlu0 %v651, 65
      %v659 = vpop.permute.xlu0 %658
      %660 = vrot.lane.b32.xlu0 %v652, 65
      %v661 = vpop.permute.xlu0 %660
      %vm662 = vcmask 531456
      %v663 = vsel %vm662, %v657, %v659
      %v664 = vsel %vm662, %v659, %v661
      %v668 = vadd.f32 %v643, %v663
      %v669 = vadd.f32 %v644, %v664
      %v670 = vadd.f32 %v645, %v661
      %671 = vset.pattern.permute.xlu0 19
      %672 = vperm.xlu0 %671, %v209
      %v673 = vpop.permute.xlu0 %672
      %v675 = vmul.f32 %v673, %v205
      %v676 = vmul.f32 %v673, %v206
      %v677 = vmul.f32 %v673, %v207
      %681 = vrot.lane.b32.xlu0 %v675, 64
      %v682 = vpop.permute.xlu0 %681
      %683 = vrot.lane.b32.xlu0 %v676, 64
      %v684 = vpop.permute.xlu0 %683
      %685 = vrot.lane.b32.xlu0 %v677, 64
      %v686 = vpop.permute.xlu0 %685
      %vm687 = vcmask 523264
      %v688 = vsel %vm687, %v682, %v684
      %v689 = vsel %vm687, %v684, %v686
      %v693 = vadd.f32 %v668, %v688
      %v694 = vadd.f32 %v669, %v689
      %v695 = vadd.f32 %v670, %v686
      %696 = vset.pattern.permute.xlu0 20
      %697 = vperm.xlu0 %696, %v209
      %v698 = vpop.permute.xlu0 %697
      %v700 = vmul.f32 %v698, %v205
      %v701 = vmul.f32 %v698, %v206
      %v702 = vmul.f32 %v698, %v207
      %v703 = vmul.f32 %v698, %v208
      %708 = vrot.lane.b32.xlu0 %v700, 48
      %v709 = vpop.permute.xlu0 %708
      %710 = vrot.lane.b32.xlu0 %v701, 48
      %v711 = vpop.permute.xlu0 %710
      %712 = vrot.lane.b32.xlu0 %v702, 48
      %v713 = vpop.permute.xlu0 %712
      %714 = vrot.lane.b32.xlu0 %v703, 48
      %v715 = vpop.permute.xlu0 %714
      %vm716 = vcmask 392192
      %v717 = vsel %vm716, %v709, %v711
      %v718 = vsel %vm716, %v711, %v713
      %v719 = vsel %vm716, %v713, %v715
      %v723 = vadd.f32 %v693, %v717
      %v724 = vadd.f32 %v694, %v718
      %v725 = vadd.f32 %v695, %v719
      %726 = vset.pattern.permute.xlu0 21
      %727 = vperm.xlu0 %726, %v209
      %v728 = vpop.permute.xlu0 %727
      %v730 = vmul.f32 %v728, %v205
      %v731 = vmul.f32 %v728, %v206
      %v732 = vmul.f32 %v728, %v207
      %v733 = vmul.f32 %v728, %v208
      %738 = vrot.lane.b32.xlu0 %v730, 47
      %v739 = vpop.permute.xlu0 %738
      %740 = vrot.lane.b32.xlu0 %v731, 47
      %v741 = vpop.permute.xlu0 %740
      %742 = vrot.lane.b32.xlu0 %v732, 47
      %v743 = vpop.permute.xlu0 %742
      %744 = vrot.lane.b32.xlu0 %v733, 47
      %v745 = vpop.permute.xlu0 %744
      %vm746 = vcmask 384000
      %v747 = vsel %vm746, %v739, %v741
      %v748 = vsel %vm746, %v741, %v743
      %v749 = vsel %vm746, %v743, %v745
      %v753 = vadd.f32 %v723, %v747
      %v754 = vadd.f32 %v724, %v748
      %v755 = vadd.f32 %v725, %v749
      %756 = vset.pattern.permute.xlu0 22
      %757 = vperm.xlu0 %756, %v209
      %v758 = vpop.permute.xlu0 %757
      %v760 = vmul.f32 %v758, %v205
      %v761 = vmul.f32 %v758, %v206
      %v762 = vmul.f32 %v758, %v207
      %v763 = vmul.f32 %v758, %v208
      %768 = vrot.lane.b32.xlu0 %v760, 46
      %v769 = vpop.permute.xlu0 %768
      %770 = vrot.lane.b32.xlu0 %v761, 46
      %v771 = vpop.permute.xlu0 %770
      %772 = vrot.lane.b32.xlu0 %v762, 46
      %v773 = vpop.permute.xlu0 %772
      %774 = vrot.lane.b32.xlu0 %v763, 46
      %v775 = vpop.permute.xlu0 %774
      %vm776 = vcmask 375808
      %v777 = vsel %vm776, %v769, %v771
      %v778 = vsel %vm776, %v771, %v773
      %v779 = vsel %vm776, %v773, %v775
      %v783 = vadd.f32 %v753, %v777
      %v784 = vadd.f32 %v754, %v778
      %v785 = vadd.f32 %v755, %v779
      %786 = vset.pattern.permute.xlu0 23
      %787 = vperm.xlu0 %786, %v209
      %v788 = vpop.permute.xlu0 %787
      %v790 = vmul.f32 %v788, %v205
      %v791 = vmul.f32 %v788, %v206
      %v792 = vmul.f32 %v788, %v207
      %v793 = vmul.f32 %v788, %v208
      %798 = vrot.lane.b32.xlu0 %v790, 45
      %v799 = vpop.permute.xlu0 %798
      %800 = vrot.lane.b32.xlu0 %v791, 45
      %v801 = vpop.permute.xlu0 %800
      %802 = vrot.lane.b32.xlu0 %v792, 45
      %v803 = vpop.permute.xlu0 %802
      %804 = vrot.lane.b32.xlu0 %v793, 45
      %v805 = vpop.permute.xlu0 %804
      %vm806 = vcmask 367616
      %v807 = vsel %vm806, %v799, %v801
      %v808 = vsel %vm806, %v801, %v803
      %v809 = vsel %vm806, %v803, %v805
      %v813 = vadd.f32 %v783, %v807
      %v814 = vadd.f32 %v784, %v808
      %v815 = vadd.f32 %v785, %v809
      %816 = vset.pattern.permute.xlu0 24
      %817 = vperm.xlu0 %816, %v209
      %v818 = vpop.permute.xlu0 %817
      %v820 = vmul.f32 %v818, %v205
      %v821 = vmul.f32 %v818, %v206
      %v822 = vmul.f32 %v818, %v207
      %v823 = vmul.f32 %v818, %v208
      %828 = vrot.lane.b32.xlu0 %v820, 44
      %v829 = vpop.permute.xlu0 %828
      %830 = vrot.lane.b32.xlu0 %v821, 44
      %v831 = vpop.permute.xlu0 %830
      %832 = vrot.lane.b32.xlu0 %v822, 44
      %v833 = vpop.permute.xlu0 %832
      %834 = vrot.lane.b32.xlu0 %v823, 44
      %v835 = vpop.permute.xlu0 %834
      %vm836 = vcmask 359424
      %v837 = vsel %vm836, %v829, %v831
      %v838 = vsel %vm836, %v831, %v833
      %v839 = vsel %vm836, %v833, %v835
      %v843 = vadd.f32 %v813, %v837
      %v844 = vadd.f32 %v814, %v838
      %v845 = vadd.f32 %v815, %v839
      %v846 = vld [vmem:[%s194] sm:$0xff]
      %848 = vset.pattern.permute.xlu0 0
      %849 = vperm.xlu0 %848, %v846
      %v850 = vpop.permute.xlu0 %849
      %v852 = vadd.f32 %v843, %v850
      %v853 = vadd.f32 %v844, %v850
      %v854 = vadd.f32 %v845, %v850
      %855 = vst [vmem:[%s204] sm:$0xff] %v852
      %856 = vst [vmem:[%s204 + $0x8] sm:$0xff] %v853
      %857 = vst.msk [vmem:[%s204 + $0x10] sm:$0xff] %vm687, %v854
      %p858 = scmp.lt.s32.totalorder %s14, 1
      %s859 = scalar_select %p858, %s14, 1
      %s860 = smul.addr %s859, 3
      %s861 = smul.addr %s860, 8
      %s862 = scalar_lea.vmem %s3, %s861
      // Predicated region
      $region33: #{improved_fft_kernel_forward.7} parent=31 // pred_check
        %p863 = pneg %p110
      $region34: #{improved_fft_kernel_forward.7} parent=31 // pred_check_branch
        %865 = sbr.rel (%p863) target = $region36
      $region35: #{improved_fft_kernel_forward.7} parent=31 // pred_region
        _
      $region36: #{improved_fft_kernel_forward.7} parent=31 // pred_fallthru
        _
    $region32: #{improved_fft_kernel_forward.7} parent=5 // pred_fallthru
      _
    %p866 = scmp.le.s32.totalorder 2, %s9
    // Predicated region
    $region37: #{improved_fft_kernel_forward.7} parent=5 // pred_check
      %p867 = pneg %p866
    $region38: #{improved_fft_kernel_forward.7} parent=5 // pred_check_branch
      %869 = sbr.rel (%p867) target = $region40
    $region39: #{improved_fft_kernel_forward.7} parent=5 // pred_region
      %s870 = ssub.s32 %s9, 2
      // Predicated region
      $region41: #{improved_fft_kernel_forward.7} parent=39 // pred_check
        %p871 = pneg %p116
      $region42: #{improved_fft_kernel_forward.7} parent=39 // pred_check_branch
        %873 = sbr.rel (%p871) target = $region44
      $region43: #{improved_fft_kernel_forward.7} parent=39 // pred_region
        %p874 = scmp.lt.s32.totalorder %s15, 1
        %s875 = scalar_select %p874, %s15, 1
        %s876 = smul.addr %s875, 3
        %s877 = smul.addr %s876, 8
        %s878 = scalar_lea.vmem %s3, %s877
      $region44: #{improved_fft_kernel_forward.7} parent=39 // pred_fallthru
        _
    $region40: #{improved_fft_kernel_forward.7} parent=5 // pred_fallthru
      _
  $region6: #{improved_fft_kernel_forward.7} parent=0 // loop_footer
    %s13 = sadd.s32 1, %s9
  $region7: #{improved_fft_kernel_forward.7} parent=0 // loop_footer_branch
    %8 = sbr.rel target = $region3
  $region8: #{improved_fft_kernel_forward.7} parent=0 // loop_exit
    _

// kernel: improved_fft_kernel_forward.6
$region0: #{improved_fft_kernel_forward.6}
  #allocation0 [shape = 'u32[]', space=smem, size = 0x4, offset = 0x4, fixed_abs, tag = 'smem constant byte address 0x4 - core index']
  #allocation1 [shape = 'u32[144,128]{1,0:T(1,128)}', space=vmem, size = 0x12000, scoped, tag = 'internal scratch']
  %s0 = inlined_call_operand.vmem [shape: f32[16,9], index: 0, kind: input, shape index: {}]
  %s1 = inlined_call_operand.vmem [shape: f32[16,1], index: 1, kind: input, shape index: {}]
  %s2 = inlined_call_operand.vmem [shape: f32[16,384], index: 2, kind: input, shape index: {}]
  %s3 = inlined_call_operand.vmem [shape: f32[16,288], index: 3, kind: output, shape index: {}]
  %s4 = sld [smem:[#allocation0]]
  $region45: #{improved_fft_kernel_forward.6} parent=0
    _
  %s6 = ssub.s32 1, %s4
  %s7 = scalar_select 0, %s6, %s4
  loop: start=0, step=1, limit=4
  $region2: #{improved_fft_kernel_forward.6} parent=0 // loop_pre_header
    _
  $region3: #{improved_fft_kernel_forward.6} parent=0 // loop_header
    %s9 = sphi 0, %s13
    %p10 = scmp.ge.s32.totalorder %s9, 4
    %s19 = sphi 0, %s21
    %s22 = sphi 0, %s19
    %s23 = sphi 0, %s22
    %s39 = sphi 0, %s23
    %s45 = sphi 0, %s47
    %s48 = sphi 0, %s45
    %s49 = sphi 0, %s48
    %s65 = sphi 0, %s49
    %s71 = sphi 0, %s73
    %s74 = sphi 0, %s71
    %s75 = sphi 0, %s74
    %s91 = sphi 0, %s75
    %s97 = sphi 0, %s99
    %s100 = sphi 0, %s97
    %s101 = sphi 0, %s100
    %s117 = sphi 0, %s101
  $region4: #{improved_fft_kernel_forward.6} parent=0 // loop_header_branch
    %12 = sbr.rel (%p10) target = $region8
  $region5: #{improved_fft_kernel_forward.6} parent=0 // loop_body
    %s14 = ssub.s32 %s9, 1
    %s15 = ssub.s32 %s9, 2
    %s16 = sadd.s32 %s9, 1
    %s17 = ssub.s32 %s9, %s16
    %p18 = scmp.eq.s32.totalorder %s17, 0
    %s20 = sadd.s32 %s19, 1
    %s21 = scalar_select %p18, %s19, %s20
    %p24 = pneg %p18
    %p25 = scmp.eq.s32.totalorder %s9, 1
    %p26 = por %p24, %p25
    %p27 = scmp.ne.s32.totalorder %s19, %s22
    %p28 = scmp.eq.s32.totalorder %s9, 0
    %p29 = por %p27, %p28
    %p30 = scmp.ne.s32.totalorder %s19, %s22
    %p31 = scmp.eq.s32.totalorder %s14, 1
    %p32 = por %p30, %p31
    %p33 = scmp.ne.s32.totalorder %s22, %s23
    %p34 = scmp.eq.s32.totalorder %s14, 0
    %p35 = por %p33, %p34
    %p36 = scmp.ne.s32.totalorder %s22, %s23
    %p37 = scmp.eq.s32.totalorder %s15, 1
    %p38 = por %p36, %p37
    %p40 = scmp.ne.s32.totalorder %s23, %s39
    %p41 = scmp.eq.s32.totalorder %s15, 0
    %p42 = por %p40, %p41
    %s43 = ssub.s32 %s9, %s16
    %p44 = scmp.eq.s32.totalorder %s43, 0
    %s46 = sadd.s32 %s45, 1
    %s47 = scalar_select %p44, %s45, %s46
    %p50 = pneg %p44
    %p51 = scmp.eq.s32.totalorder %s9, 1
    %p52 = por %p50, %p51
    %p53 = scmp.ne.s32.totalorder %s45, %s48
    %p54 = scmp.eq.s32.totalorder %s9, 0
    %p55 = por %p53, %p54
    %p56 = scmp.ne.s32.totalorder %s45, %s48
    %p57 = scmp.eq.s32.totalorder %s14, 1
    %p58 = por %p56, %p57
    %p59 = scmp.ne.s32.totalorder %s48, %s49
    %p60 = scmp.eq.s32.totalorder %s14, 0
    %p61 = por %p59, %p60
    %p62 = scmp.ne.s32.totalorder %s48, %s49
    %p63 = scmp.eq.s32.totalorder %s15, 1
    %p64 = por %p62, %p63
    %p66 = scmp.ne.s32.totalorder %s49, %s65
    %p67 = scmp.eq.s32.totalorder %s15, 0
    %p68 = por %p66, %p67
    %s69 = ssub.s32 %s9, %s16
    %p70 = scmp.eq.s32.totalorder %s69, 0
    %s72 = sadd.s32 %s71, 1
    %s73 = scalar_select %p70, %s71, %s72
    %p76 = pneg %p70
    %p77 = scmp.eq.s32.totalorder %s9, 1
    %p78 = por %p76, %p77
    %p79 = scmp.ne.s32.totalorder %s71, %s74
    %p80 = scmp.eq.s32.totalorder %s9, 0
    %p81 = por %p79, %p80
    %p82 = scmp.ne.s32.totalorder %s71, %s74
    %p83 = scmp.eq.s32.totalorder %s14, 1
    %p84 = por %p82, %p83
    %p85 = scmp.ne.s32.totalorder %s74, %s75
    %p86 = scmp.eq.s32.totalorder %s14, 0
    %p87 = por %p85, %p86
    %p88 = scmp.ne.s32.totalorder %s74, %s75
    %p89 = scmp.eq.s32.totalorder %s15, 1
    %p90 = por %p88, %p89
    %p92 = scmp.ne.s32.totalorder %s75, %s91
    %p93 = scmp.eq.s32.totalorder %s15, 0
    %p94 = por %p92, %p93
    %s95 = ssub.s32 %s9, %s16
    %p96 = scmp.eq.s32.totalorder %s95, 0
    %s98 = sadd.s32 %s97, 1
    %s99 = scalar_select %p96, %s97, %s98
    %p102 = pneg %p96
    %p103 = scmp.eq.s32.totalorder %s9, 1
    %p104 = por %p102, %p103
    %p105 = scmp.ne.s32.totalorder %s97, %s100
    %p106 = scmp.eq.s32.totalorder %s9, 0
    %p107 = por %p105, %p106
    %p108 = scmp.ne.s32.totalorder %s97, %s100
    %p109 = scmp.eq.s32.totalorder %s14, 1
    %p110 = por %p108, %p109
    %p111 = scmp.ne.s32.totalorder %s100, %s101
    %p112 = scmp.eq.s32.totalorder %s14, 0
    %p113 = por %p111, %p112
    %p114 = scmp.ne.s32.totalorder %s100, %s101
    %p115 = scmp.eq.s32.totalorder %s15, 1
    %p116 = por %p114, %p115
    %p118 = scmp.ne.s32.totalorder %s101, %s117
    %p119 = scmp.eq.s32.totalorder %s15, 0
    %p120 = por %p118, %p119
    %p121 = scmp.le.s32.totalorder 1, %s9
    %p122 = scmp.lt.s32.totalorder %s9, 3
    %p123 = pnand %p121, %p122
    %p124 = pneg %p123
    // Predicated region
    $region9: #{improved_fft_kernel_forward.6} parent=5 // pred_check
      _
    $region10: #{improved_fft_kernel_forward.6} parent=5 // pred_check_branch
      %126 = sbr.rel (%p123) target = $region12
    $region11: #{improved_fft_kernel_forward.6} parent=5 // pred_region
      %s127 = ssub.s32 %s9, 1
    $region12: #{improved_fft_kernel_forward.6} parent=5 // pred_fallthru
      _
    %p128 = scmp.lt.s32.totalorder %s9, 2
    // Predicated region
    $region13: #{improved_fft_kernel_forward.6} parent=5 // pred_check
      %p129 = pneg %p128
    $region14: #{improved_fft_kernel_forward.6} parent=5 // pred_check_branch
      %131 = sbr.rel (%p129) target = $region16
    $region15: #{improved_fft_kernel_forward.6} parent=5 // pred_region
      // Predicated region
      $region17: #{improved_fft_kernel_forward.6} parent=15 // pred_check
        %p132 = pneg %p29
      $region18: #{improved_fft_kernel_forward.6} parent=15 // pred_check_branch
        %134 = sbr.rel (%p132) target = $region20
      $region19: #{improved_fft_kernel_forward.6} parent=15 // pred_region
        %p135 = scmp.lt.s32.totalorder %s9, 1
        %s136 = scalar_select %p135, %s9, 1
        %s137 = smul.addr %s136, 8
        %s138 = scalar_lea.vmem %s0, %s137
      $region20: #{improved_fft_kernel_forward.6} parent=15 // pred_fallthru
        _
      // Predicated region
      $region21: #{improved_fft_kernel_forward.6} parent=15 // pred_check
        %p139 = pneg %p55
      $region22: #{improved_fft_kernel_forward.6} parent=15 // pred_check_branch
        %141 = sbr.rel (%p139) target = $region24
      $region23: #{improved_fft_kernel_forward.6} parent=15 // pred_region
        %p142 = scmp.lt.s32.totalorder %s9, 1
        %s143 = scalar_select %p142, %s9, 1
        %s144 = smul.addr %s143, 8
        %s145 = scalar_lea.vmem %s1, %s144
      $region24: #{improved_fft_kernel_forward.6} parent=15 // pred_fallthru
        _
      // Predicated region
      $region25: #{improved_fft_kernel_forward.6} parent=15 // pred_check
        %p146 = pneg %p81
      $region26: #{improved_fft_kernel_forward.6} parent=15 // pred_check_branch
        %148 = sbr.rel (%p146) target = $region28
      $region27: #{improved_fft_kernel_forward.6} parent=15 // pred_region
        %p149 = scmp.lt.s32.totalorder %s9, 1
        %s150 = scalar_select %p149, %s9, 1
        %s151 = smul.addr %s150, 3
        %s152 = smul.addr %s151, 8
        %s153 = scalar_lea.vmem %s2, %s152
      $region28: #{improved_fft_kernel_forward.6} parent=15 // pred_fallthru
        _
    $region16: #{improved_fft_kernel_forward.6} parent=5 // pred_fallthru
      _
    %p154 = scmp.le.s32.totalorder 1, %s9
    %p155 = scmp.lt.s32.totalorder %s9, 3
    %p156 = pnand %p154, %p155
    %p157 = pneg %p156
    // Predicated region
    $region29: #{improved_fft_kernel_forward.6} parent=5 // pred_check
      _
    $region30: #{improved_fft_kernel_forward.6} parent=5 // pred_check_branch
      %159 = sbr.rel (%p156) target = $region32
    $region31: #{improved_fft_kernel_forward.6} parent=5 // pred_region
      %s160 = ssub.s32 %s9, 1
      %p161 = scmp.lt.s32.totalorder %s14, 1
      %s162 = scalar_select %p161, %s14, 1
      %s163 = smul.addr %s162, 8
      %s164 = scalar_lea.vmem %s0, %s163
      %p165 = pneg %p35
      %p166 = pneg %p32
      %p167 = scmp.lt.s32.totalorder %s14, 1
      %s168 = scalar_select %p167, %s14, 1
      %s169 = smul.addr %s168, 8
      %s170 = scalar_lea.vmem %s1, %s169
      %p171 = pneg %p61
      %p172 = pneg %p58
      %p173 = scmp.lt.s32.totalorder %s14, 1
      %s174 = scalar_select %p173, %s14, 1
      %s175 = smul.addr %s174, 3
      %s176 = smul.addr %s175, 8
      %s177 = scalar_lea.vmem %s2, %s176
      %p178 = pneg %p87
      %p179 = pneg %p84
      %p180 = pneg %p113
      %p181 = pneg %p110
      %p182 = scmp.lt.s32.totalorder %s14, 1
      %s183 = scalar_select %p182, %s14, 1
      %s184 = smul.addr %s183, 3
      %s185 = smul.addr %s184, 8
      %s186 = scalar_lea.vmem %s3, %s185
      %p187 = scmp.lt.s32.totalorder %s14, 1
      %s188 = scalar_select %p187, %s14, 1
      %s189 = smul.addr %s188, 8
      %s190 = scalar_lea.vmem %s0, %s189
      %p191 = scmp.lt.s32.totalorder %s14, 1
      %s192 = scalar_select %p191, %s14, 1
      %s193 = smul.addr %s192, 8
      %s194 = scalar_lea.vmem %s1, %s193
      %p195 = scmp.lt.s32.totalorder %s14, 1
      %s196 = scalar_select %p195, %s14, 1
      %s197 = smul.addr %s196, 3
      %s198 = smul.addr %s197, 8
      %s199 = scalar_lea.vmem %s2, %s198
      %p200 = scmp.lt.s32.totalorder %s14, 1
      %s201 = scalar_select %p200, %s14, 1
      %s202 = smul.addr %s201, 3
      %s203 = smul.addr %s202, 8
      %s204 = scalar_lea.vmem %s3, %s203
      %v205 = vld [vmem:[%s199] sm:$0xff]
      %v206 = vld [vmem:[%s199 + $0x8] sm:$0xff]
      %v207 = vld [vmem:[%s199 + $0x10] sm:$0xff]
      %v208 = vld [vmem:[%s190] sm:$0xff]
      %210 = vset.pattern.permute.xlu0 0
      %211 = vperm.xlu0 %210, %v208
      %v212 = vpop.permute.xlu0 %211
      %v214 = vmul.f32 %v212, %v205
      %v215 = vmul.f32 %v212, %v206
      %v216 = vmul.f32 %v212, %v207
      %v217 = vadd.f32 %v214, 0.0
      %v218 = vadd.f32 %v215, 0.0
      %v219 = vadd.f32 %v216, 0.0
      %220 = vset.pattern.permute.xlu0 1
      %221 = vperm.xlu0 %220, %v208
      %v222 = vpop.permute.xlu0 %221
      %v224 = vmul.f32 %v222, %v205
      %v225 = vmul.f32 %v222, %v206
      %v226 = vmul.f32 %v222, %v207
      %230 = vrot.lane.b32.xlu0 %v224, 127
      %v231 = vpop.permute.xlu0 %230
      %232 = vrot.lane.b32.xlu0 %v225, 127
      %v233 = vpop.permute.xlu0 %232
      %234 = vrot.lane.b32.xlu0 %v226, 127
      %v235 = vpop.permute.xlu0 %234
      %vm236 = vcmask 1039360
      %v237 = vsel %vm236, %v231, %v233
      %v238 = vsel %vm236, %v233, %v235
      %v242 = vadd.f32 %v217, %v237
      %v243 = vadd.f32 %v218, %v238
      %v244 = vadd.f32 %v219, %v235
      %245 = vset.pattern.permute.xlu0 2
      %246 = vperm.xlu0 %245, %v208
      %v247 = vpop.permute.xlu0 %246
      %v249 = vmul.f32 %v247, %v205
      %v250 = vmul.f32 %v247, %v206
      %v251 = vmul.f32 %v247, %v207
      %255 = vrot.lane.b32.xlu0 %v249, 126
      %v256 = vpop.permute.xlu0 %255
      %257 = vrot.lane.b32.xlu0 %v250, 126
      %v258 = vpop.permute.xlu0 %257
      %259 = vrot.lane.b32.xlu0 %v251, 126
      %v260 = vpop.permute.xlu0 %259
      %vm261 = vcmask 1031168
      %v262 = vsel %vm261, %v256, %v258
      %v263 = vsel %vm261, %v258, %v260
      %v267 = vadd.f32 %v242, %v262
      %v268 = vadd.f32 %v243, %v263
      %v269 = vadd.f32 %v244, %v260
      %270 = vset.pattern.permute.xlu0 3
      %271 = vperm.xlu0 %270, %v208
      %v272 = vpop.permute.xlu0 %271
      %v274 = vmul.f32 %v272, %v205
      %v275 = vmul.f32 %v272, %v206
      %v276 = vmul.f32 %v272, %v207
      %280 = vrot.lane.b32.xlu0 %v274, 110
      %v281 = vpop.permute.xlu0 %280
      %282 = vrot.lane.b32.xlu0 %v275, 110
      %v283 = vpop.permute.xlu0 %282
      %284 = vrot.lane.b32.xlu0 %v276, 110
      %v285 = vpop.permute.xlu0 %284
      %vm286 = vcmask 900096
      %v287 = vsel %vm286, %v281, %v283
      %v288 = vsel %vm286, %v283, %v285
      %v292 = vadd.f32 %v267, %v287
      %v293 = vadd.f32 %v268, %v288
      %v294 = vadd.f32 %v269, %v285
      %295 = vset.pattern.permute.xlu0 4
      %296 = vperm.xlu0 %295, %v208
      %v297 = vpop.permute.xlu0 %296
      %v299 = vmul.f32 %v297, %v205
      %v300 = vmul.f32 %v297, %v206
      %v301 = vmul.f32 %v297, %v207
      %305 = vrot.lane.b32.xlu0 %v299, 109
      %v306 = vpop.permute.xlu0 %305
      %307 = vrot.lane.b32.xlu0 %v300, 109
      %v308 = vpop.permute.xlu0 %307
      %309 = vrot.lane.b32.xlu0 %v301, 109
      %v310 = vpop.permute.xlu0 %309
      %vm311 = vcmask 891904
      %v312 = vsel %vm311, %v306, %v308
      %v313 = vsel %vm311, %v308, %v310
      %v317 = vadd.f32 %v292, %v312
      %v318 = vadd.f32 %v293, %v313
      %v319 = vadd.f32 %v294, %v310
      %320 = vset.pattern.permute.xlu0 5
      %321 = vperm.xlu0 %320, %v208
      %v322 = vpop.permute.xlu0 %321
      %v324 = vmul.f32 %v322, %v205
      %v325 = vmul.f32 %v322, %v206
      %v326 = vmul.f32 %v322, %v207
      %330 = vrot.lane.b32.xlu0 %v324, 108
      %v331 = vpop.permute.xlu0 %330
      %332 = vrot.lane.b32.xlu0 %v325, 108
      %v333 = vpop.permute.xlu0 %332
      %334 = vrot.lane.b32.xlu0 %v326, 108
      %v335 = vpop.permute.xlu0 %334
      %vm336 = vcmask 883712
      %v337 = vsel %vm336, %v331, %v333
      %v338 = vsel %vm336, %v333, %v335
      %v342 = vadd.f32 %v317, %v337
      %v343 = vadd.f32 %v318, %v338
      %v344 = vadd.f32 %v319, %v335
      %345 = vset.pattern.permute.xlu0 6
      %346 = vperm.xlu0 %345, %v208
      %v347 = vpop.permute.xlu0 %346
      %v349 = vmul.f32 %v347, %v205
      %v350 = vmul.f32 %v347, %v206
      %v351 = vmul.f32 %v347, %v207
      %355 = vrot.lane.b32.xlu0 %v349, 92
      %v356 = vpop.permute.xlu0 %355
      %357 = vrot.lane.b32.xlu0 %v350, 92
      %v358 = vpop.permute.xlu0 %357
      %359 = vrot.lane.b32.xlu0 %v351, 92
      %v360 = vpop.permute.xlu0 %359
      %vm361 = vcmask 752640
      %v362 = vsel %vm361, %v356, %v358
      %v363 = vsel %vm361, %v358, %v360
      %v367 = vadd.f32 %v342, %v362
      %v368 = vadd.f32 %v343, %v363
      %v369 = vadd.f32 %v344, %v360
      %370 = vset.pattern.permute.xlu0 7
      %371 = vperm.xlu0 %370, %v208
      %v372 = vpop.permute.xlu0 %371
      %v374 = vmul.f32 %v372, %v205
      %v375 = vmul.f32 %v372, %v206
      %v376 = vmul.f32 %v372, %v207
      %380 = vrot.lane.b32.xlu0 %v374, 91
      %v381 = vpop.permute.xlu0 %380
      %382 = vrot.lane.b32.xlu0 %v375, 91
      %v383 = vpop.permute.xlu0 %382
      %384 = vrot.lane.b32.xlu0 %v376, 91
      %v385 = vpop.permute.xlu0 %384
      %vm386 = vcmask 744448
      %v387 = vsel %vm386, %v381, %v383
      %v388 = vsel %vm386, %v383, %v385
      %v392 = vadd.f32 %v367, %v387
      %v393 = vadd.f32 %v368, %v388
      %v394 = vadd.f32 %v369, %v385
      %395 = vset.pattern.permute.xlu0 8
      %396 = vperm.xlu0 %395, %v208
      %v397 = vpop.permute.xlu0 %396
      %v399 = vmul.f32 %v397, %v205
      %v400 = vmul.f32 %v397, %v206
      %v401 = vmul.f32 %v397, %v207
      %405 = vrot.lane.b32.xlu0 %v399, 90
      %v406 = vpop.permute.xlu0 %405
      %407 = vrot.lane.b32.xlu0 %v400, 90
      %v408 = vpop.permute.xlu0 %407
      %409 = vrot.lane.b32.xlu0 %v401, 90
      %v410 = vpop.permute.xlu0 %409
      %vm411 = vcmask 736256
      %v412 = vsel %vm411, %v406, %v408
      %v413 = vsel %vm411, %v408, %v410
      %v417 = vadd.f32 %v392, %v412
      %v418 = vadd.f32 %v393, %v413
      %v419 = vadd.f32 %v394, %v410
      %v420 = vld [vmem:[%s194] sm:$0xff]
      %422 = vset.pattern.permute.xlu0 0
      %423 = vperm.xlu0 %422, %v420
      %v424 = vpop.permute.xlu0 %423
      %v426 = vadd.f32 %v417, %v424
      %v427 = vadd.f32 %v418, %v424
      %v428 = vadd.f32 %v419, %v424
      %429 = vst [vmem:[%s204] sm:$0xff] %v426
      %430 = vst [vmem:[%s204 + $0x8] sm:$0xff] %v427
      %vm431 = vcmask 261120
      %432 = vst.msk [vmem:[%s204 + $0x10] sm:$0xff] %vm431, %v428
      %p433 = scmp.lt.s32.totalorder %s14, 1
      %s434 = scalar_select %p433, %s14, 1
      %s435 = smul.addr %s434, 3
      %s436 = smul.addr %s435, 8
      %s437 = scalar_lea.vmem %s3, %s436
      // Predicated region
      $region33: #{improved_fft_kernel_forward.6} parent=31 // pred_check
        %p438 = pneg %p110
      $region34: #{improved_fft_kernel_forward.6} parent=31 // pred_check_branch
        %440 = sbr.rel (%p438) target = $region36
      $region35: #{improved_fft_kernel_forward.6} parent=31 // pred_region
        _
      $region36: #{improved_fft_kernel_forward.6} parent=31 // pred_fallthru
        _
    $region32: #{improved_fft_kernel_forward.6} parent=5 // pred_fallthru
      _
    %p441 = scmp.le.s32.totalorder 2, %s9
    // Predicated region
    $region37: #{improved_fft_kernel_forward.6} parent=5 // pred_check
      %p442 = pneg %p441
    $region38: #{improved_fft_kernel_forward.6} parent=5 // pred_check_branch
      %444 = sbr.rel (%p442) target = $region40
    $region39: #{improved_fft_kernel_forward.6} parent=5 // pred_region
      %s445 = ssub.s32 %s9, 2
      // Predicated region
      $region41: #{improved_fft_kernel_forward.6} parent=39 // pred_check
        %p446 = pneg %p116
      $region42: #{improved_fft_kernel_forward.6} parent=39 // pred_check_branch
        %448 = sbr.rel (%p446) target = $region44
      $region43: #{improved_fft_kernel_forward.6} parent=39 // pred_region
        %p449 = scmp.lt.s32.totalorder %s15, 1
        %s450 = scalar_select %p449, %s15, 1
        %s451 = smul.addr %s450, 3
        %s452 = smul.addr %s451, 8
        %s453 = scalar_lea.vmem %s3, %s452
      $region44: #{improved_fft_kernel_forward.6} parent=39 // pred_fallthru
        _
    $region40: #{improved_fft_kernel_forward.6} parent=5 // pred_fallthru
      _
  $region6: #{improved_fft_kernel_forward.6} parent=0 // loop_footer
    %s13 = sadd.s32 1, %s9
  $region7: #{improved_fft_kernel_forward.6} parent=0 // loop_footer_branch
    %8 = sbr.rel target = $region3
  $region8: #{improved_fft_kernel_forward.6} parent=0 // loop_exit
    _

// kernel: improved_fft_kernel_forward.8
$region0: #{improved_fft_kernel_forward.8}
  #allocation0 [shape = 'u32[]', space=smem, size = 0x4, offset = 0x4, fixed_abs, tag = 'smem constant byte address 0x4 - core index']
  #allocation1 [shape = 'u32[144,128]{1,0:T(1,128)}', space=vmem, size = 0x12000, scoped, tag = 'internal scratch']
  %s0 = inlined_call_operand.vmem [shape: f32[8,8], index: 0, kind: input, shape index: {}]
  %s1 = inlined_call_operand.vmem [shape: f32[8,8], index: 1, kind: input, shape index: {}]
  %s2 = inlined_call_operand.vmem [shape: f32[8,8], index: 2, kind: input, shape index: {}]
  %s3 = inlined_call_operand.vmem [shape: f32[8,1], index: 3, kind: input, shape index: {}]
  %s4 = inlined_call_operand.vmem [shape: f32[8,1], index: 4, kind: input, shape index: {}]
  %s5 = inlined_call_operand.vmem [shape: f32[8,1], index: 5, kind: input, shape index: {}]
  %s6 = inlined_call_operand.vmem [shape: f32[16,1], index: 6, kind: input, shape index: {}]
  %s7 = inlined_call_operand.vmem [shape: f32[16,256], index: 7, kind: input, shape index: {}]
  %s8 = inlined_call_operand.vmem [shape: f32[16,256], index: 8, kind: input, shape index: {}]
  %s9 = inlined_call_operand.vmem [shape: f32[16,256], index: 9, kind: input, shape index: {}]
  %s10 = inlined_call_operand.vmem [shape: f32[16,256], index: 10, kind: output, shape index: {0}]
  %s11 = inlined_call_operand.vmem [shape: f32[16,256], index: 11, kind: output, shape index: {1}]
  %s12 = inlined_call_operand.vmem [shape: f32[16,256], index: 12, kind: output, shape index: {2}]
  %13 = xla_tuple %s10, %s11, %s12
  %s14 = sld [smem:[#allocation0]]
  $region89: #{improved_fft_kernel_forward.8} parent=0
    _
  %s16 = ssub.s32 1, %s14
  %s17 = scalar_select 0, %s16, %s14
  loop: start=0, step=1, limit=4
  $region2: #{improved_fft_kernel_forward.8} parent=0 // loop_pre_header
    _
  $region3: #{improved_fft_kernel_forward.8} parent=0 // loop_header
    %s19 = sphi 0, %s23
    %p20 = scmp.ge.s32.totalorder %s19, 4
    %s26 = sphi 0, %s38
    %s27 = sphi 0, %s34
    %s28 = sphi 0, %s26
    %s29 = sphi 0, %s27
    %s30 = sphi 0, %s28
    %s31 = sphi 0, %s29
    %s39 = sphi 0, %s39
    %s41 = sphi 0, %s39
    %s42 = sphi 0, %s41
    %s56 = sphi 0, %s42
    %s60 = sphi 0, %s60
    %s62 = sphi 0, %s60
    %s63 = sphi 0, %s62
    %s77 = sphi 0, %s63
    %s81 = sphi 0, %s81
    %s83 = sphi 0, %s81
    %s84 = sphi 0, %s83
    %s98 = sphi 0, %s84
    %s102 = sphi 0, %s102
    %s104 = sphi 0, %s102
    %s105 = sphi 0, %s104
    %s119 = sphi 0, %s105
    %s123 = sphi 0, %s123
    %s125 = sphi 0, %s123
    %s126 = sphi 0, %s125
    %s140 = sphi 0, %s126
    %s144 = sphi 0, %s144
    %s146 = sphi 0, %s144
    %s147 = sphi 0, %s146
    %s161 = sphi 0, %s147
    %s167 = sphi 0, %s169
    %s170 = sphi 0, %s167
    %s171 = sphi 0, %s170
    %s187 = sphi 0, %s171
    %s195 = sphi 0, %s197
    %s198 = sphi 0, %s195
    %s199 = sphi 0, %s198
    %s215 = sphi 0, %s199
    %s223 = sphi 0, %s225
    %s226 = sphi 0, %s223
    %s227 = sphi 0, %s226
    %s243 = sphi 0, %s227
    %s251 = sphi 0, %s253
    %s254 = sphi 0, %s251
    %s255 = sphi 0, %s254
    %s271 = sphi 0, %s255
    %s279 = sphi 0, %s281
    %s282 = sphi 0, %s279
    %s283 = sphi 0, %s282
    %s299 = sphi 0, %s283
    %s307 = sphi 0, %s309
    %s310 = sphi 0, %s307
    %s311 = sphi 0, %s310
    %s327 = sphi 0, %s311
    %s335 = sphi 0, %s337
    %s338 = sphi 0, %s335
    %s339 = sphi 0, %s338
    %s355 = sphi 0, %s339
  $region4: #{improved_fft_kernel_forward.8} parent=0 // loop_header_branch
    %22 = sbr.rel (%p20) target = $region8
  $region5: #{improved_fft_kernel_forward.8} parent=0 // loop_body
    %s24 = ssub.s32 %s19, 1
    %s25 = ssub.s32 %s19, 2
    %s32 = sadd.s32 1, %s27
    %p33 = scmp.ge.s32.totalorder %s32, 1
    %s34 = scalar_select %p33, 0, %s32
    %s35 = sadd.s32 1, %s26
    %s36 = scalar_select %p33, %s35, %s26
    %p37 = scmp.ge.s32.totalorder %s36, 2
    %s38 = scalar_select %p37, 0, %s36
    %s40 = sadd.s32 %s39, 1
    %p43 = scmp.eq.s32.totalorder %s19, 1
    %p44 = scmp.ne.s32.totalorder %s39, %s41
    %p45 = scmp.eq.s32.totalorder %s19, 0
    %p46 = por %p44, %p45
    %p47 = scmp.ne.s32.totalorder %s39, %s41
    %p48 = scmp.eq.s32.totalorder %s24, 1
    %p49 = por %p47, %p48
    %p50 = scmp.ne.s32.totalorder %s41, %s42
    %p51 = scmp.eq.s32.totalorder %s24, 0
    %p52 = por %p50, %p51
    %p53 = scmp.ne.s32.totalorder %s41, %s42
    %p54 = scmp.eq.s32.totalorder %s25, 1
    %p55 = por %p53, %p54
    %p57 = scmp.ne.s32.totalorder %s42, %s56
    %p58 = scmp.eq.s32.totalorder %s25, 0
    %p59 = por %p57, %p58
    %s61 = sadd.s32 %s60, 1
    %p64 = scmp.eq.s32.totalorder %s19, 1
    %p65 = scmp.ne.s32.totalorder %s60, %s62
    %p66 = scmp.eq.s32.totalorder %s19, 0
    %p67 = por %p65, %p66
    %p68 = scmp.ne.s32.totalorder %s60, %s62
    %p69 = scmp.eq.s32.totalorder %s24, 1
    %p70 = por %p68, %p69
    %p71 = scmp.ne.s32.totalorder %s62, %s63
    %p72 = scmp.eq.s32.totalorder %s24, 0
    %p73 = por %p71, %p72
    %p74 = scmp.ne.s32.totalorder %s62, %s63
    %p75 = scmp.eq.s32.totalorder %s25, 1
    %p76 = por %p74, %p75
    %p78 = scmp.ne.s32.totalorder %s63, %s77
    %p79 = scmp.eq.s32.totalorder %s25, 0
    %p80 = por %p78, %p79
    %s82 = sadd.s32 %s81, 1
    %p85 = scmp.eq.s32.totalorder %s19, 1
    %p86 = scmp.ne.s32.totalorder %s81, %s83
    %p87 = scmp.eq.s32.totalorder %s19, 0
    %p88 = por %p86, %p87
    %p89 = scmp.ne.s32.totalorder %s81, %s83
    %p90 = scmp.eq.s32.totalorder %s24, 1
    %p91 = por %p89, %p90
    %p92 = scmp.ne.s32.totalorder %s83, %s84
    %p93 = scmp.eq.s32.totalorder %s24, 0
    %p94 = por %p92, %p93
    %p95 = scmp.ne.s32.totalorder %s83, %s84
    %p96 = scmp.eq.s32.totalorder %s25, 1
    %p97 = por %p95, %p96
    %p99 = scmp.ne.s32.totalorder %s84, %s98
    %p100 = scmp.eq.s32.totalorder %s25, 0
    %p101 = por %p99, %p100
    %s103 = sadd.s32 %s102, 1
    %p106 = scmp.eq.s32.totalorder %s19, 1
    %p107 = scmp.ne.s32.totalorder %s102, %s104
    %p108 = scmp.eq.s32.totalorder %s19, 0
    %p109 = por %p107, %p108
    %p110 = scmp.ne.s32.totalorder %s102, %s104
    %p111 = scmp.eq.s32.totalorder %s24, 1
    %p112 = por %p110, %p111
    %p113 = scmp.ne.s32.totalorder %s104, %s105
    %p114 = scmp.eq.s32.totalorder %s24, 0
    %p115 = por %p113, %p114
    %p116 = scmp.ne.s32.totalorder %s104, %s105
    %p117 = scmp.eq.s32.totalorder %s25, 1
    %p118 = por %p116, %p117
    %p120 = scmp.ne.s32.totalorder %s105, %s119
    %p121 = scmp.eq.s32.totalorder %s25, 0
    %p122 = por %p120, %p121
    %s124 = sadd.s32 %s123, 1
    %p127 = scmp.eq.s32.totalorder %s19, 1
    %p128 = scmp.ne.s32.totalorder %s123, %s125
    %p129 = scmp.eq.s32.totalorder %s19, 0
    %p130 = por %p128, %p129
    %p131 = scmp.ne.s32.totalorder %s123, %s125
    %p132 = scmp.eq.s32.totalorder %s24, 1
    %p133 = por %p131, %p132
    %p134 = scmp.ne.s32.totalorder %s125, %s126
    %p135 = scmp.eq.s32.totalorder %s24, 0
    %p136 = por %p134, %p135
    %p137 = scmp.ne.s32.totalorder %s125, %s126
    %p138 = scmp.eq.s32.totalorder %s25, 1
    %p139 = por %p137, %p138
    %p141 = scmp.ne.s32.totalorder %s126, %s140
    %p142 = scmp.eq.s32.totalorder %s25, 0
    %p143 = por %p141, %p142
    %s145 = sadd.s32 %s144, 1
    %p148 = scmp.eq.s32.totalorder %s19, 1
    %p149 = scmp.ne.s32.totalorder %s144, %s146
    %p150 = scmp.eq.s32.totalorder %s19, 0
    %p151 = por %p149, %p150
    %p152 = scmp.ne.s32.totalorder %s144, %s146
    %p153 = scmp.eq.s32.totalorder %s24, 1
    %p154 = por %p152, %p153
    %p155 = scmp.ne.s32.totalorder %s146, %s147
    %p156 = scmp.eq.s32.totalorder %s24, 0
    %p157 = por %p155, %p156
    %p158 = scmp.ne.s32.totalorder %s146, %s147
    %p159 = scmp.eq.s32.totalorder %s25, 1
    %p160 = por %p158, %p159
    %p162 = scmp.ne.s32.totalorder %s147, %s161
    %p163 = scmp.eq.s32.totalorder %s25, 0
    %p164 = por %p162, %p163
    %s165 = ssub.s32 %s26, %s38
    %p166 = scmp.eq.s32.totalorder %s165, 0
    %s168 = sadd.s32 %s167, 1
    %s169 = scalar_select %p166, %s167, %s168
    %p172 = pneg %p166
    %p173 = scmp.eq.s32.totalorder %s19, 1
    %p174 = por %p172, %p173
    %p175 = scmp.ne.s32.totalorder %s167, %s170
    %p176 = scmp.eq.s32.totalorder %s19, 0
    %p177 = por %p175, %p176
    %p178 = scmp.ne.s32.totalorder %s167, %s170
    %p179 = scmp.eq.s32.totalorder %s24, 1
    %p180 = por %p178, %p179
    %p181 = scmp.ne.s32.totalorder %s170, %s171
    %p182 = scmp.eq.s32.totalorder %s24, 0
    %p183 = por %p181, %p182
    %p184 = scmp.ne.s32.totalorder %s170, %s171
    %p185 = scmp.eq.s32.totalorder %s25, 1
    %p186 = por %p184, %p185
    %p188 = scmp.ne.s32.totalorder %s171, %s187
    %p189 = scmp.eq.s32.totalorder %s25, 0
    %p190 = por %p188, %p189
    %s191 = ssub.s32 %s26, %s38
    %s192 = ssub.s32 %s27, %s34
    %s193 = sor.u32 %s191, %s192
    %p194 = scmp.eq.s32.totalorder %s193, 0
    %s196 = sadd.s32 %s195, 1
    %s197 = scalar_select %p194, %s195, %s196
    %p200 = pneg %p194
    %p201 = scmp.eq.s32.totalorder %s19, 1
    %p202 = por %p200, %p201
    %p203 = scmp.ne.s32.totalorder %s195, %s198
    %p204 = scmp.eq.s32.totalorder %s19, 0
    %p205 = por %p203, %p204
    %p206 = scmp.ne.s32.totalorder %s195, %s198
    %p207 = scmp.eq.s32.totalorder %s24, 1
    %p208 = por %p206, %p207
    %p209 = scmp.ne.s32.totalorder %s198, %s199
    %p210 = scmp.eq.s32.totalorder %s24, 0
    %p211 = por %p209, %p210
    %p212 = scmp.ne.s32.totalorder %s198, %s199
    %p213 = scmp.eq.s32.totalorder %s25, 1
    %p214 = por %p212, %p213
    %p216 = scmp.ne.s32.totalorder %s199, %s215
    %p217 = scmp.eq.s32.totalorder %s25, 0
    %p218 = por %p216, %p217
    %s219 = ssub.s32 %s26, %s38
    %s220 = ssub.s32 %s27, %s34
    %s221 = sor.u32 %s219, %s220
    %p222 = scmp.eq.s32.totalorder %s221, 0
    %s224 = sadd.s32 %s223, 1
    %s225 = scalar_select %p222, %s223, %s224
    %p228 = pneg %p222
    %p229 = scmp.eq.s32.totalorder %s19, 1
    %p230 = por %p228, %p229
    %p231 = scmp.ne.s32.totalorder %s223, %s226
    %p232 = scmp.eq.s32.totalorder %s19, 0
    %p233 = por %p231, %p232
    %p234 = scmp.ne.s32.totalorder %s223, %s226
    %p235 = scmp.eq.s32.totalorder %s24, 1
    %p236 = por %p234, %p235
    %p237 = scmp.ne.s32.totalorder %s226, %s227
    %p238 = scmp.eq.s32.totalorder %s24, 0
    %p239 = por %p237, %p238
    %p240 = scmp.ne.s32.totalorder %s226, %s227
    %p241 = scmp.eq.s32.totalorder %s25, 1
    %p242 = por %p240, %p241
    %p244 = scmp.ne.s32.totalorder %s227, %s243
    %p245 = scmp.eq.s32.totalorder %s25, 0
    %p246 = por %p244, %p245
    %s247 = ssub.s32 %s26, %s38
    %s248 = ssub.s32 %s27, %s34
    %s249 = sor.u32 %s247, %s248
    %p250 = scmp.eq.s32.totalorder %s249, 0
    %s252 = sadd.s32 %s251, 1
    %s253 = scalar_select %p250, %s251, %s252
    %p256 = pneg %p250
    %p257 = scmp.eq.s32.totalorder %s19, 1
    %p258 = por %p256, %p257
    %p259 = scmp.ne.s32.totalorder %s251, %s254
    %p260 = scmp.eq.s32.totalorder %s19, 0
    %p261 = por %p259, %p260
    %p262 = scmp.ne.s32.totalorder %s251, %s254
    %p263 = scmp.eq.s32.totalorder %s24, 1
    %p264 = por %p262, %p263
    %p265 = scmp.ne.s32.totalorder %s254, %s255
    %p266 = scmp.eq.s32.totalorder %s24, 0
    %p267 = por %p265, %p266
    %p268 = scmp.ne.s32.totalorder %s254, %s255
    %p269 = scmp.eq.s32.totalorder %s25, 1
    %p270 = por %p268, %p269
    %p272 = scmp.ne.s32.totalorder %s255, %s271
    %p273 = scmp.eq.s32.totalorder %s25, 0
    %p274 = por %p272, %p273
    %s275 = ssub.s32 %s26, %s38
    %s276 = ssub.s32 %s27, %s34
    %s277 = sor.u32 %s275, %s276
    %p278 = scmp.eq.s32.totalorder %s277, 0
    %s280 = sadd.s32 %s279, 1
    %s281 = scalar_select %p278, %s279, %s280
    %p284 = pneg %p278
    %p285 = scmp.eq.s32.totalorder %s19, 1
    %p286 = por %p284, %p285
    %p287 = scmp.ne.s32.totalorder %s279, %s282
    %p288 = scmp.eq.s32.totalorder %s19, 0
    %p289 = por %p287, %p288
    %p290 = scmp.ne.s32.totalorder %s279, %s282
    %p291 = scmp.eq.s32.totalorder %s24, 1
    %p292 = por %p290, %p291
    %p293 = scmp.ne.s32.totalorder %s282, %s283
    %p294 = scmp.eq.s32.totalorder %s24, 0
    %p295 = por %p293, %p294
    %p296 = scmp.ne.s32.totalorder %s282, %s283
    %p297 = scmp.eq.s32.totalorder %s25, 1
    %p298 = por %p296, %p297
    %p300 = scmp.ne.s32.totalorder %s283, %s299
    %p301 = scmp.eq.s32.totalorder %s25, 0
    %p302 = por %p300, %p301
    %s303 = ssub.s32 %s26, %s38
    %s304 = ssub.s32 %s27, %s34
    %s305 = sor.u32 %s303, %s304
    %p306 = scmp.eq.s32.totalorder %s305, 0
    %s308 = sadd.s32 %s307, 1
    %s309 = scalar_select %p306, %s307, %s308
    %p312 = pneg %p306
    %p313 = scmp.eq.s32.totalorder %s19, 1
    %p314 = por %p312, %p313
    %p315 = scmp.ne.s32.totalorder %s307, %s310
    %p316 = scmp.eq.s32.totalorder %s19, 0
    %p317 = por %p315, %p316
    %p318 = scmp.ne.s32.totalorder %s307, %s310
    %p319 = scmp.eq.s32.totalorder %s24, 1
    %p320 = por %p318, %p319
    %p321 = scmp.ne.s32.totalorder %s310, %s311
    %p322 = scmp.eq.s32.totalorder %s24, 0
    %p323 = por %p321, %p322
    %p324 = scmp.ne.s32.totalorder %s310, %s311
    %p325 = scmp.eq.s32.totalorder %s25, 1
    %p326 = por %p324, %p325
    %p328 = scmp.ne.s32.totalorder %s311, %s327
    %p329 = scmp.eq.s32.totalorder %s25, 0
    %p330 = por %p328, %p329
    %s331 = ssub.s32 %s26, %s38
    %s332 = ssub.s32 %s27, %s34
    %s333 = sor.u32 %s331, %s332
    %p334 = scmp.eq.s32.totalorder %s333, 0
    %s336 = sadd.s32 %s335, 1
    %s337 = scalar_select %p334, %s335, %s336
    %p340 = pneg %p334
    %p341 = scmp.eq.s32.totalorder %s19, 1
    %p342 = por %p340, %p341
    %p343 = scmp.ne.s32.totalorder %s335, %s338
    %p344 = scmp.eq.s32.totalorder %s19, 0
    %p345 = por %p343, %p344
    %p346 = scmp.ne.s32.totalorder %s335, %s338
    %p347 = scmp.eq.s32.totalorder %s24, 1
    %p348 = por %p346, %p347
    %p349 = scmp.ne.s32.totalorder %s338, %s339
    %p350 = scmp.eq.s32.totalorder %s24, 0
    %p351 = por %p349, %p350
    %p352 = scmp.ne.s32.totalorder %s338, %s339
    %p353 = scmp.eq.s32.totalorder %s25, 1
    %p354 = por %p352, %p353
    %p356 = scmp.ne.s32.totalorder %s339, %s355
    %p357 = scmp.eq.s32.totalorder %s25, 0
    %p358 = por %p356, %p357
    %p359 = scmp.le.s32.totalorder 1, %s19
    %p360 = scmp.lt.s32.totalorder %s19, 3
    %p361 = pnand %p359, %p360
    %p362 = pneg %p361
    // Predicated region
    $region9: #{improved_fft_kernel_forward.8} parent=5 // pred_check
      _
    $region10: #{improved_fft_kernel_forward.8} parent=5 // pred_check_branch
      %364 = sbr.rel (%p361) target = $region12
    $region11: #{improved_fft_kernel_forward.8} parent=5 // pred_region
      %s365 = ssub.s32 %s19, 1
      // Predicated region
      $region13: #{improved_fft_kernel_forward.8} parent=11 // pred_check
        %p366 = pneg %p52
      $region14: #{improved_fft_kernel_forward.8} parent=11 // pred_check_branch
        %368 = sbr.rel (%p366) target = $region16
      $region15: #{improved_fft_kernel_forward.8} parent=11 // pred_region
        _
      $region16: #{improved_fft_kernel_forward.8} parent=11 // pred_fallthru
        _
      // Predicated region
      $region17: #{improved_fft_kernel_forward.8} parent=11 // pred_check
        %p369 = pneg %p73
      $region18: #{improved_fft_kernel_forward.8} parent=11 // pred_check_branch
        %371 = sbr.rel (%p369) target = $region20
      $region19: #{improved_fft_kernel_forward.8} parent=11 // pred_region
        _
      $region20: #{improved_fft_kernel_forward.8} parent=11 // pred_fallthru
        _
      // Predicated region
      $region21: #{improved_fft_kernel_forward.8} parent=11 // pred_check
        %p372 = pneg %p94
      $region22: #{improved_fft_kernel_forward.8} parent=11 // pred_check_branch
        %374 = sbr.rel (%p372) target = $region24
      $region23: #{improved_fft_kernel_forward.8} parent=11 // pred_region
        _
      $region24: #{improved_fft_kernel_forward.8} parent=11 // pred_fallthru
        _
      // Predicated region
      $region25: #{improved_fft_kernel_forward.8} parent=11 // pred_check
        %p375 = pneg %p115
      $region26: #{improved_fft_kernel_forward.8} parent=11 // pred_check_branch
        %377 = sbr.rel (%p375) target = $region28
      $region27: #{improved_fft_kernel_forward.8} parent=11 // pred_region
        _
      $region28: #{improved_fft_kernel_forward.8} parent=11 // pred_fallthru
        _
      // Predicated region
      $region29: #{improved_fft_kernel_forward.8} parent=11 // pred_check
        %p378 = pneg %p136
      $region30: #{improved_fft_kernel_forward.8} parent=11 // pred_check_branch
        %380 = sbr.rel (%p378) target = $region32
      $region31: #{improved_fft_kernel_forward.8} parent=11 // pred_region
        _
      $region32: #{improved_fft_kernel_forward.8} parent=11 // pred_fallthru
        _
      // Predicated region
      $region33: #{improved_fft_kernel_forward.8} parent=11 // pred_check
        %p381 = pneg %p157
      $region34: #{improved_fft_kernel_forward.8} parent=11 // pred_check_branch
        %383 = sbr.rel (%p381) target = $region36
      $region35: #{improved_fft_kernel_forward.8} parent=11 // pred_region
        _
      $region36: #{improved_fft_kernel_forward.8} parent=11 // pred_fallthru
        _
    $region12: #{improved_fft_kernel_forward.8} parent=5 // pred_fallthru
      _
    %p384 = scmp.lt.s32.totalorder %s19, 2
    // Predicated region
    $region37: #{improved_fft_kernel_forward.8} parent=5 // pred_check
      %p385 = pneg %p384
    $region38: #{improved_fft_kernel_forward.8} parent=5 // pred_check_branch
      %387 = sbr.rel (%p385) target = $region40
    $region39: #{improved_fft_kernel_forward.8} parent=5 // pred_region
      // Predicated region
      $region41: #{improved_fft_kernel_forward.8} parent=39 // pred_check
        %p388 = pneg %p177
      $region42: #{improved_fft_kernel_forward.8} parent=39 // pred_check_branch
        %390 = sbr.rel (%p388) target = $region44
      $region43: #{improved_fft_kernel_forward.8} parent=39 // pred_region
        %p391 = scmp.lt.s32.totalorder %s26, 1
        %s392 = scalar_select %p391, %s26, 1
        %s393 = smul.addr %s392, 8
        %s394 = scalar_lea.vmem %s6, %s393
      $region44: #{improved_fft_kernel_forward.8} parent=39 // pred_fallthru
        _
      // Predicated region
      $region45: #{improved_fft_kernel_forward.8} parent=39 // pred_check
        %p395 = pneg %p205
      $region46: #{improved_fft_kernel_forward.8} parent=39 // pred_check_branch
        %397 = sbr.rel (%p395) target = $region48
      $region47: #{improved_fft_kernel_forward.8} parent=39 // pred_region
        %s398 = smul.u32 2, %s27
        %p399 = scmp.lt.s32.totalorder %s26, 1
        %s400 = scalar_select %p399, %s26, 1
        %p401 = scmp.lt.s32.totalorder %s398, 1
        %s402 = scalar_select %p401, %s398, 1
        %s403 = smul.addr %s400, 2
        %s404 = sadd.s32 %s402, %s403
        %s405 = smul.addr %s404, 8
        %s406 = scalar_lea.vmem %s7, %s405
        %s407 = smul.u32 2, %s27
      $region48: #{improved_fft_kernel_forward.8} parent=39 // pred_fallthru
        _
      // Predicated region
      $region49: #{improved_fft_kernel_forward.8} parent=39 // pred_check
        %p408 = pneg %p233
      $region50: #{improved_fft_kernel_forward.8} parent=39 // pred_check_branch
        %410 = sbr.rel (%p408) target = $region52
      $region51: #{improved_fft_kernel_forward.8} parent=39 // pred_region
        %s411 = smul.u32 2, %s27
        %p412 = scmp.lt.s32.totalorder %s26, 1
        %s413 = scalar_select %p412, %s26, 1
        %p414 = scmp.lt.s32.totalorder %s411, 1
        %s415 = scalar_select %p414, %s411, 1
        %s416 = smul.addr %s413, 2
        %s417 = sadd.s32 %s415, %s416
        %s418 = smul.addr %s417, 8
        %s419 = scalar_lea.vmem %s8, %s418
        %s420 = smul.u32 2, %s27
      $region52: #{improved_fft_kernel_forward.8} parent=39 // pred_fallthru
        _
      // Predicated region
      $region53: #{improved_fft_kernel_forward.8} parent=39 // pred_check
        %p421 = pneg %p261
      $region54: #{improved_fft_kernel_forward.8} parent=39 // pred_check_branch
        %423 = sbr.rel (%p421) target = $region56
      $region55: #{improved_fft_kernel_forward.8} parent=39 // pred_region
        %s424 = smul.u32 2, %s27
        %p425 = scmp.lt.s32.totalorder %s26, 1
        %s426 = scalar_select %p425, %s26, 1
        %p427 = scmp.lt.s32.totalorder %s424, 1
        %s428 = scalar_select %p427, %s424, 1
        %s429 = smul.addr %s426, 2
        %s430 = sadd.s32 %s428, %s429
        %s431 = smul.addr %s430, 8
        %s432 = scalar_lea.vmem %s9, %s431
        %s433 = smul.u32 2, %s27
      $region56: #{improved_fft_kernel_forward.8} parent=39 // pred_fallthru
        _
    $region40: #{improved_fft_kernel_forward.8} parent=5 // pred_fallthru
      _
    %p434 = scmp.le.s32.totalorder 1, %s19
    %p435 = scmp.lt.s32.totalorder %s19, 3
    %p436 = pnand %p434, %p435
    %p437 = pneg %p436
    // Predicated region
    $region57: #{improved_fft_kernel_forward.8} parent=5 // pred_check
      _
    $region58: #{improved_fft_kernel_forward.8} parent=5 // pred_check_branch
      %439 = sbr.rel (%p436) target = $region60
    $region59: #{improved_fft_kernel_forward.8} parent=5 // pred_region
      %s440 = ssub.s32 %s19, 1
      %p441 = pneg %p52
      %p442 = pneg %p49
      %p443 = pneg %p73
      %p444 = pneg %p70
      %p445 = pneg %p94
      %p446 = pneg %p91
      %p447 = pneg %p115
      %p448 = pneg %p112
      %p449 = pneg %p136
      %p450 = pneg %p133
      %p451 = pneg %p157
      %p452 = pneg %p154
      %p453 = scmp.lt.s32.totalorder %s28, 1
      %s454 = scalar_select %p453, %s28, 1
      %s455 = smul.addr %s454, 8
      %s456 = scalar_lea.vmem %s6, %s455
      %p457 = pneg %p183
      %p458 = pneg %p180
      %s459 = smul.u32 2, %s29
      %p460 = scmp.lt.s32.totalorder %s28, 1
      %s461 = scalar_select %p460, %s28, 1
      %p462 = scmp.lt.s32.totalorder %s459, 1
      %s463 = scalar_select %p462, %s459, 1
      %s464 = smul.addr %s461, 2
      %s465 = sadd.s32 %s463, %s464
      %s466 = smul.addr %s465, 8
      %s467 = scalar_lea.vmem %s7, %s466
      %p468 = pneg %p211
      %p469 = pneg %p208
      %s470 = smul.u32 2, %s29
      %p471 = scmp.lt.s32.totalorder %s28, 1
      %s472 = scalar_select %p471, %s28, 1
      %p473 = scmp.lt.s32.totalorder %s470, 1
      %s474 = scalar_select %p473, %s470, 1
      %s475 = smul.addr %s472, 2
      %s476 = sadd.s32 %s474, %s475
      %s477 = smul.addr %s476, 8
      %s478 = scalar_lea.vmem %s8, %s477
      %p479 = pneg %p239
      %p480 = pneg %p236
      %s481 = smul.u32 2, %s29
      %p482 = scmp.lt.s32.totalorder %s28, 1
      %s483 = scalar_select %p482, %s28, 1
      %p484 = scmp.lt.s32.totalorder %s481, 1
      %s485 = scalar_select %p484, %s481, 1
      %s486 = smul.addr %s483, 2
      %s487 = sadd.s32 %s485, %s486
      %s488 = smul.addr %s487, 8
      %s489 = scalar_lea.vmem %s9, %s488
      %p490 = pneg %p267
      %p491 = pneg %p264
      %p492 = pneg %p295
      %p493 = pneg %p292
      %s494 = smul.u32 2, %s29
      %p495 = scmp.lt.s32.totalorder %s28, 1
      %s496 = scalar_select %p495, %s28, 1
      %p497 = scmp.lt.s32.totalorder %s494, 1
      %s498 = scalar_select %p497, %s494, 1
      %s499 = smul.addr %s496, 2
      %s500 = sadd.s32 %s498, %s499
      %s501 = smul.addr %s500, 8
      %s502 = scalar_lea.vmem %s10, %s501
      %p503 = pneg %p323
      %p504 = pneg %p320
      %s505 = smul.u32 2, %s29
      %p506 = scmp.lt.s32.totalorder %s28, 1
      %s507 = scalar_select %p506, %s28, 1
      %p508 = scmp.lt.s32.totalorder %s505, 1
      %s509 = scalar_select %p508, %s505, 1
      %s510 = smul.addr %s507, 2
      %s511 = sadd.s32 %s509, %s510
      %s512 = smul.addr %s511, 8
      %s513 = scalar_lea.vmem %s11, %s512
      %p514 = pneg %p351
      %p515 = pneg %p348
      %s516 = smul.u32 2, %s29
      %p517 = scmp.lt.s32.totalorder %s28, 1
      %s518 = scalar_select %p517, %s28, 1
      %p519 = scmp.lt.s32.totalorder %s516, 1
      %s520 = scalar_select %p519, %s516, 1
      %s521 = smul.addr %s518, 2
      %s522 = sadd.s32 %s520, %s521
      %s523 = smul.addr %s522, 8
      %s524 = scalar_lea.vmem %s12, %s523
      %p525 = scmp.lt.s32.totalorder %s28, 1
      %s526 = scalar_select %p525, %s28, 1
      %s527 = smul.addr %s526, 8
      %s528 = scalar_lea.vmem %s6, %s527
      %s529 = smul.u32 2, %s29
      %p530 = scmp.lt.s32.totalorder %s28, 1
      %s531 = scalar_select %p530, %s28, 1
      %p532 = scmp.lt.s32.totalorder %s529, 1
      %s533 = scalar_select %p532, %s529, 1
      %s534 = smul.addr %s531, 2
      %s535 = sadd.s32 %s533, %s534
      %s536 = smul.addr %s535, 8
      %s537 = scalar_lea.vmem %s7, %s536
      %s538 = smul.u32 2, %s29
      %s539 = smul.u32 2, %s29
      %p540 = scmp.lt.s32.totalorder %s28, 1
      %s541 = scalar_select %p540, %s28, 1
      %p542 = scmp.lt.s32.totalorder %s539, 1
      %s543 = scalar_select %p542, %s539, 1
      %s544 = smul.addr %s541, 2
      %s545 = sadd.s32 %s543, %s544
      %s546 = smul.addr %s545, 8
      %s547 = scalar_lea.vmem %s8, %s546
      %s548 = smul.u32 2, %s29
      %s549 = smul.u32 2, %s29
      %p550 = scmp.lt.s32.totalorder %s28, 1
      %s551 = scalar_select %p550, %s28, 1
      %p552 = scmp.lt.s32.totalorder %s549, 1
      %s553 = scalar_select %p552, %s549, 1
      %s554 = smul.addr %s551, 2
      %s555 = sadd.s32 %s553, %s554
      %s556 = smul.addr %s555, 8
      %s557 = scalar_lea.vmem %s9, %s556
      %s558 = smul.u32 2, %s29
      %s559 = smul.u32 2, %s29
      %p560 = scmp.lt.s32.totalorder %s28, 1
      %s561 = scalar_select %p560, %s28, 1
      %p562 = scmp.lt.s32.totalorder %s559, 1
      %s563 = scalar_select %p562, %s559, 1
      %s564 = smul.addr %s561, 2
      %s565 = sadd.s32 %s563, %s564
      %s566 = smul.addr %s565, 8
      %s567 = scalar_lea.vmem %s10, %s566
      %s568 = smul.u32 2, %s29
      %s569 = smul.u32 2, %s29
      %p570 = scmp.lt.s32.totalorder %s28, 1
      %s571 = scalar_select %p570, %s28, 1
      %p572 = scmp.lt.s32.totalorder %s569, 1
      %s573 = scalar_select %p572, %s569, 1
      %s574 = smul.addr %s571, 2
      %s575 = sadd.s32 %s573, %s574
      %s576 = smul.addr %s575, 8
      %s577 = scalar_lea.vmem %s11, %s576
      %s578 = smul.u32 2, %s29
      %s579 = smul.u32 2, %s29
      %p580 = scmp.lt.s32.totalorder %s28, 1
      %s581 = scalar_select %p580, %s28, 1
      %p582 = scmp.lt.s32.totalorder %s579, 1
      %s583 = scalar_select %p582, %s579, 1
      %s584 = smul.addr %s581, 2
      %s585 = sadd.s32 %s583, %s584
      %s586 = smul.addr %s585, 8
      %s587 = scalar_lea.vmem %s12, %s586
      %s588 = smul.u32 2, %s29
      %v589 = vld [vmem:[%s0] sm:$0xff]
      %v590 = vld [vmem:[%s537] sm:$0xff]
      %v591 = vld [vmem:[%s537 + $0x8] sm:$0xff]
      %v592 = vld [vmem:[%s3] sm:$0xff]
      %594 = vset.pattern.permute.xlu0 0
      %595 = vperm.xlu0 %594, %v592
      %v596 = vpop.permute.xlu0 %595
      %vm598 = vcmask 64512
      %v600 = vsel %vm598, %v589, 0
      %602 = vmatprep.subr.mxu0 %v591
      %603 = vmatpush1.msra.mxu0 %v590
      %604 = vmatprep.subr.mxu0 0.0
      %605 = vmatpush1.msra.mxu0 0.0
      %606 = vmatprep.subr.mxu0 0.0
      %607 = vmatpush1.msra.mxu0 0.0
      %608 = vmatprep.subr.mxu0 0.0
      %609 = vmatpush1.msra.mxu0 0.0
      %610 = vmatprep.subr.mxu0 0.0
      %611 = vmatpush1.msra.mxu0 0.0
      %612 = vmatprep.subr.mxu0 0.0
      %613 = vmatpush1.msra.mxu0 0.0
      %614 = vmatprep.subr.mxu0 0.0
      %615 = vmatpush1.msra.mxu0 0.0
      %616 = vmatprep.subr.mxu0 0.0
      %617 = vmatpush1.msra.mxu0 0.0
      %618 = vmatprep.subr.mxu0 0.0
      %619 = vmatpush1.msra.mxu0 0.0
      %620 = vmatprep.subr.mxu0 0.0
      %621 = vmatpush1.msra.mxu0 0.0
      %622 = vmatprep.subr.mxu0 0.0
      %623 = vmatpush1.msra.mxu0 0.0
      %624 = vmatprep.subr.mxu0 0.0
      %625 = vmatpush1.msra.mxu0 0.0
      %626 = vmatprep.subr.mxu0 0.0
      %627 = vmatpush1.msra.mxu0 0.0
      %628 = vmatprep.subr.mxu0 0.0
      %629 = vmatpush1.msra.mxu0 0.0
      %630 = vmatprep.subr.mxu0 0.0
      %631 = vmatpush1.msra.mxu0 0.0
      %632 = vmatprep.subr.mxu0 0.0
      %633 = vmatpush1.msra.mxu0 0.0
      %634 = vmatprep.subr.mxu0 0.0
      %635 = vmatpush1.msra.mxu0 0.0
      %636 = vmatprep.subr.mxu0 0.0
      %637 = vmatpush1.msra.mxu0 0.0
      %638 = vmatprep.subr.mxu0 0.0
      %639 = vmatpush1.msra.mxu0 0.0
      %640 = vmatprep.subr.mxu0 0.0
      %641 = vmatpush1.msra.mxu0 0.0
      %642 = vmatprep.subr.mxu0 0.0
      %643 = vmatpush1.msra.mxu0 0.0
      %644 = vmatprep.subr.mxu0 0.0
      %645 = vmatpush1.msra.mxu0 0.0
      %646 = vmatprep.subr.mxu0 0.0
      %647 = vmatpush1.msra.mxu0 0.0
      %648 = vmatprep.subr.mxu0 0.0
      %649 = vmatpush1.msra.mxu0 0.0
      %650 = vmatprep.subr.mxu0 0.0
      %651 = vmatpush1.msra.mxu0 0.0
      %652 = vmatprep.subr.mxu0 0.0
      %653 = vmatpush1.msra.mxu0 0.0
      %654 = vmatprep.subr.mxu0 0.0
      %655 = vmatpush1.msra.mxu0 0.0
      %656 = vmatprep.subr.mxu0 0.0
      %657 = vmatpush1.msra.mxu0 0.0
      %658 = vmatprep.subr.mxu0 0.0
      %659 = vmatpush1.msra.mxu0 0.0
      %660 = vmatprep.subr.mxu0 0.0
      %661 = vmatpush1.msra.mxu0 0.0
      %662 = vmatprep.subr.mxu0 0.0
      %663 = vmatpush1.msra.mxu0 0.0
      %664 = vmatprep.subr.mxu0 0.0
      %665 = vmatpush1.msra.mxu0 0.0
      %666 = vmatprep.mubr.f32.mxu0 0.0
      %667 = vmatmul.mubr.f32.gmra.mrb[0].mxu0 %v600
      %v668 = vpop.f32.mrb[0].mxu0
      %v669 = vadd.f32 %v596, %v668
      %v670 = vpop.f32.mrb[0].mxu0
      %v671 = vadd.f32 %v596, %v670
      %672 = vdwg.mxu0
      %v673 = vld [vmem:[%s547] sm:$0xff]
      %v674 = vld [vmem:[%s547 + $0x8] sm:$0xff]
      %v675 = vadd.f32 %v669, %v673
      %v676 = vadd.f32 %v671, %v674
      %v677 = vld [vmem:[%s557] sm:$0xff]
      %v678 = vld [vmem:[%s557 + $0x8] sm:$0xff]
      %v679 = vadd.f32 %v675, %v677
      %v680 = vadd.f32 %v676, %v678
      %v681 = vld [vmem:[%s528] sm:$0xff]
      %683 = vset.pattern.permute.xlu0 0
      %684 = vperm.xlu0 %683, %v681
      %v685 = vpop.permute.xlu0 %684
      %v687 = vmul.f32 %v679, %v685
      %v688 = vmul.f32 %v680, %v685
      %689 = vst [vmem:[%s567] sm:$0xff] %v687
      %690 = vst [vmem:[%s567 + $0x8] sm:$0xff] %v688
      %v691 = vld [vmem:[%s1] sm:$0xff]
      %v692 = vld [vmem:[%s4] sm:$0xff]
      %694 = vset.pattern.permute.xlu0 0
      %695 = vperm.xlu0 %694, %v692
      %v696 = vpop.permute.xlu0 %695
      %v699 = vsel %vm598, %v691, 0
      %701 = vmatprep.subr.mxu0 %v688
      %702 = vmatpush1.msra.mxu0 %v687
      %703 = vmatprep.subr.mxu0 0.0
      %704 = vmatpush1.msra.mxu0 0.0
      %705 = vmatprep.subr.mxu0 0.0
      %706 = vmatpush1.msra.mxu0 0.0
      %707 = vmatprep.subr.mxu0 0.0
      %708 = vmatpush1.msra.mxu0 0.0
      %709 = vmatprep.subr.mxu0 0.0
      %710 = vmatpush1.msra.mxu0 0.0
      %711 = vmatprep.subr.mxu0 0.0
      %712 = vmatpush1.msra.mxu0 0.0
      %713 = vmatprep.subr.mxu0 0.0
      %714 = vmatpush1.msra.mxu0 0.0
      %715 = vmatprep.subr.mxu0 0.0
      %716 = vmatpush1.msra.mxu0 0.0
      %717 = vmatprep.subr.mxu0 0.0
      %718 = vmatpush1.msra.mxu0 0.0
      %719 = vmatprep.subr.mxu0 0.0
      %720 = vmatpush1.msra.mxu0 0.0
      %721 = vmatprep.subr.mxu0 0.0
      %722 = vmatpush1.msra.mxu0 0.0
      %723 = vmatprep.subr.mxu0 0.0
      %724 = vmatpush1.msra.mxu0 0.0
      %725 = vmatprep.subr.mxu0 0.0
      %726 = vmatpush1.msra.mxu0 0.0
      %727 = vmatprep.subr.mxu0 0.0
      %728 = vmatpush1.msra.mxu0 0.0
      %729 = vmatprep.subr.mxu0 0.0
      %730 = vmatpush1.msra.mxu0 0.0
      %731 = vmatprep.subr.mxu0 0.0
      %732 = vmatpush1.msra.mxu0 0.0
      %733 = vmatprep.subr.mxu0 0.0
      %734 = vmatpush1.msra.mxu0 0.0
      %735 = vmatprep.subr.mxu0 0.0
      %736 = vmatpush1.msra.mxu0 0.0
      %737 = vmatprep.subr.mxu0 0.0
      %738 = vmatpush1.msra.mxu0 0.0
      %739 = vmatprep.subr.mxu0 0.0
      %740 = vmatpush1.msra.mxu0 0.0
      %741 = vmatprep.subr.mxu0 0.0
      %742 = vmatpush1.msra.mxu0 0.0
      %743 = vmatprep.subr.mxu0 0.0
      %744 = vmatpush1.msra.mxu0 0.0
      %745 = vmatprep.subr.mxu0 0.0
      %746 = vmatpush1.msra.mxu0 0.0
      %747 = vmatprep.subr.mxu0 0.0
      %748 = vmatpush1.msra.mxu0 0.0
      %749 = vmatprep.subr.mxu0 0.0
      %750 = vmatpush1.msra.mxu0 0.0
      %751 = vmatprep.subr.mxu0 0.0
      %752 = vmatpush1.msra.mxu0 0.0
      %753 = vmatprep.subr.mxu0 0.0
      %754 = vmatpush1.msra.mxu0 0.0
      %755 = vmatprep.subr.mxu0 0.0
      %756 = vmatpush1.msra.mxu0 0.0
      %757 = vmatprep.subr.mxu0 0.0
      %758 = vmatpush1.msra.mxu0 0.0
      %759 = vmatprep.subr.mxu0 0.0
      %760 = vmatpush1.msra.mxu0 0.0
      %761 = vmatprep.subr.mxu0 0.0
      %762 = vmatpush1.msra.mxu0 0.0
      %763 = vmatprep.subr.mxu0 0.0
      %764 = vmatpush1.msra.mxu0 0.0
      %765 = vmatprep.mubr.f32.mxu0 0.0
      %766 = vmatmul.mubr.f32.gmra.mrb[0].mxu0 %v699
      %v767 = vpop.f32.mrb[0].mxu0
      %v768 = vadd.f32 %v696, %v767
      %v769 = vpop.f32.mrb[0].mxu0
      %v770 = vadd.f32 %v696, %v769
      %771 = vdwg.mxu0
      %772 = vst [vmem:[%s577] sm:$0xff] %v768
      %773 = vst [vmem:[%s577 + $0x8] sm:$0xff] %v770
      %v774 = vld [vmem:[%s2] sm:$0xff]
      %v775 = vld [vmem:[%s5] sm:$0xff]
      %777 = vset.pattern.permute.xlu0 0
      %778 = vperm.xlu0 %777, %v775
      %v779 = vpop.permute.xlu0 %778
      %v782 = vsel %vm598, %v774, 0
      %784 = vmatprep.subr.mxu0 %v688
      %785 = vmatpush1.msra.mxu0 %v687
      %786 = vmatprep.subr.mxu0 0.0
      %787 = vmatpush1.msra.mxu0 0.0
      %788 = vmatprep.subr.mxu0 0.0
      %789 = vmatpush1.msra.mxu0 0.0
      %790 = vmatprep.subr.mxu0 0.0
      %791 = vmatpush1.msra.mxu0 0.0
      %792 = vmatprep.subr.mxu0 0.0
      %793 = vmatpush1.msra.mxu0 0.0
      %794 = vmatprep.subr.mxu0 0.0
      %795 = vmatpush1.msra.mxu0 0.0
      %796 = vmatprep.subr.mxu0 0.0
      %797 = vmatpush1.msra.mxu0 0.0
      %798 = vmatprep.subr.mxu0 0.0
      %799 = vmatpush1.msra.mxu0 0.0
      %800 = vmatprep.subr.mxu0 0.0
      %801 = vmatpush1.msra.mxu0 0.0
      %802 = vmatprep.subr.mxu0 0.0
      %803 = vmatpush1.msra.mxu0 0.0
      %804 = vmatprep.subr.mxu0 0.0
      %805 = vmatpush1.msra.mxu0 0.0
      %806 = vmatprep.subr.mxu0 0.0
      %807 = vmatpush1.msra.mxu0 0.0
      %808 = vmatprep.subr.mxu0 0.0
      %809 = vmatpush1.msra.mxu0 0.0
      %810 = vmatprep.subr.mxu0 0.0
      %811 = vmatpush1.msra.mxu0 0.0
      %812 = vmatprep.subr.mxu0 0.0
      %813 = vmatpush1.msra.mxu0 0.0
      %814 = vmatprep.subr.mxu0 0.0
      %815 = vmatpush1.msra.mxu0 0.0
      %816 = vmatprep.subr.mxu0 0.0
      %817 = vmatpush1.msra.mxu0 0.0
      %818 = vmatprep.subr.mxu0 0.0
      %819 = vmatpush1.msra.mxu0 0.0
      %820 = vmatprep.subr.mxu0 0.0
      %821 = vmatpush1.msra.mxu0 0.0
      %822 = vmatprep.subr.mxu0 0.0
      %823 = vmatpush1.msra.mxu0 0.0
      %824 = vmatprep.subr.mxu0 0.0
      %825 = vmatpush1.msra.mxu0 0.0
      %826 = vmatprep.subr.mxu0 0.0
      %827 = vmatpush1.msra.mxu0 0.0
      %828 = vmatprep.subr.mxu0 0.0
      %829 = vmatpush1.msra.mxu0 0.0
      %830 = vmatprep.subr.mxu0 0.0
      %831 = vmatpush1.msra.mxu0 0.0
      %832 = vmatprep.subr.mxu0 0.0
      %833 = vmatpush1.msra.mxu0 0.0
      %834 = vmatprep.subr.mxu0 0.0
      %835 = vmatpush1.msra.mxu0 0.0
      %836 = vmatprep.subr.mxu0 0.0
      %837 = vmatpush1.msra.mxu0 0.0
      %838 = vmatprep.subr.mxu0 0.0
      %839 = vmatpush1.msra.mxu0 0.0
      %840 = vmatprep.subr.mxu0 0.0
      %841 = vmatpush1.msra.mxu0 0.0
      %842 = vmatprep.subr.mxu0 0.0
      %843 = vmatpush1.msra.mxu0 0.0
      %844 = vmatprep.subr.mxu0 0.0
      %845 = vmatpush1.msra.mxu0 0.0
      %846 = vmatprep.subr.mxu0 0.0
      %847 = vmatpush1.msra.mxu0 0.0
      %848 = vmatprep.mubr.f32.mxu0 0.0
      %849 = vmatmul.mubr.f32.gmra.mrb[0].mxu0 %v782
      %v850 = vpop.f32.mrb[0].mxu0
      %v851 = vadd.f32 %v779, %v850
      %v852 = vpop.f32.mrb[0].mxu0
      %v853 = vadd.f32 %v779, %v852
      %854 = vdwg.mxu0
      %855 = vst [vmem:[%s587] sm:$0xff] %v851
      %856 = vst [vmem:[%s587 + $0x8] sm:$0xff] %v853
      %s857 = smul.u32 2, %s29
      %p858 = scmp.lt.s32.totalorder %s28, 1
      %s859 = scalar_select %p858, %s28, 1
      %p860 = scmp.lt.s32.totalorder %s857, 1
      %s861 = scalar_select %p860, %s857, 1
      %s862 = smul.addr %s859, 2
      %s863 = sadd.s32 %s861, %s862
      %s864 = smul.addr %s863, 8
      %s865 = scalar_lea.vmem %s10, %s864
      %s866 = smul.u32 2, %s29
      %p867 = scmp.lt.s32.totalorder %s28, 1
      %s868 = scalar_select %p867, %s28, 1
      %p869 = scmp.lt.s32.totalorder %s866, 1
      %s870 = scalar_select %p869, %s866, 1
      %s871 = smul.addr %s868, 2
      %s872 = sadd.s32 %s870, %s871
      %s873 = smul.addr %s872, 8
      %s874 = scalar_lea.vmem %s11, %s873
      %s875 = smul.u32 2, %s29
      %p876 = scmp.lt.s32.totalorder %s28, 1
      %s877 = scalar_select %p876, %s28, 1
      %p878 = scmp.lt.s32.totalorder %s875, 1
      %s879 = scalar_select %p878, %s875, 1
      %s880 = smul.addr %s877, 2
      %s881 = sadd.s32 %s879, %s880
      %s882 = smul.addr %s881, 8
      %s883 = scalar_lea.vmem %s12, %s882
      // Predicated region
      $region61: #{improved_fft_kernel_forward.8} parent=59 // pred_check
        %p884 = pneg %p292
      $region62: #{improved_fft_kernel_forward.8} parent=59 // pred_check_branch
        %886 = sbr.rel (%p884) target = $region64
      $region63: #{improved_fft_kernel_forward.8} parent=59 // pred_region
        %s887 = smul.u32 2, %s29
      $region64: #{improved_fft_kernel_forward.8} parent=59 // pred_fallthru
        _
      // Predicated region
      $region65: #{improved_fft_kernel_forward.8} parent=59 // pred_check
        %p888 = pneg %p320
      $region66: #{improved_fft_kernel_forward.8} parent=59 // pred_check_branch
        %890 = sbr.rel (%p888) target = $region68
      $region67: #{improved_fft_kernel_forward.8} parent=59 // pred_region
        %s891 = smul.u32 2, %s29
      $region68: #{improved_fft_kernel_forward.8} parent=59 // pred_fallthru
        _
      // Predicated region
      $region69: #{improved_fft_kernel_forward.8} parent=59 // pred_check
        %p892 = pneg %p348
      $region70: #{improved_fft_kernel_forward.8} parent=59 // pred_check_branch
        %894 = sbr.rel (%p892) target = $region72
      $region71: #{improved_fft_kernel_forward.8} parent=59 // pred_region
        %s895 = smul.u32 2, %s29
      $region72: #{improved_fft_kernel_forward.8} parent=59 // pred_fallthru
        _
    $region60: #{improved_fft_kernel_forward.8} parent=5 // pred_fallthru
      _
    %p896 = scmp.le.s32.totalorder 2, %s19
    // Predicated region
    $region73: #{improved_fft_kernel_forward.8} parent=5 // pred_check
      %p897 = pneg %p896
    $region74: #{improved_fft_kernel_forward.8} parent=5 // pred_check_branch
      %899 = sbr.rel (%p897) target = $region76
    $region75: #{improved_fft_kernel_forward.8} parent=5 // pred_region
      %s900 = ssub.s32 %s19, 2
      // Predicated region
      $region77: #{improved_fft_kernel_forward.8} parent=75 // pred_check
        %p901 = pneg %p298
      $region78: #{improved_fft_kernel_forward.8} parent=75 // pred_check_branch
        %903 = sbr.rel (%p901) target = $region80
      $region79: #{improved_fft_kernel_forward.8} parent=75 // pred_region
        %s904 = smul.u32 2, %s31
        %p905 = scmp.lt.s32.totalorder %s30, 1
        %s906 = scalar_select %p905, %s30, 1
        %p907 = scmp.lt.s32.totalorder %s904, 1
        %s908 = scalar_select %p907, %s904, 1
        %s909 = smul.addr %s906, 2
        %s910 = sadd.s32 %s908, %s909
        %s911 = smul.addr %s910, 8
        %s912 = scalar_lea.vmem %s10, %s911
      $region80: #{improved_fft_kernel_forward.8} parent=75 // pred_fallthru
        _
      // Predicated region
      $region81: #{improved_fft_kernel_forward.8} parent=75 // pred_check
        %p913 = pneg %p326
      $region82: #{improved_fft_kernel_forward.8} parent=75 // pred_check_branch
        %915 = sbr.rel (%p913) target = $region84
      $region83: #{improved_fft_kernel_forward.8} parent=75 // pred_region
        %s916 = smul.u32 2, %s31
        %p917 = scmp.lt.s32.totalorder %s30, 1
        %s918 = scalar_select %p917, %s30, 1
        %p919 = scmp.lt.s32.totalorder %s916, 1
        %s920 = scalar_select %p919, %s916, 1
        %s921 = smul.addr %s918, 2
        %s922 = sadd.s32 %s920, %s921
        %s923 = smul.addr %s922, 8
        %s924 = scalar_lea.vmem %s11, %s923
      $region84: #{improved_fft_kernel_forward.8} parent=75 // pred_fallthru
        _
      // Predicated region
      $region85: #{improved_fft_kernel_forward.8} parent=75 // pred_check
        %p925 = pneg %p354
      $region86: #{improved_fft_kernel_forward.8} parent=75 // pred_check_branch
        %927 = sbr.rel (%p925) target = $region88
      $region87: #{improved_fft_kernel_forward.8} parent=75 // pred_region
        %s928 = smul.u32 2, %s31
        %p929 = scmp.lt.s32.totalorder %s30, 1
        %s930 = scalar_select %p929, %s30, 1
        %p931 = scmp.lt.s32.totalorder %s928, 1
        %s932 = scalar_select %p931, %s928, 1
        %s933 = smul.addr %s930, 2
        %s934 = sadd.s32 %s932, %s933
        %s935 = smul.addr %s934, 8
        %s936 = scalar_lea.vmem %s12, %s935
      $region88: #{improved_fft_kernel_forward.8} parent=75 // pred_fallthru
        _
    $region76: #{improved_fft_kernel_forward.8} parent=5 // pred_fallthru
      _
  $region6: #{improved_fft_kernel_forward.8} parent=0 // loop_footer
    %s23 = sadd.s32 1, %s19
  $region7: #{improved_fft_kernel_forward.8} parent=0 // loop_footer_branch
    %18 = sbr.rel target = $region3
  $region8: #{improved_fft_kernel_forward.8} parent=0 // loop_exit
    _

// kernel: improved_fft_kernel_forward.9
$region0: #{improved_fft_kernel_forward.9}
  #allocation0 [shape = 'u32[]', space=smem, size = 0x4, offset = 0x4, fixed_abs, tag = 'smem constant byte address 0x4 - core index']
  #allocation1 [shape = 'u32[144,128]{1,0:T(1,128)}', space=vmem, size = 0x12000, scoped, tag = 'internal scratch']
  %s0 = inlined_call_operand.vmem [shape: f32[8,8], index: 0, kind: input, shape index: {}]
  %s1 = inlined_call_operand.vmem [shape: f32[8,1], index: 1, kind: input, shape index: {}]
  %s2 = inlined_call_operand.vmem [shape: f32[8,1], index: 2, kind: input, shape index: {}]
  %s3 = inlined_call_operand.vmem [shape: f32[8,1], index: 3, kind: input, shape index: {}]
  %s4 = inlined_call_operand.vmem [shape: f32[8,1], index: 4, kind: input, shape index: {}]
  %s5 = inlined_call_operand.vmem [shape: f32[8,1], index: 5, kind: input, shape index: {}]
  %s6 = inlined_call_operand.vmem [shape: f32[16,256], index: 6, kind: input, shape index: {}]
  %s7 = inlined_call_operand.vmem [shape: f32[16,256], index: 7, kind: input, shape index: {}]
  %s8 = inlined_call_operand.vmem [shape: f32[16,256], index: 8, kind: input, shape index: {}]
  %s9 = inlined_call_operand.vmem [shape: f32[16,256], index: 9, kind: input, shape index: {}]
  %s10 = inlined_call_operand.vmem [shape: f32[16,256], index: 10, kind: input, shape index: {}]
  %s11 = inlined_call_operand.vmem [shape: f32[16,256], index: 11, kind: output, shape index: {}]
  %s12 = sld [smem:[#allocation0]]
  $region77: #{improved_fft_kernel_forward.9} parent=0
    _
  %s14 = ssub.s32 1, %s12
  %s15 = scalar_select 0, %s14, %s12
  loop: start=0, step=1, limit=4
  $region2: #{improved_fft_kernel_forward.9} parent=0 // loop_pre_header
    _
  $region3: #{improved_fft_kernel_forward.9} parent=0 // loop_header
    %s17 = sphi 0, %s21
    %p18 = scmp.ge.s32.totalorder %s17, 4
    %s24 = sphi 0, %s36
    %s25 = sphi 0, %s32
    %s26 = sphi 0, %s24
    %s27 = sphi 0, %s25
    %s28 = sphi 0, %s26
    %s29 = sphi 0, %s27
    %s37 = sphi 0, %s37
    %s39 = sphi 0, %s37
    %s40 = sphi 0, %s39
    %s54 = sphi 0, %s40
    %s58 = sphi 0, %s58
    %s60 = sphi 0, %s58
    %s61 = sphi 0, %s60
    %s75 = sphi 0, %s61
    %s79 = sphi 0, %s79
    %s81 = sphi 0, %s79
    %s82 = sphi 0, %s81
    %s96 = sphi 0, %s82
    %s100 = sphi 0, %s100
    %s102 = sphi 0, %s100
    %s103 = sphi 0, %s102
    %s117 = sphi 0, %s103
    %s121 = sphi 0, %s121
    %s123 = sphi 0, %s121
    %s124 = sphi 0, %s123
    %s138 = sphi 0, %s124
    %s142 = sphi 0, %s142
    %s144 = sphi 0, %s142
    %s145 = sphi 0, %s144
    %s159 = sphi 0, %s145
    %s167 = sphi 0, %s169
    %s170 = sphi 0, %s167
    %s171 = sphi 0, %s170
    %s187 = sphi 0, %s171
    %s195 = sphi 0, %s197
    %s198 = sphi 0, %s195
    %s199 = sphi 0, %s198
    %s215 = sphi 0, %s199
    %s223 = sphi 0, %s225
    %s226 = sphi 0, %s223
    %s227 = sphi 0, %s226
    %s243 = sphi 0, %s227
    %s251 = sphi 0, %s253
    %s254 = sphi 0, %s251
    %s255 = sphi 0, %s254
    %s271 = sphi 0, %s255
    %s279 = sphi 0, %s281
    %s282 = sphi 0, %s279
    %s283 = sphi 0, %s282
    %s299 = sphi 0, %s283
    %s307 = sphi 0, %s309
    %s310 = sphi 0, %s307
    %s311 = sphi 0, %s310
    %s327 = sphi 0, %s311
  $region4: #{improved_fft_kernel_forward.9} parent=0 // loop_header_branch
    %20 = sbr.rel (%p18) target = $region8
  $region5: #{improved_fft_kernel_forward.9} parent=0 // loop_body
    %s22 = ssub.s32 %s17, 1
    %s23 = ssub.s32 %s17, 2
    %s30 = sadd.s32 1, %s25
    %p31 = scmp.ge.s32.totalorder %s30, 1
    %s32 = scalar_select %p31, 0, %s30
    %s33 = sadd.s32 1, %s24
    %s34 = scalar_select %p31, %s33, %s24
    %p35 = scmp.ge.s32.totalorder %s34, 2
    %s36 = scalar_select %p35, 0, %s34
    %s38 = sadd.s32 %s37, 1
    %p41 = scmp.eq.s32.totalorder %s17, 1
    %p42 = scmp.ne.s32.totalorder %s37, %s39
    %p43 = scmp.eq.s32.totalorder %s17, 0
    %p44 = por %p42, %p43
    %p45 = scmp.ne.s32.totalorder %s37, %s39
    %p46 = scmp.eq.s32.totalorder %s22, 1
    %p47 = por %p45, %p46
    %p48 = scmp.ne.s32.totalorder %s39, %s40
    %p49 = scmp.eq.s32.totalorder %s22, 0
    %p50 = por %p48, %p49
    %p51 = scmp.ne.s32.totalorder %s39, %s40
    %p52 = scmp.eq.s32.totalorder %s23, 1
    %p53 = por %p51, %p52
    %p55 = scmp.ne.s32.totalorder %s40, %s54
    %p56 = scmp.eq.s32.totalorder %s23, 0
    %p57 = por %p55, %p56
    %s59 = sadd.s32 %s58, 1
    %p62 = scmp.eq.s32.totalorder %s17, 1
    %p63 = scmp.ne.s32.totalorder %s58, %s60
    %p64 = scmp.eq.s32.totalorder %s17, 0
    %p65 = por %p63, %p64
    %p66 = scmp.ne.s32.totalorder %s58, %s60
    %p67 = scmp.eq.s32.totalorder %s22, 1
    %p68 = por %p66, %p67
    %p69 = scmp.ne.s32.totalorder %s60, %s61
    %p70 = scmp.eq.s32.totalorder %s22, 0
    %p71 = por %p69, %p70
    %p72 = scmp.ne.s32.totalorder %s60, %s61
    %p73 = scmp.eq.s32.totalorder %s23, 1
    %p74 = por %p72, %p73
    %p76 = scmp.ne.s32.totalorder %s61, %s75
    %p77 = scmp.eq.s32.totalorder %s23, 0
    %p78 = por %p76, %p77
    %s80 = sadd.s32 %s79, 1
    %p83 = scmp.eq.s32.totalorder %s17, 1
    %p84 = scmp.ne.s32.totalorder %s79, %s81
    %p85 = scmp.eq.s32.totalorder %s17, 0
    %p86 = por %p84, %p85
    %p87 = scmp.ne.s32.totalorder %s79, %s81
    %p88 = scmp.eq.s32.totalorder %s22, 1
    %p89 = por %p87, %p88
    %p90 = scmp.ne.s32.totalorder %s81, %s82
    %p91 = scmp.eq.s32.totalorder %s22, 0
    %p92 = por %p90, %p91
    %p93 = scmp.ne.s32.totalorder %s81, %s82
    %p94 = scmp.eq.s32.totalorder %s23, 1
    %p95 = por %p93, %p94
    %p97 = scmp.ne.s32.totalorder %s82, %s96
    %p98 = scmp.eq.s32.totalorder %s23, 0
    %p99 = por %p97, %p98
    %s101 = sadd.s32 %s100, 1
    %p104 = scmp.eq.s32.totalorder %s17, 1
    %p105 = scmp.ne.s32.totalorder %s100, %s102
    %p106 = scmp.eq.s32.totalorder %s17, 0
    %p107 = por %p105, %p106
    %p108 = scmp.ne.s32.totalorder %s100, %s102
    %p109 = scmp.eq.s32.totalorder %s22, 1
    %p110 = por %p108, %p109
    %p111 = scmp.ne.s32.totalorder %s102, %s103
    %p112 = scmp.eq.s32.totalorder %s22, 0
    %p113 = por %p111, %p112
    %p114 = scmp.ne.s32.totalorder %s102, %s103
    %p115 = scmp.eq.s32.totalorder %s23, 1
    %p116 = por %p114, %p115
    %p118 = scmp.ne.s32.totalorder %s103, %s117
    %p119 = scmp.eq.s32.totalorder %s23, 0
    %p120 = por %p118, %p119
    %s122 = sadd.s32 %s121, 1
    %p125 = scmp.eq.s32.totalorder %s17, 1
    %p126 = scmp.ne.s32.totalorder %s121, %s123
    %p127 = scmp.eq.s32.totalorder %s17, 0
    %p128 = por %p126, %p127
    %p129 = scmp.ne.s32.totalorder %s121, %s123
    %p130 = scmp.eq.s32.totalorder %s22, 1
    %p131 = por %p129, %p130
    %p132 = scmp.ne.s32.totalorder %s123, %s124
    %p133 = scmp.eq.s32.totalorder %s22, 0
    %p134 = por %p132, %p133
    %p135 = scmp.ne.s32.totalorder %s123, %s124
    %p136 = scmp.eq.s32.totalorder %s23, 1
    %p137 = por %p135, %p136
    %p139 = scmp.ne.s32.totalorder %s124, %s138
    %p140 = scmp.eq.s32.totalorder %s23, 0
    %p141 = por %p139, %p140
    %s143 = sadd.s32 %s142, 1
    %p146 = scmp.eq.s32.totalorder %s17, 1
    %p147 = scmp.ne.s32.totalorder %s142, %s144
    %p148 = scmp.eq.s32.totalorder %s17, 0
    %p149 = por %p147, %p148
    %p150 = scmp.ne.s32.totalorder %s142, %s144
    %p151 = scmp.eq.s32.totalorder %s22, 1
    %p152 = por %p150, %p151
    %p153 = scmp.ne.s32.totalorder %s144, %s145
    %p154 = scmp.eq.s32.totalorder %s22, 0
    %p155 = por %p153, %p154
    %p156 = scmp.ne.s32.totalorder %s144, %s145
    %p157 = scmp.eq.s32.totalorder %s23, 1
    %p158 = por %p156, %p157
    %p160 = scmp.ne.s32.totalorder %s145, %s159
    %p161 = scmp.eq.s32.totalorder %s23, 0
    %p162 = por %p160, %p161
    %s163 = ssub.s32 %s24, %s36
    %s164 = ssub.s32 %s25, %s32
    %s165 = sor.u32 %s163, %s164
    %p166 = scmp.eq.s32.totalorder %s165, 0
    %s168 = sadd.s32 %s167, 1
    %s169 = scalar_select %p166, %s167, %s168
    %p172 = pneg %p166
    %p173 = scmp.eq.s32.totalorder %s17, 1
    %p174 = por %p172, %p173
    %p175 = scmp.ne.s32.totalorder %s167, %s170
    %p176 = scmp.eq.s32.totalorder %s17, 0
    %p177 = por %p175, %p176
    %p178 = scmp.ne.s32.totalorder %s167, %s170
    %p179 = scmp.eq.s32.totalorder %s22, 1
    %p180 = por %p178, %p179
    %p181 = scmp.ne.s32.totalorder %s170, %s171
    %p182 = scmp.eq.s32.totalorder %s22, 0
    %p183 = por %p181, %p182
    %p184 = scmp.ne.s32.totalorder %s170, %s171
    %p185 = scmp.eq.s32.totalorder %s23, 1
    %p186 = por %p184, %p185
    %p188 = scmp.ne.s32.totalorder %s171, %s187
    %p189 = scmp.eq.s32.totalorder %s23, 0
    %p190 = por %p188, %p189
    %s191 = ssub.s32 %s24, %s36
    %s192 = ssub.s32 %s25, %s32
    %s193 = sor.u32 %s191, %s192
    %p194 = scmp.eq.s32.totalorder %s193, 0
    %s196 = sadd.s32 %s195, 1
    %s197 = scalar_select %p194, %s195, %s196
    %p200 = pneg %p194
    %p201 = scmp.eq.s32.totalorder %s17, 1
    %p202 = por %p200, %p201
    %p203 = scmp.ne.s32.totalorder %s195, %s198
    %p204 = scmp.eq.s32.totalorder %s17, 0
    %p205 = por %p203, %p204
    %p206 = scmp.ne.s32.totalorder %s195, %s198
    %p207 = scmp.eq.s32.totalorder %s22, 1
    %p208 = por %p206, %p207
    %p209 = scmp.ne.s32.totalorder %s198, %s199
    %p210 = scmp.eq.s32.totalorder %s22, 0
    %p211 = por %p209, %p210
    %p212 = scmp.ne.s32.totalorder %s198, %s199
    %p213 = scmp.eq.s32.totalorder %s23, 1
    %p214 = por %p212, %p213
    %p216 = scmp.ne.s32.totalorder %s199, %s215
    %p217 = scmp.eq.s32.totalorder %s23, 0
    %p218 = por %p216, %p217
    %s219 = ssub.s32 %s24, %s36
    %s220 = ssub.s32 %s25, %s32
    %s221 = sor.u32 %s219, %s220
    %p222 = scmp.eq.s32.totalorder %s221, 0
    %s224 = sadd.s32 %s223, 1
    %s225 = scalar_select %p222, %s223, %s224
    %p228 = pneg %p222
    %p229 = scmp.eq.s32.totalorder %s17, 1
    %p230 = por %p228, %p229
    %p231 = scmp.ne.s32.totalorder %s223, %s226
    %p232 = scmp.eq.s32.totalorder %s17, 0
    %p233 = por %p231, %p232
    %p234 = scmp.ne.s32.totalorder %s223, %s226
    %p235 = scmp.eq.s32.totalorder %s22, 1
    %p236 = por %p234, %p235
    %p237 = scmp.ne.s32.totalorder %s226, %s227
    %p238 = scmp.eq.s32.totalorder %s22, 0
    %p239 = por %p237, %p238
    %p240 = scmp.ne.s32.totalorder %s226, %s227
    %p241 = scmp.eq.s32.totalorder %s23, 1
    %p242 = por %p240, %p241
    %p244 = scmp.ne.s32.totalorder %s227, %s243
    %p245 = scmp.eq.s32.totalorder %s23, 0
    %p246 = por %p244, %p245
    %s247 = ssub.s32 %s24, %s36
    %s248 = ssub.s32 %s25, %s32
    %s249 = sor.u32 %s247, %s248
    %p250 = scmp.eq.s32.totalorder %s249, 0
    %s252 = sadd.s32 %s251, 1
    %s253 = scalar_select %p250, %s251, %s252
    %p256 = pneg %p250
    %p257 = scmp.eq.s32.totalorder %s17, 1
    %p258 = por %p256, %p257
    %p259 = scmp.ne.s32.totalorder %s251, %s254
    %p260 = scmp.eq.s32.totalorder %s17, 0
    %p261 = por %p259, %p260
    %p262 = scmp.ne.s32.totalorder %s251, %s254
    %p263 = scmp.eq.s32.totalorder %s22, 1
    %p264 = por %p262, %p263
    %p265 = scmp.ne.s32.totalorder %s254, %s255
    %p266 = scmp.eq.s32.totalorder %s22, 0
    %p267 = por %p265, %p266
    %p268 = scmp.ne.s32.totalorder %s254, %s255
    %p269 = scmp.eq.s32.totalorder %s23, 1
    %p270 = por %p268, %p269
    %p272 = scmp.ne.s32.totalorder %s255, %s271
    %p273 = scmp.eq.s32.totalorder %s23, 0
    %p274 = por %p272, %p273
    %s275 = ssub.s32 %s24, %s36
    %s276 = ssub.s32 %s25, %s32
    %s277 = sor.u32 %s275, %s276
    %p278 = scmp.eq.s32.totalorder %s277, 0
    %s280 = sadd.s32 %s279, 1
    %s281 = scalar_select %p278, %s279, %s280
    %p284 = pneg %p278
    %p285 = scmp.eq.s32.totalorder %s17, 1
    %p286 = por %p284, %p285
    %p287 = scmp.ne.s32.totalorder %s279, %s282
    %p288 = scmp.eq.s32.totalorder %s17, 0
    %p289 = por %p287, %p288
    %p290 = scmp.ne.s32.totalorder %s279, %s282
    %p291 = scmp.eq.s32.totalorder %s22, 1
    %p292 = por %p290, %p291
    %p293 = scmp.ne.s32.totalorder %s282, %s283
    %p294 = scmp.eq.s32.totalorder %s22, 0
    %p295 = por %p293, %p294
    %p296 = scmp.ne.s32.totalorder %s282, %s283
    %p297 = scmp.eq.s32.totalorder %s23, 1
    %p298 = por %p296, %p297
    %p300 = scmp.ne.s32.totalorder %s283, %s299
    %p301 = scmp.eq.s32.totalorder %s23, 0
    %p302 = por %p300, %p301
    %s303 = ssub.s32 %s24, %s36
    %s304 = ssub.s32 %s25, %s32
    %s305 = sor.u32 %s303, %s304
    %p306 = scmp.eq.s32.totalorder %s305, 0
    %s308 = sadd.s32 %s307, 1
    %s309 = scalar_select %p306, %s307, %s308
    %p312 = pneg %p306
    %p313 = scmp.eq.s32.totalorder %s17, 1
    %p314 = por %p312, %p313
    %p315 = scmp.ne.s32.totalorder %s307, %s310
    %p316 = scmp.eq.s32.totalorder %s17, 0
    %p317 = por %p315, %p316
    %p318 = scmp.ne.s32.totalorder %s307, %s310
    %p319 = scmp.eq.s32.totalorder %s22, 1
    %p320 = por %p318, %p319
    %p321 = scmp.ne.s32.totalorder %s310, %s311
    %p322 = scmp.eq.s32.totalorder %s22, 0
    %p323 = por %p321, %p322
    %p324 = scmp.ne.s32.totalorder %s310, %s311
    %p325 = scmp.eq.s32.totalorder %s23, 1
    %p326 = por %p324, %p325
    %p328 = scmp.ne.s32.totalorder %s311, %s327
    %p329 = scmp.eq.s32.totalorder %s23, 0
    %p330 = por %p328, %p329
    %p331 = scmp.le.s32.totalorder 1, %s17
    %p332 = scmp.lt.s32.totalorder %s17, 3
    %p333 = pnand %p331, %p332
    %p334 = pneg %p333
    // Predicated region
    $region9: #{improved_fft_kernel_forward.9} parent=5 // pred_check
      _
    $region10: #{improved_fft_kernel_forward.9} parent=5 // pred_check_branch
      %336 = sbr.rel (%p333) target = $region12
    $region11: #{improved_fft_kernel_forward.9} parent=5 // pred_region
      %s337 = ssub.s32 %s17, 1
      // Predicated region
      $region13: #{improved_fft_kernel_forward.9} parent=11 // pred_check
        %p338 = pneg %p50
      $region14: #{improved_fft_kernel_forward.9} parent=11 // pred_check_branch
        %340 = sbr.rel (%p338) target = $region16
      $region15: #{improved_fft_kernel_forward.9} parent=11 // pred_region
        _
      $region16: #{improved_fft_kernel_forward.9} parent=11 // pred_fallthru
        _
      // Predicated region
      $region17: #{improved_fft_kernel_forward.9} parent=11 // pred_check
        %p341 = pneg %p71
      $region18: #{improved_fft_kernel_forward.9} parent=11 // pred_check_branch
        %343 = sbr.rel (%p341) target = $region20
      $region19: #{improved_fft_kernel_forward.9} parent=11 // pred_region
        _
      $region20: #{improved_fft_kernel_forward.9} parent=11 // pred_fallthru
        _
      // Predicated region
      $region21: #{improved_fft_kernel_forward.9} parent=11 // pred_check
        %p344 = pneg %p92
      $region22: #{improved_fft_kernel_forward.9} parent=11 // pred_check_branch
        %346 = sbr.rel (%p344) target = $region24
      $region23: #{improved_fft_kernel_forward.9} parent=11 // pred_region
        _
      $region24: #{improved_fft_kernel_forward.9} parent=11 // pred_fallthru
        _
      // Predicated region
      $region25: #{improved_fft_kernel_forward.9} parent=11 // pred_check
        %p347 = pneg %p113
      $region26: #{improved_fft_kernel_forward.9} parent=11 // pred_check_branch
        %349 = sbr.rel (%p347) target = $region28
      $region27: #{improved_fft_kernel_forward.9} parent=11 // pred_region
        _
      $region28: #{improved_fft_kernel_forward.9} parent=11 // pred_fallthru
        _
      // Predicated region
      $region29: #{improved_fft_kernel_forward.9} parent=11 // pred_check
        %p350 = pneg %p134
      $region30: #{improved_fft_kernel_forward.9} parent=11 // pred_check_branch
        %352 = sbr.rel (%p350) target = $region32
      $region31: #{improved_fft_kernel_forward.9} parent=11 // pred_region
        _
      $region32: #{improved_fft_kernel_forward.9} parent=11 // pred_fallthru
        _
      // Predicated region
      $region33: #{improved_fft_kernel_forward.9} parent=11 // pred_check
        %p353 = pneg %p155
      $region34: #{improved_fft_kernel_forward.9} parent=11 // pred_check_branch
        %355 = sbr.rel (%p353) target = $region36
      $region35: #{improved_fft_kernel_forward.9} parent=11 // pred_region
        _
      $region36: #{improved_fft_kernel_forward.9} parent=11 // pred_fallthru
        _
    $region12: #{improved_fft_kernel_forward.9} parent=5 // pred_fallthru
      _
    %p356 = scmp.lt.s32.totalorder %s17, 2
    // Predicated region
    $region37: #{improved_fft_kernel_forward.9} parent=5 // pred_check
      %p357 = pneg %p356
    $region38: #{improved_fft_kernel_forward.9} parent=5 // pred_check_branch
      %359 = sbr.rel (%p357) target = $region40
    $region39: #{improved_fft_kernel_forward.9} parent=5 // pred_region
      // Predicated region
      $region41: #{improved_fft_kernel_forward.9} parent=39 // pred_check
        %p360 = pneg %p177
      $region42: #{improved_fft_kernel_forward.9} parent=39 // pred_check_branch
        %362 = sbr.rel (%p360) target = $region44
      $region43: #{improved_fft_kernel_forward.9} parent=39 // pred_region
        %s363 = smul.u32 2, %s25
        %p364 = scmp.lt.s32.totalorder %s24, 1
        %s365 = scalar_select %p364, %s24, 1
        %p366 = scmp.lt.s32.totalorder %s363, 1
        %s367 = scalar_select %p366, %s363, 1
        %s368 = smul.addr %s365, 2
        %s369 = sadd.s32 %s367, %s368
        %s370 = smul.addr %s369, 8
        %s371 = scalar_lea.vmem %s6, %s370
        %s372 = smul.u32 2, %s25
      $region44: #{improved_fft_kernel_forward.9} parent=39 // pred_fallthru
        _
      // Predicated region
      $region45: #{improved_fft_kernel_forward.9} parent=39 // pred_check
        %p373 = pneg %p205
      $region46: #{improved_fft_kernel_forward.9} parent=39 // pred_check_branch
        %375 = sbr.rel (%p373) target = $region48
      $region47: #{improved_fft_kernel_forward.9} parent=39 // pred_region
        %s376 = smul.u32 2, %s25
        %p377 = scmp.lt.s32.totalorder %s24, 1
        %s378 = scalar_select %p377, %s24, 1
        %p379 = scmp.lt.s32.totalorder %s376, 1
        %s380 = scalar_select %p379, %s376, 1
        %s381 = smul.addr %s378, 2
        %s382 = sadd.s32 %s380, %s381
        %s383 = smul.addr %s382, 8
        %s384 = scalar_lea.vmem %s7, %s383
        %s385 = smul.u32 2, %s25
      $region48: #{improved_fft_kernel_forward.9} parent=39 // pred_fallthru
        _
      // Predicated region
      $region49: #{improved_fft_kernel_forward.9} parent=39 // pred_check
        %p386 = pneg %p233
      $region50: #{improved_fft_kernel_forward.9} parent=39 // pred_check_branch
        %388 = sbr.rel (%p386) target = $region52
      $region51: #{improved_fft_kernel_forward.9} parent=39 // pred_region
        %s389 = smul.u32 2, %s25
        %p390 = scmp.lt.s32.totalorder %s24, 1
        %s391 = scalar_select %p390, %s24, 1
        %p392 = scmp.lt.s32.totalorder %s389, 1
        %s393 = scalar_select %p392, %s389, 1
        %s394 = smul.addr %s391, 2
        %s395 = sadd.s32 %s393, %s394
        %s396 = smul.addr %s395, 8
        %s397 = scalar_lea.vmem %s8, %s396
        %s398 = smul.u32 2, %s25
      $region52: #{improved_fft_kernel_forward.9} parent=39 // pred_fallthru
        _
      // Predicated region
      $region53: #{improved_fft_kernel_forward.9} parent=39 // pred_check
        %p399 = pneg %p261
      $region54: #{improved_fft_kernel_forward.9} parent=39 // pred_check_branch
        %401 = sbr.rel (%p399) target = $region56
      $region55: #{improved_fft_kernel_forward.9} parent=39 // pred_region
        %s402 = smul.u32 2, %s25
        %p403 = scmp.lt.s32.totalorder %s24, 1
        %s404 = scalar_select %p403, %s24, 1
        %p405 = scmp.lt.s32.totalorder %s402, 1
        %s406 = scalar_select %p405, %s402, 1
        %s407 = smul.addr %s404, 2
        %s408 = sadd.s32 %s406, %s407
        %s409 = smul.addr %s408, 8
        %s410 = scalar_lea.vmem %s9, %s409
        %s411 = smul.u32 2, %s25
      $region56: #{improved_fft_kernel_forward.9} parent=39 // pred_fallthru
        _
      // Predicated region
      $region57: #{improved_fft_kernel_forward.9} parent=39 // pred_check
        %p412 = pneg %p289
      $region58: #{improved_fft_kernel_forward.9} parent=39 // pred_check_branch
        %414 = sbr.rel (%p412) target = $region60
      $region59: #{improved_fft_kernel_forward.9} parent=39 // pred_region
        %s415 = smul.u32 2, %s25
        %p416 = scmp.lt.s32.totalorder %s24, 1
        %s417 = scalar_select %p416, %s24, 1
        %p418 = scmp.lt.s32.totalorder %s415, 1
        %s419 = scalar_select %p418, %s415, 1
        %s420 = smul.addr %s417, 2
        %s421 = sadd.s32 %s419, %s420
        %s422 = smul.addr %s421, 8
        %s423 = scalar_lea.vmem %s10, %s422
        %s424 = smul.u32 2, %s25
      $region60: #{improved_fft_kernel_forward.9} parent=39 // pred_fallthru
        _
    $region40: #{improved_fft_kernel_forward.9} parent=5 // pred_fallthru
      _
    %p425 = scmp.le.s32.totalorder 1, %s17
    %p426 = scmp.lt.s32.totalorder %s17, 3
    %p427 = pnand %p425, %p426
    %p428 = pneg %p427
    // Predicated region
    $region61: #{improved_fft_kernel_forward.9} parent=5 // pred_check
      _
    $region62: #{improved_fft_kernel_forward.9} parent=5 // pred_check_branch
      %430 = sbr.rel (%p427) target = $region64
    $region63: #{improved_fft_kernel_forward.9} parent=5 // pred_region
      %s431 = ssub.s32 %s17, 1
      %p432 = pneg %p50
      %p433 = pneg %p47
      %p434 = pneg %p71
      %p435 = pneg %p68
      %p436 = pneg %p92
      %p437 = pneg %p89
      %p438 = pneg %p113
      %p439 = pneg %p110
      %p440 = pneg %p134
      %p441 = pneg %p131
      %p442 = pneg %p155
      %p443 = pneg %p152
      %s444 = smul.u32 2, %s27
      %p445 = scmp.lt.s32.totalorder %s26, 1
      %s446 = scalar_select %p445, %s26, 1
      %p447 = scmp.lt.s32.totalorder %s444, 1
      %s448 = scalar_select %p447, %s444, 1
      %s449 = smul.addr %s446, 2
      %s450 = sadd.s32 %s448, %s449
      %s451 = smul.addr %s450, 8
      %s452 = scalar_lea.vmem %s6, %s451
      %p453 = pneg %p183
      %p454 = pneg %p180
      %s455 = smul.u32 2, %s27
      %p456 = scmp.lt.s32.totalorder %s26, 1
      %s457 = scalar_select %p456, %s26, 1
      %p458 = scmp.lt.s32.totalorder %s455, 1
      %s459 = scalar_select %p458, %s455, 1
      %s460 = smul.addr %s457, 2
      %s461 = sadd.s32 %s459, %s460
      %s462 = smul.addr %s461, 8
      %s463 = scalar_lea.vmem %s7, %s462
      %p464 = pneg %p211
      %p465 = pneg %p208
      %s466 = smul.u32 2, %s27
      %p467 = scmp.lt.s32.totalorder %s26, 1
      %s468 = scalar_select %p467, %s26, 1
      %p469 = scmp.lt.s32.totalorder %s466, 1
      %s470 = scalar_select %p469, %s466, 1
      %s471 = smul.addr %s468, 2
      %s472 = sadd.s32 %s470, %s471
      %s473 = smul.addr %s472, 8
      %s474 = scalar_lea.vmem %s8, %s473
      %p475 = pneg %p239
      %p476 = pneg %p236
      %s477 = smul.u32 2, %s27
      %p478 = scmp.lt.s32.totalorder %s26, 1
      %s479 = scalar_select %p478, %s26, 1
      %p480 = scmp.lt.s32.totalorder %s477, 1
      %s481 = scalar_select %p480, %s477, 1
      %s482 = smul.addr %s479, 2
      %s483 = sadd.s32 %s481, %s482
      %s484 = smul.addr %s483, 8
      %s485 = scalar_lea.vmem %s9, %s484
      %p486 = pneg %p267
      %p487 = pneg %p264
      %s488 = smul.u32 2, %s27
      %p489 = scmp.lt.s32.totalorder %s26, 1
      %s490 = scalar_select %p489, %s26, 1
      %p491 = scmp.lt.s32.totalorder %s488, 1
      %s492 = scalar_select %p491, %s488, 1
      %s493 = smul.addr %s490, 2
      %s494 = sadd.s32 %s492, %s493
      %s495 = smul.addr %s494, 8
      %s496 = scalar_lea.vmem %s10, %s495
      %p497 = pneg %p295
      %p498 = pneg %p292
      %p499 = pneg %p323
      %p500 = pneg %p320
      %s501 = smul.u32 2, %s27
      %p502 = scmp.lt.s32.totalorder %s26, 1
      %s503 = scalar_select %p502, %s26, 1
      %p504 = scmp.lt.s32.totalorder %s501, 1
      %s505 = scalar_select %p504, %s501, 1
      %s506 = smul.addr %s503, 2
      %s507 = sadd.s32 %s505, %s506
      %s508 = smul.addr %s507, 8
      %s509 = scalar_lea.vmem %s11, %s508
      %s510 = smul.u32 2, %s27
      %p511 = scmp.lt.s32.totalorder %s26, 1
      %s512 = scalar_select %p511, %s26, 1
      %p513 = scmp.lt.s32.totalorder %s510, 1
      %s514 = scalar_select %p513, %s510, 1
      %s515 = smul.addr %s512, 2
      %s516 = sadd.s32 %s514, %s515
      %s517 = smul.addr %s516, 8
      %s518 = scalar_lea.vmem %s6, %s517
      %s519 = smul.u32 2, %s27
      %s520 = smul.u32 2, %s27
      %p521 = scmp.lt.s32.totalorder %s26, 1
      %s522 = scalar_select %p521, %s26, 1
      %p523 = scmp.lt.s32.totalorder %s520, 1
      %s524 = scalar_select %p523, %s520, 1
      %s525 = smul.addr %s522, 2
      %s526 = sadd.s32 %s524, %s525
      %s527 = smul.addr %s526, 8
      %s528 = scalar_lea.vmem %s7, %s527
      %s529 = smul.u32 2, %s27
      %s530 = smul.u32 2, %s27
      %p531 = scmp.lt.s32.totalorder %s26, 1
      %s532 = scalar_select %p531, %s26, 1
      %p533 = scmp.lt.s32.totalorder %s530, 1
      %s534 = scalar_select %p533, %s530, 1
      %s535 = smul.addr %s532, 2
      %s536 = sadd.s32 %s534, %s535
      %s537 = smul.addr %s536, 8
      %s538 = scalar_lea.vmem %s8, %s537
      %s539 = smul.u32 2, %s27
      %s540 = smul.u32 2, %s27
      %p541 = scmp.lt.s32.totalorder %s26, 1
      %s542 = scalar_select %p541, %s26, 1
      %p543 = scmp.lt.s32.totalorder %s540, 1
      %s544 = scalar_select %p543, %s540, 1
      %s545 = smul.addr %s542, 2
      %s546 = sadd.s32 %s544, %s545
      %s547 = smul.addr %s546, 8
      %s548 = scalar_lea.vmem %s9, %s547
      %s549 = smul.u32 2, %s27
      %s550 = smul.u32 2, %s27
      %p551 = scmp.lt.s32.totalorder %s26, 1
      %s552 = scalar_select %p551, %s26, 1
      %p553 = scmp.lt.s32.totalorder %s550, 1
      %s554 = scalar_select %p553, %s550, 1
      %s555 = smul.addr %s552, 2
      %s556 = sadd.s32 %s554, %s555
      %s557 = smul.addr %s556, 8
      %s558 = scalar_lea.vmem %s10, %s557
      %s559 = smul.u32 2, %s27
      %s560 = smul.u32 2, %s27
      %p561 = scmp.lt.s32.totalorder %s26, 1
      %s562 = scalar_select %p561, %s26, 1
      %p563 = scmp.lt.s32.totalorder %s560, 1
      %s564 = scalar_select %p563, %s560, 1
      %s565 = smul.addr %s562, 2
      %s566 = sadd.s32 %s564, %s565
      %s567 = smul.addr %s566, 8
      %s568 = scalar_lea.vmem %s11, %s567
      %s569 = smul.u32 2, %s27
      %v570 = vld [vmem:[%s538] sm:$0xff]
      %v571 = vld [vmem:[%s538 + $0x8] sm:$0xff]
      %v572 = vld [vmem:[%s1] sm:$0xff]
      %574 = vset.pattern.permute.xlu0 0
      %575 = vperm.xlu0 %574, %v572
      %v576 = vpop.permute.xlu0 %575
      %v578 = vmul.f32 %v570, %v576
      %v579 = vmul.f32 %v571, %v576
      %v580 = vld [vmem:[%s2] sm:$0xff]
      %582 = vset.pattern.permute.xlu0 0
      %583 = vperm.xlu0 %582, %v580
      %v584 = vpop.permute.xlu0 %583
      %v586 = vadd.f32 %v578, %v584
      %v587 = vadd.f32 %v579, %v584
      %v588 = vld [vmem:[%s548] sm:$0xff]
      %v589 = vld [vmem:[%s548 + $0x8] sm:$0xff]
      %v590 = vld [vmem:[%s3] sm:$0xff]
      %592 = vset.pattern.permute.xlu0 0
      %593 = vperm.xlu0 %592, %v590
      %v594 = vpop.permute.xlu0 %593
      %v596 = vmul.f32 %v588, %v594
      %v597 = vmul.f32 %v589, %v594
      %v598 = vld [vmem:[%s558] sm:$0xff]
      %v599 = vld [vmem:[%s558 + $0x8] sm:$0xff]
      %v600 = vld [vmem:[%s4] sm:$0xff]
      %602 = vset.pattern.permute.xlu0 0
      %603 = vperm.xlu0 %602, %v600
      %v604 = vpop.permute.xlu0 %603
      %v606 = vmul.f32 %v598, %v604
      %v607 = vmul.f32 %v599, %v604
      %v608 = vadd.f32 %v596, %v606
      %v609 = vadd.f32 %v597, %v607
      %v610 = vld [vmem:[%s518] sm:$0xff]
      %v611 = vld [vmem:[%s518 + $0x8] sm:$0xff]
      %v612 = vld [vmem:[%s528] sm:$0xff]
      %v613 = vld [vmem:[%s528 + $0x8] sm:$0xff]
      %v614 = vadd.f32 %v610, %v612
      %v615 = vadd.f32 %v611, %v613
      %v616 = vadd.f32 %v614, %v586
      %v617 = vadd.f32 %v615, %v587
      %v618 = vadd.f32 %v616, %v608
      %v619 = vadd.f32 %v617, %v609
      %v620 = vmax.f32 %v618, 0.0
      %v621 = vmax.f32 %v619, 0.0
      %v622 = vld [vmem:[%s0] sm:$0xff]
      %v623 = vld [vmem:[%s5] sm:$0xff]
      %625 = vset.pattern.permute.xlu0 0
      %626 = vperm.xlu0 %625, %v623
      %v627 = vpop.permute.xlu0 %626
      %vm629 = vcmask 64512
      %v631 = vsel %vm629, %v622, 0
      %633 = vmatprep.subr.mxu0 %v621
      %634 = vmatpush1.msra.mxu0 %v620
      %635 = vmatprep.subr.mxu0 0.0
      %636 = vmatpush1.msra.mxu0 0.0
      %637 = vmatprep.subr.mxu0 0.0
      %638 = vmatpush1.msra.mxu0 0.0
      %639 = vmatprep.subr.mxu0 0.0
      %640 = vmatpush1.msra.mxu0 0.0
      %641 = vmatprep.subr.mxu0 0.0
      %642 = vmatpush1.msra.mxu0 0.0
      %643 = vmatprep.subr.mxu0 0.0
      %644 = vmatpush1.msra.mxu0 0.0
      %645 = vmatprep.subr.mxu0 0.0
      %646 = vmatpush1.msra.mxu0 0.0
      %647 = vmatprep.subr.mxu0 0.0
      %648 = vmatpush1.msra.mxu0 0.0
      %649 = vmatprep.subr.mxu0 0.0
      %650 = vmatpush1.msra.mxu0 0.0
      %651 = vmatprep.subr.mxu0 0.0
      %652 = vmatpush1.msra.mxu0 0.0
      %653 = vmatprep.subr.mxu0 0.0
      %654 = vmatpush1.msra.mxu0 0.0
      %655 = vmatprep.subr.mxu0 0.0
      %656 = vmatpush1.msra.mxu0 0.0
      %657 = vmatprep.subr.mxu0 0.0
      %658 = vmatpush1.msra.mxu0 0.0
      %659 = vmatprep.subr.mxu0 0.0
      %660 = vmatpush1.msra.mxu0 0.0
      %661 = vmatprep.subr.mxu0 0.0
      %662 = vmatpush1.msra.mxu0 0.0
      %663 = vmatprep.subr.mxu0 0.0
      %664 = vmatpush1.msra.mxu0 0.0
      %665 = vmatprep.subr.mxu0 0.0
      %666 = vmatpush1.msra.mxu0 0.0
      %667 = vmatprep.subr.mxu0 0.0
      %668 = vmatpush1.msra.mxu0 0.0
      %669 = vmatprep.subr.mxu0 0.0
      %670 = vmatpush1.msra.mxu0 0.0
      %671 = vmatprep.subr.mxu0 0.0
      %672 = vmatpush1.msra.mxu0 0.0
      %673 = vmatprep.subr.mxu0 0.0
      %674 = vmatpush1.msra.mxu0 0.0
      %675 = vmatprep.subr.mxu0 0.0
      %676 = vmatpush1.msra.mxu0 0.0
      %677 = vmatprep.subr.mxu0 0.0
      %678 = vmatpush1.msra.mxu0 0.0
      %679 = vmatprep.subr.mxu0 0.0
      %680 = vmatpush1.msra.mxu0 0.0
      %681 = vmatprep.subr.mxu0 0.0
      %682 = vmatpush1.msra.mxu0 0.0
      %683 = vmatprep.subr.mxu0 0.0
      %684 = vmatpush1.msra.mxu0 0.0
      %685 = vmatprep.subr.mxu0 0.0
      %686 = vmatpush1.msra.mxu0 0.0
      %687 = vmatprep.subr.mxu0 0.0
      %688 = vmatpush1.msra.mxu0 0.0
      %689 = vmatprep.subr.mxu0 0.0
      %690 = vmatpush1.msra.mxu0 0.0
      %691 = vmatprep.subr.mxu0 0.0
      %692 = vmatpush1.msra.mxu0 0.0
      %693 = vmatprep.subr.mxu0 0.0
      %694 = vmatpush1.msra.mxu0 0.0
      %695 = vmatprep.subr.mxu0 0.0
      %696 = vmatpush1.msra.mxu0 0.0
      %697 = vmatprep.mubr.f32.mxu0 0.0
      %698 = vmatmul.mubr.f32.gmra.mrb[0].mxu0 %v631
      %v699 = vpop.f32.mrb[0].mxu0
      %v700 = vadd.f32 %v627, %v699
      %v701 = vpop.f32.mrb[0].mxu0
      %v702 = vadd.f32 %v627, %v701
      %703 = vdwg.mxu0
      %704 = vst [vmem:[%s568] sm:$0xff] %v700
      %705 = vst [vmem:[%s568 + $0x8] sm:$0xff] %v702
      %s706 = smul.u32 2, %s27
      %p707 = scmp.lt.s32.totalorder %s26, 1
      %s708 = scalar_select %p707, %s26, 1
      %p709 = scmp.lt.s32.totalorder %s706, 1
      %s710 = scalar_select %p709, %s706, 1
      %s711 = smul.addr %s708, 2
      %s712 = sadd.s32 %s710, %s711
      %s713 = smul.addr %s712, 8
      %s714 = scalar_lea.vmem %s11, %s713
      // Predicated region
      $region65: #{improved_fft_kernel_forward.9} parent=63 // pred_check
        %p715 = pneg %p320
      $region66: #{improved_fft_kernel_forward.9} parent=63 // pred_check_branch
        %717 = sbr.rel (%p715) target = $region68
      $region67: #{improved_fft_kernel_forward.9} parent=63 // pred_region
        %s718 = smul.u32 2, %s27
      $region68: #{improved_fft_kernel_forward.9} parent=63 // pred_fallthru
        _
    $region64: #{improved_fft_kernel_forward.9} parent=5 // pred_fallthru
      _
    %p719 = scmp.le.s32.totalorder 2, %s17
    // Predicated region
    $region69: #{improved_fft_kernel_forward.9} parent=5 // pred_check
      %p720 = pneg %p719
    $region70: #{improved_fft_kernel_forward.9} parent=5 // pred_check_branch
      %722 = sbr.rel (%p720) target = $region72
    $region71: #{improved_fft_kernel_forward.9} parent=5 // pred_region
      %s723 = ssub.s32 %s17, 2
      // Predicated region
      $region73: #{improved_fft_kernel_forward.9} parent=71 // pred_check
        %p724 = pneg %p326
      $region74: #{improved_fft_kernel_forward.9} parent=71 // pred_check_branch
        %726 = sbr.rel (%p724) target = $region76
      $region75: #{improved_fft_kernel_forward.9} parent=71 // pred_region
        %s727 = smul.u32 2, %s29
        %p728 = scmp.lt.s32.totalorder %s28, 1
        %s729 = scalar_select %p728, %s28, 1
        %p730 = scmp.lt.s32.totalorder %s727, 1
        %s731 = scalar_select %p730, %s727, 1
        %s732 = smul.addr %s729, 2
        %s733 = sadd.s32 %s731, %s732
        %s734 = smul.addr %s733, 8
        %s735 = scalar_lea.vmem %s11, %s734
      $region76: #{improved_fft_kernel_forward.9} parent=71 // pred_fallthru
        _
    $region72: #{improved_fft_kernel_forward.9} parent=5 // pred_fallthru
      _
  $region6: #{improved_fft_kernel_forward.9} parent=0 // loop_footer
    %s21 = sadd.s32 1, %s17
  $region7: #{improved_fft_kernel_forward.9} parent=0 // loop_footer_branch
    %16 = sbr.rel target = $region3
  $region8: #{improved_fft_kernel_forward.9} parent=0 // loop_exit
    _

</llo_original>
